<compile_context>
chip_gen: v7x
topology: tpu7x:2x2x1
jax: 0.10.0
libtpu: 0.0.40
codegen_flags: <defaults>
</compile_context>

<pallas_src>
import functools

import jax
import jax.numpy as jnp
from jax.experimental import pallas as pl
from jax.experimental.pallas import tpu as pltpu


NEG_SLOPE = 0.01  # F.leaky_relu default negative slope


def _round_up(x, m):
    return (x + m - 1) // m * m


def _vmem_cap_bytes():
    """Physical VMEM of the current chip (conservative fallback = v7x 64 MiB)."""
    try:
        return int(pltpu.get_tpu_info().vmem_capacity_bytes)
    except Exception:
        return 64 * 1024 * 1024


def _choose_c_tile(q_tile, H, C_pad, budget_bytes):
    """Largest multiple-of-8 C-tile dividing C_pad whose (Ct, TQ, H) f32 slab
    fits the given budget."""
    per_row = max(1, q_tile * H * 4)
    ct = min(C_pad, max(8, (budget_bytes // per_row) // 8 * 8))
    while ct > 8 and C_pad % ct:
        ct -= 8
    return ct


def _attention_kernel(q_ref, c_ref, wqT_ref, wcT_ref, b_ref, v_ref, maskadd_ref,
                      out_ref, attn_ref, score_t_ref, *, c_tile):
    """One (batch, q-tile) pair per grid step."""
    q = q_ref[0]                 # (TQ, H)
    wqT = wqT_ref[...]           # (H, H): q @ wqT == q @ Wq^T
    wcT = wcT_ref[...]           # (H, H)
    bias = b_ref[...]            # (1, H)
    v_b = v_ref[...][None]       # (1, 1, H) -- hoisted out of the tile loop
    mask_add = maskadd_ref[0]    # (1, C_pad) additive mask: 0 keep / -inf masked

    C_pad = c_ref.shape[1]
    n_tiles = C_pad // c_tile

    # Query projection once per grid step (MXU).
    a_proj = jnp.dot(q, wqT, preferred_element_type=jnp.float32)   # (TQ, H)
    a_b = a_proj[None, :, :]                                       # (1, TQ, H)

    def tile_body(t, carry):
        start = pl.multiple_of(t * c_tile, c_tile)
        c_rows = c_ref[0, pl.ds(start, c_tile), :]                  # (Ct, H)
        # Context projection for this tile only (bias folded once here).
        cproj = jnp.dot(c_rows, wcT,
                        preferred_element_type=jnp.float32) + bias  # (Ct, H)
        # Pairwise hidden, bounded to one (Ct, TQ, H) slab at a time.
        hidden = cproj[:, None, :] + a_b                            # (Ct, TQ, H)
        hidden = jnp.maximum(hidden, NEG_SLOPE * hidden)            # leaky_relu
        # Per-tile scores in (Ct, TQ) layout so the store slices the sublane dim.
        s_t = jnp.sum(hidden * v_b, axis=-1)                        # (Ct, TQ)
        score_t_ref[pl.ds(start, c_tile), :] = s_t
        return carry

    jax.lax.fori_loop(0, n_tiles, tile_body, 0, unroll=(n_tiles <= 4))

    # (C_pad, TQ) -> (TQ, C_pad); additive mask; softmax over the context dim.
    score = jnp.transpose(score_t_ref[...]) + mask_add              # (TQ, C_pad)
    m = jnp.max(score, axis=-1, keepdims=True)
    e = jnp.exp(score - m)
    s = jnp.sum(e, axis=-1, keepdims=True)
    attn = e * pl.reciprocal(s, approx=False)                       # (TQ, C_pad)

    attn_ref[0] = attn.astype(attn_ref.dtype)
    out_ref[0] = jnp.dot(attn, c_ref[0],
                         preferred_element_type=jnp.float32).astype(out_ref.dtype)


def attention_pallas(query, context, w_weight, w_bias, score_weight, mask=None,
                     c_tile=None, q_tile=None):
    """query (B,Q,H), context (B,C,H), w_weight (H,2H) [PyTorch (out,in) layout],
    w_bias (H,), score_weight (1,H), mask (B,C) or None.
    Returns (attn_output (B,Q,H), attn (B,Q,C))."""
    f32 = jnp.float32
    B, Q, H = query.shape
    C = context.shape[1]

    # --- padding (exact: padded context columns are -inf-masked -> softmax 0,
    # padded context rows are zeros; padded query rows are sliced off). ---
    C_pad = _round_up(C, 128)
    if q_tile is None:
        q_tile = Q if Q <= 256 else 256
    Q_pad = _round_up(Q, q_tile)

    query_p = query.astype(f32)
    if Q_pad != Q:
        query_p = jnp.pad(query_p, ((0, 0), (0, Q_pad - Q), (0, 0)))
    context_p = context.astype(f32)
    if C_pad != C:
        context_p = jnp.pad(context_p, ((0, 0), (0, C_pad - C), (0, 0)))

    # Pre-transpose the split projection weights once:
    # concat(q, c) @ W^T == q @ Wq^T + c @ Wc^T.
    wqT = jnp.asarray(w_weight[:, :H].T, dtype=f32)   # (H, H)
    wcT = jnp.asarray(w_weight[:, H:].T, dtype=f32)   # (H, H)
    b2d = w_bias.reshape(1, H).astype(f32)
    v2d = score_weight.reshape(1, H).astype(f32)

    # Precomputed additive mask (exact masked_fill semantics, incl. -inf rows);
    # padded columns are always masked.
    if mask is None:
        base = jnp.zeros((B, C), dtype=f32)
    else:
        base = jnp.where(mask.reshape(B, C) == 0, -jnp.inf, 0.0).astype(f32)
    if C_pad != C:
        base = jnp.pad(base, ((0, 0), (0, C_pad - C)), constant_values=-jnp.inf)
    mask_add = base.reshape(B, 1, C_pad)

    # --- tiling / VMEM budgeting (shape + chip derived). ---
    vmem_cap = _vmem_cap_bytes()
    if c_tile is None:
        c_tile = _choose_c_tile(q_tile, H, C_pad,
                                budget_bytes=min(8 << 20, vmem_cap // 8))
    assert c_tile % 8 == 0 and C_pad % c_tile == 0, "c_tile must be a multiple of 8 dividing padded C"

    blk_elems = (q_tile * H          # query block
                 + C_pad * H         # context block
                 + C_pad             # mask block
                 + 2 * H * H         # Wq^T, Wc^T
                 + 2 * H             # bias, v
                 + q_tile * H        # out block
                 + q_tile * C_pad)   # attn block
    need = (2 * blk_elems * 4                 # double-buffered blocks
            + C_pad * q_tile * 4              # score scratch
            + 2 * c_tile * q_tile * H * 4     # live (Ct,TQ,H) slab temporaries
            + (4 << 20))                      # slack
    vmem_limit = int(min(max(need, 32 << 20), int(vmem_cap * 0.9)))

    n_q = Q_pad // q_tile

    out_shapes = (
        jax.ShapeDtypeStruct((B, Q_pad, H), f32),       # attn_output (padded)
        jax.ShapeDtypeStruct((B, Q_pad, C_pad), f32),   # attn        (padded)
    )

    grid_spec = pltpu.PrefetchScalarGridSpec(
        num_scalar_prefetch=0,
        grid=(B, n_q),
        in_specs=[
            pl.BlockSpec((1, q_tile, H), lambda b, qt: (b, qt, 0)),   # query
            pl.BlockSpec((1, C_pad, H), lambda b, qt: (b, 0, 0)),     # context
            pl.BlockSpec((H, H), lambda b, qt: (0, 0)),               # Wq^T
            pl.BlockSpec((H, H), lambda b, qt: (0, 0)),               # Wc^T
            pl.BlockSpec((1, H), lambda b, qt: (0, 0)),               # bias
            pl.BlockSpec((1, H), lambda b, qt: (0, 0)),               # score weight v
            pl.BlockSpec((1, 1, C_pad), lambda b, qt: (b, 0, 0)),     # additive mask
        ],
        out_specs=[
            pl.BlockSpec((1, q_tile, H), lambda b, qt: (b, qt, 0)),       # attn_output
            pl.BlockSpec((1, q_tile, C_pad), lambda b, qt: (b, qt, 0)),   # attn
        ],
        scratch_shapes=[
            pltpu.VMEM((C_pad, q_tile), f32),   # transposed score
        ],
    )

    kernel = functools.partial(_attention_kernel, c_tile=c_tile)

    out_p, attn_p = pl.pallas_call(
        kernel,
        out_shape=out_shapes,
        grid_spec=grid_spec,
        compiler_params=pltpu.CompilerParams(
            dimension_semantics=("parallel", "parallel"),
            vmem_limit_bytes=vmem_limit),
    )(query_p, context_p, wqT, wcT, b2d, v2d, mask_add)

    return out_p[:, :Q, :], attn_p[:, :Q, :C]


def attention_reference(query, context, w_weight, w_bias, score_weight, mask=None):
    """Pure-JAX reference mirroring the PyTorch forward exactly."""
    B, Q, H = query.shape
    C = context.shape[1]
    qc_q = jnp.broadcast_to(query[:, :, None, :], (B, Q, C, H))
    qc_c = jnp.broadcast_to(context[:, None, :, :], (B, Q, C, H))
    cat = jnp.concatenate([qc_q, qc_c], axis=-1)                   # (B,Q,C,2H)
    h = cat @ w_weight.T + w_bias
    h = jnp.where(h >= 0, h, NEG_SLOPE * h)
    score = (h @ score_weight.T).reshape(B, Q, C)
    if mask is not None:
        m = jnp.broadcast_to(mask[:, None, :], (B, Q, C))
        score = jnp.where(m == 0, -jnp.inf, score)
    attn = jax.nn.softmax(score, axis=-1)
    out = jnp.einsum("bqc,bch->bqh", attn, context)
    return out, attn


if __name__ == "__main__":
    key = jax.random.PRNGKey(0)
    k_q, k_c, k_w, k_b, k_v = jax.random.split(key, 5)

    # Small shapes; C=32 padded to 128, c_tile=64 exercises the 2-iteration loop.
    B, Q, C, H = 2, 8, 32, 32

    query = jax.random.normal(k_q, (B, Q, H), dtype=jnp.float32)
    context = jax.random.normal(k_c, (B, C, H), dtype=jnp.float32)

    # Parameter shapes match nn.Linear(2H, H) and nn.Linear(H, 1, bias=False).
    w_weight = jax.random.uniform(k_w, (H, 2 * H), minval=-0.1, maxval=0.1,
                                  dtype=jnp.float32)
    w_bias = jax.random.uniform(k_b, (H,), minval=-0.1, maxval=0.1,
                                dtype=jnp.float32)
    score_weight = jax.random.uniform(k_v, (1, H), minval=-0.1, maxval=0.1,
                                      dtype=jnp.float32)

    # Mask: keep most positions, zero out the last two context slots of batch 1.
    mask = jnp.ones((B, C), dtype=jnp.float32).at[1, -2:].set(0.0)

    out, attn = attention_pallas(query, context, w_weight, w_bias,
                                 score_weight, mask, c_tile=64)
    out = jax.block_until_ready(out)
    attn = jax.block_until_ready(attn)

    ref_out, ref_attn = attention_reference(query, context, w_weight, w_bias,
                                            score_weight, mask)
    assert out.shape == (B, Q, H) and attn.shape == (B, Q, C)
    assert jnp.allclose(out, ref_out, atol=1e-4, rtol=1e-4), "attn_output mismatch"
    assert jnp.allclose(attn, ref_attn, atol=1e-4, rtol=1e-4), "attn mismatch"

    print("KERNEL_OK")
</pallas_src>

<mosaic_0001>
module attributes {stable_mosaic.version = 11 : i64} {
  func.func @_attention_kernel(%arg0: i32, %arg1: i32, %arg2: memref<1x8x32xf32, #tpu.memory_space<vmem>>, %arg3: memref<1x128x32xf32, #tpu.memory_space<vmem>>, %arg4: memref<32x32xf32, #tpu.memory_space<vmem>>, %arg5: memref<32x32xf32, #tpu.memory_space<vmem>>, %arg6: memref<1x32xf32, #tpu.memory_space<vmem>>, %arg7: memref<1x32xf32, #tpu.memory_space<vmem>>, %arg8: memref<1x1x128xf32, #tpu.memory_space<vmem>>, %arg9: memref<1x8x32xf32, #tpu.memory_space<vmem>>, %arg10: memref<1x8x128xf32, #tpu.memory_space<vmem>>, %arg11: memref<128x8xf32, #tpu.memory_space<vmem>>) attributes {dimension_semantics = [#tpu.dimension_semantics<parallel>, #tpu.dimension_semantics<parallel>], iteration_bounds = array<i64: 2, 1>, scalar_prefetch = 0 : i64, scratch_operands = 1 : i64, tpu.core_type = #tpu.core_type<tc>, window_params = [{transform_indices = @transform_0, window_bounds = array<i64: 1, 8, 32>}, {transform_indices = @transform_1, window_bounds = array<i64: 1, 128, 32>}, {pipeline_mode = #tpu.pipeline_mode<synchronous>, transform_indices = @transform_2, window_bounds = array<i64: 32, 32>}, {pipeline_mode = #tpu.pipeline_mode<synchronous>, transform_indices = @transform_3, window_bounds = array<i64: 32, 32>}, {pipeline_mode = #tpu.pipeline_mode<synchronous>, transform_indices = @transform_4, window_bounds = array<i64: 1, 32>}, {pipeline_mode = #tpu.pipeline_mode<synchronous>, transform_indices = @transform_5, window_bounds = array<i64: 1, 32>}, {transform_indices = @transform_6, window_bounds = array<i64: 1, 1, 128>}, {transform_indices = @transform_7, window_bounds = array<i64: 1, 8, 32>}, {transform_indices = @transform_8, window_bounds = array<i64: 1, 8, 128>}]} {
    %c0 = arith.constant 0 : index
    %c0_0 = arith.constant 0 : index
    %c0_1 = arith.constant 0 : index
    %0 = vector.load %arg2[%c0, %c0_0, %c0_1] : memref<1x8x32xf32, #tpu.memory_space<vmem>>, vector<1x8x32xf32>
    %1 = vector.shape_cast %0 : vector<1x8x32xf32> to vector<8x32xf32>
    %c0_2 = arith.constant 0 : index
    %c0_3 = arith.constant 0 : index
    %2 = vector.load %arg4[%c0_2, %c0_3] : memref<32x32xf32, #tpu.memory_space<vmem>>, vector<32x32xf32>
    %c0_4 = arith.constant 0 : index
    %c0_5 = arith.constant 0 : index
    %3 = vector.load %arg5[%c0_4, %c0_5] : memref<32x32xf32, #tpu.memory_space<vmem>>, vector<32x32xf32>
    %c0_6 = arith.constant 0 : index
    %c0_7 = arith.constant 0 : index
    %4 = vector.load %arg6[%c0_6, %c0_7] : memref<1x32xf32, #tpu.memory_space<vmem>>, vector<1x32xf32>
    %c0_8 = arith.constant 0 : index
    %c0_9 = arith.constant 0 : index
    %5 = vector.load %arg7[%c0_8, %c0_9] : memref<1x32xf32, #tpu.memory_space<vmem>>, vector<1x32xf32>
    %6 = vector.shape_cast %5 : vector<1x32xf32> to vector<1x1x32xf32>
    %c0_10 = arith.constant 0 : index
    %c0_11 = arith.constant 0 : index
    %c0_12 = arith.constant 0 : index
    %7 = vector.load %arg8[%c0_10, %c0_11, %c0_12] : memref<1x1x128xf32, #tpu.memory_space<vmem>>, vector<1x1x128xf32>
    %8 = vector.shape_cast %7 : vector<1x1x128xf32> to vector<1x128xf32>
    %cst = arith.constant dense<0.000000e+00> : vector<8x32xf32>
    %9 = tpu.matmul %1, %2, %cst {dimension_numbers = #tpu.dot_dimension_numbers<[1], [0], [0], [1], [0, 0, 1, 1], [], []>} : vector<8x32xf32>, vector<32x32xf32>, vector<8x32xf32> -> vector<8x32xf32>
    %10 = vector.shape_cast %9 : vector<8x32xf32> to vector<1x8x32xf32>
    %c0_i32 = arith.constant 0 : i32
    %c64_i32 = arith.constant 64 : i32
    %11 = arith.muli %c0_i32, %c64_i32 : i32
    %12 = tpu.assume_multiple %11, 64 : i32
    %c0_13 = arith.constant 0 : index
    %13 = arith.index_cast %12 : i32 to index
    %c0_14 = arith.constant 0 : index
    %14 = vector.load %arg3[%c0_13, %13, %c0_14] : memref<1x128x32xf32, #tpu.memory_space<vmem>>, vector<1x64x32xf32>
    %15 = vector.shape_cast %14 : vector<1x64x32xf32> to vector<64x32xf32>
    %cst_15 = arith.constant dense<0.000000e+00> : vector<64x32xf32>
    %16 = tpu.matmul %15, %3, %cst_15 {dimension_numbers = #tpu.dot_dimension_numbers<[1], [0], [0], [1], [0, 0, 1, 1], [], []>} : vector<64x32xf32>, vector<32x32xf32>, vector<64x32xf32> -> vector<64x32xf32>
    %17 = vector.broadcast %4 : vector<1x32xf32> to vector<64x32xf32>
    %18 = arith.addf %16, %17 : vector<64x32xf32>
    %19 = vector.shape_cast %18 : vector<64x32xf32> to vector<64x1x32xf32>
    %20 = vector.broadcast %19 : vector<64x1x32xf32> to vector<64x8x32xf32>
    %21 = vector.broadcast %10 : vector<1x8x32xf32> to vector<64x8x32xf32>
    %22 = arith.addf %20, %21 : vector<64x8x32xf32>
    %cst_16 = arith.constant 0.00999999977 : f32
    %23 = vector.broadcast %cst_16 : f32 to vector<64x8x32xf32>
    %24 = arith.mulf %23, %22 : vector<64x8x32xf32>
    %25 = arith.maximumf %22, %24 : vector<64x8x32xf32>
    %26 = vector.broadcast %6 : vector<1x1x32xf32> to vector<64x8x32xf32>
    %27 = arith.mulf %25, %26 : vector<64x8x32xf32>
    %cst_17 = arith.constant dense<0.000000e+00> : vector<64x8xf32>
    %28 = vector.multi_reduction <add>, %27, %cst_17 [2] : vector<64x8x32xf32> to vector<64x8xf32>
    %29 = arith.index_cast %12 : i32 to index
    %c0_18 = arith.constant 0 : index
    %30 = vector.load %arg11[%29, %c0_18] : memref<128x8xf32, #tpu.memory_space<vmem>>, vector<64x8xf32>
    tpu.vector_store %arg11[%29, %c0_18], %28 {strides = array<i32>} : memref<128x8xf32, #tpu.memory_space<vmem>>, vector<64x8xf32>,
    %c1_i32 = arith.constant 1 : i32
    %c64_i32_19 = arith.constant 64 : i32
    %31 = arith.muli %c1_i32, %c64_i32_19 : i32
    %32 = tpu.assume_multiple %31, 64 : i32
    %c0_20 = arith.constant 0 : index
    %33 = arith.index_cast %32 : i32 to index
    %c0_21 = arith.constant 0 : index
    %34 = vector.load %arg3[%c0_20, %33, %c0_21] : memref<1x128x32xf32, #tpu.memory_space<vmem>>, vector<1x64x32xf32>
    %35 = vector.shape_cast %34 : vector<1x64x32xf32> to vector<64x32xf32>
    %cst_22 = arith.constant dense<0.000000e+00> : vector<64x32xf32>
    %36 = tpu.matmul %35, %3, %cst_22 {dimension_numbers = #tpu.dot_dimension_numbers<[1], [0], [0], [1], [0, 0, 1, 1], [], []>} : vector<64x32xf32>, vector<32x32xf32>, vector<64x32xf32> -> vector<64x32xf32>
    %37 = vector.broadcast %4 : vector<1x32xf32> to vector<64x32xf32>
    %38 = arith.addf %36, %37 : vector<64x32xf32>
    %39 = vector.shape_cast %38 : vector<64x32xf32> to vector<64x1x32xf32>
    %40 = vector.broadcast %39 : vector<64x1x32xf32> to vector<64x8x32xf32>
    %41 = vector.broadcast %10 : vector<1x8x32xf32> to vector<64x8x32xf32>
    %42 = arith.addf %40, %41 : vector<64x8x32xf32>
    %cst_23 = arith.constant 0.00999999977 : f32
    %43 = vector.broadcast %cst_23 : f32 to vector<64x8x32xf32>
    %44 = arith.mulf %43, %42 : vector<64x8x32xf32>
    %45 = arith.maximumf %42, %44 : vector<64x8x32xf32>
    %46 = vector.broadcast %6 : vector<1x1x32xf32> to vector<64x8x32xf32>
    %47 = arith.mulf %45, %46 : vector<64x8x32xf32>
    %cst_24 = arith.constant dense<0.000000e+00> : vector<64x8xf32>
    %48 = vector.multi_reduction <add>, %47, %cst_24 [2] : vector<64x8x32xf32> to vector<64x8xf32>
    %49 = arith.index_cast %32 : i32 to index
    %c0_25 = arith.constant 0 : index
    %50 = vector.load %arg11[%49, %c0_25] : memref<128x8xf32, #tpu.memory_space<vmem>>, vector<64x8xf32>
    tpu.vector_store %arg11[%49, %c0_25], %48 {strides = array<i32>} : memref<128x8xf32, #tpu.memory_space<vmem>>, vector<64x8xf32>,
    %c2_i32 = arith.constant 2 : i32
    %c0_26 = arith.constant 0 : index
    %c0_27 = arith.constant 0 : index
    %51 = vector.load %arg11[%c0_26, %c0_27] : memref<128x8xf32, #tpu.memory_space<vmem>>, vector<128x8xf32>
    %52 = tpu.transpose %51, [1, 0] : vector<128x8xf32> -> vector<8x128xf32>
    %53 = vector.broadcast %8 : vector<1x128xf32> to vector<8x128xf32>
    %54 = arith.addf %52, %53 : vector<8x128xf32>
    %cst_28 = arith.constant dense<0xFF800000> : vector<8xf32>
    %55 = vector.multi_reduction <maximumf>, %54, %cst_28 [1] : vector<8x128xf32> to vector<8xf32>
    %56 = vector.shape_cast %55 : vector<8xf32> to vector<8x1xf32>
    %57 = vector.broadcast %56 : vector<8x1xf32> to vector<8x128xf32>
    %58 = arith.subf %54, %57 : vector<8x128xf32>
    %59 = math.exp %58 : vector<8x128xf32>
    %cst_29 = arith.constant dense<0.000000e+00> : vector<8xf32>
    %60 = vector.multi_reduction <add>, %59, %cst_29 [1] : vector<8x128xf32> to vector<8xf32>
    %61 = vector.shape_cast %60 : vector<8xf32> to vector<8x1xf32>
    %62 = tpu.reciprocal %61 : vector<8x1xf32> -> vector<8x1xf32>
    %63 = vector.broadcast %62 : vector<8x1xf32> to vector<8x128xf32>
    %64 = arith.mulf %59, %63 : vector<8x128xf32>
    %c0_30 = arith.constant 0 : index
    %c0_31 = arith.constant 0 : index
    %c0_32 = arith.constant 0 : index
    %65 = vector.load %arg10[%c0_30, %c0_31, %c0_32] : memref<1x8x128xf32, #tpu.memory_space<vmem>>, vector<1x8x128xf32>
    %66 = vector.shape_cast %65 : vector<1x8x128xf32> to vector<8x128xf32>
    %67 = vector.shape_cast %64 : vector<8x128xf32> to vector<1x8x128xf32>
    tpu.vector_store %arg10[%c0_30, %c0_31, %c0_32], %67 {strides = array<i32>} : memref<1x8x128xf32, #tpu.memory_space<vmem>>, vector<1x8x128xf32>,
    %c0_33 = arith.constant 0 : index
    %c0_34 = arith.constant 0 : index
    %c0_35 = arith.constant 0 : index
    %68 = vector.load %arg3[%c0_33, %c0_34, %c0_35] : memref<1x128x32xf32, #tpu.memory_space<vmem>>, vector<1x128x32xf32>
    %69 = vector.shape_cast %68 : vector<1x128x32xf32> to vector<128x32xf32>
    %cst_36 = arith.constant dense<0.000000e+00> : vector<8x32xf32>
    %70 = tpu.matmul %64, %69, %cst_36 {dimension_numbers = #tpu.dot_dimension_numbers<[1], [0], [0], [1], [0, 0, 1, 1], [], []>} : vector<8x128xf32>, vector<128x32xf32>, vector<8x32xf32> -> vector<8x32xf32>
    %c0_37 = arith.constant 0 : index
    %c0_38 = arith.constant 0 : index
    %c0_39 = arith.constant 0 : index
    %71 = vector.load %arg9[%c0_37, %c0_38, %c0_39] : memref<1x8x32xf32, #tpu.memory_space<vmem>>, vector<1x8x32xf32>
    %72 = vector.shape_cast %71 : vector<1x8x32xf32> to vector<8x32xf32>
    %73 = vector.shape_cast %70 : vector<8x32xf32> to vector<1x8x32xf32>
    tpu.vector_store %arg9[%c0_37, %c0_38, %c0_39], %73 {strides = array<i32>} : memref<1x8x32xf32, #tpu.memory_space<vmem>>, vector<1x8x32xf32>,
    return
  }
  func.func @transform_0(%arg0: i32, %arg1: i32) -> (i32, i32, i32) {
    %c0_i32 = arith.constant 0 : i32
    %c0_i32_0 = arith.constant 0 : i32
    return %arg0, %arg1, %c0_i32 : i32, i32, i32
  }
  func.func @transform_1(%arg0: i32, %arg1: i32) -> (i32, i32, i32) {
    %c0_i32 = arith.constant 0 : i32
    %c0_i32_0 = arith.constant 0 : i32
    %c0_i32_1 = arith.constant 0 : i32
    return %arg0, %c0_i32, %c0_i32_0 : i32, i32, i32
  }
  func.func @transform_2(%arg0: i32, %arg1: i32) -> (i32, i32) {
    %c0_i32 = arith.constant 0 : i32
    %c0_i32_0 = arith.constant 0 : i32
    %c0_i32_1 = arith.constant 0 : i32
    return %c0_i32, %c0_i32_0 : i32, i32
  }
  func.func @transform_3(%arg0: i32, %arg1: i32) -> (i32, i32) {
    %c0_i32 = arith.constant 0 : i32
    %c0_i32_0 = arith.constant 0 : i32
    %c0_i32_1 = arith.constant 0 : i32
    return %c0_i32, %c0_i32_0 : i32, i32
  }
  func.func @transform_4(%arg0: i32, %arg1: i32) -> (i32, i32) {
    %c0_i32 = arith.constant 0 : i32
    %c0_i32_0 = arith.constant 0 : i32
    %c0_i32_1 = arith.constant 0 : i32
    return %c0_i32, %c0_i32_0 : i32, i32
  }
  func.func @transform_5(%arg0: i32, %arg1: i32) -> (i32, i32) {
    %c0_i32 = arith.constant 0 : i32
    %c0_i32_0 = arith.constant 0 : i32
    %c0_i32_1 = arith.constant 0 : i32
    return %c0_i32, %c0_i32_0 : i32, i32
  }
  func.func @transform_6(%arg0: i32, %arg1: i32) -> (i32, i32, i32) {
    %c0_i32 = arith.constant 0 : i32
    %c0_i32_0 = arith.constant 0 : i32
    %c0_i32_1 = arith.constant 0 : i32
    return %arg0, %c0_i32, %c0_i32_0 : i32, i32, i32
  }
  func.func @transform_7(%arg0: i32, %arg1: i32) -> (i32, i32, i32) {
    %c0_i32 = arith.constant 0 : i32
    %c0_i32_0 = arith.constant 0 : i32
    return %arg0, %arg1, %c0_i32 : i32, i32, i32
  }
  func.func @transform_8(%arg0: i32, %arg1: i32) -> (i32, i32, i32) {
    %c0_i32 = arith.constant 0 : i32
    %c0_i32_0 = arith.constant 0 : i32
    return %arg0, %arg1, %c0_i32 : i32, i32, i32
  }
}

</mosaic_0001>

<llo_original>
// kernel: tpu_custom_call.1
$region0: #{tpu_custom_call.1}
  #allocation0 [shape = 'u32[]', space=smem, size = 0x4, offset = 0x4, fixed_abs, tag = 'smem constant byte address 0x4 - core index']
  #allocation1 [shape = 'u32[144,128]{1,0:T(1,128)}', space=vmem, size = 0x12000, scoped, tag = 'internal scratch']
  #allocation2 [shape = 'f32[128,8]{1,0:T(8,128)}', space=vmem, size = 0x10000, scoped, tag = 'scratch operand']
  %s0 = inlined_call_operand.vmem [shape: f32[2,8,32], index: 0, kind: input, shape index: {}]
  %s1 = inlined_call_operand.vmem [shape: f32[2,128,32], index: 1, kind: input, shape index: {}]
  %s2 = inlined_call_operand.vmem [shape: f32[32,32], index: 2, kind: input, shape index: {}]
  %s3 = inlined_call_operand.vmem [shape: f32[32,32], index: 3, kind: input, shape index: {}]
  %s4 = inlined_call_operand.vmem [shape: f32[1,32], index: 4, kind: input, shape index: {}]
  %s5 = inlined_call_operand.vmem [shape: f32[1,32], index: 5, kind: input, shape index: {}]
  %s6 = inlined_call_operand.vmem [shape: f32[2,1,128], index: 6, kind: input, shape index: {}]
  %s7 = inlined_call_operand.hbm [shape: f32[2,8,32], index: 7, kind: output, shape index: {0}]
  %s8 = inlined_call_operand.hbm [shape: f32[2,8,128], index: 8, kind: output, shape index: {1}]
  %9 = xla_tuple %s7, %s8
  %s10 = sld [smem:[#allocation0]]
  $region69: #{tpu_custom_call.1} parent=0
    _
  %s12 = ssub.s32 1, %s10
  %s13 = scalar_select 0, %s12, %s10
  $region1: #{tpu_custom_call.1} parent=0
    #allocation3 [shape = 'u8[8192]{0}', space=vmem, size = 0x2000, scoped, tag = 'output window, operand 0']
    #allocation4 [shape = 's32[2]{0}', space=sflag, size = 0x8, scoped, tag = 'scoped memory for tpu_custom_call.1']
    #allocation5 [shape = 'u8[8192]{0}', space=vmem, size = 0x2000, scoped, tag = 'output window, operand 1']
    #allocation6 [shape = 's32[2]{0}', space=sflag, size = 0x8, scoped, tag = 'scoped memory for tpu_custom_call.1']
    %14 = vsyncpa [#allocation4], 0
    %s15 = scalar_lea.sflag [#allocation4], 1
    %16 = vsyncpa %s15, 0
    %17 = vsyncpa [#allocation6], 0
    %s18 = scalar_lea.sflag [#allocation6], 1
    %19 = vsyncpa %s18, 0
    loop: start=0, step=1, limit=4
    $region2: #{tpu_custom_call.1} parent=1 // loop_pre_header
      _
    $region3: #{tpu_custom_call.1} parent=1 // loop_header
      %s21 = sphi 0, %s25
      %p22 = scmp.ge.s32.totalorder %s21, 4
      %s28 = sphi 0, %s40
      %s29 = sphi 0, %s36
      %s30 = sphi 0, %s28
      %s31 = sphi 0, %s29
      %s32 = sphi 0, %s30
      %s33 = sphi 0, %s31
      %s45 = sphi 0, %s47
      %s48 = sphi 0, %s45
      %s49 = sphi 0, %s48
      %s65 = sphi 0, %s49
      %s71 = sphi 0, %s73
      %s74 = sphi 0, %s71
      %s75 = sphi 0, %s74
      %s91 = sphi 0, %s75
      %s95 = sphi 0, %s95
      %s97 = sphi 0, %s95
      %s98 = sphi 0, %s97
      %s112 = sphi 0, %s98
      %s116 = sphi 0, %s116
      %s118 = sphi 0, %s116
      %s119 = sphi 0, %s118
      %s133 = sphi 0, %s119
      %s137 = sphi 0, %s137
      %s139 = sphi 0, %s137
      %s140 = sphi 0, %s139
      %s154 = sphi 0, %s140
      %s158 = sphi 0, %s158
      %s160 = sphi 0, %s158
      %s161 = sphi 0, %s160
      %s175 = sphi 0, %s161
      %s181 = sphi 0, %s183
      %s184 = sphi 0, %s181
      %s185 = sphi 0, %s184
      %s201 = sphi 0, %s185
      %s209 = sphi 0, %s211
      %s212 = sphi 0, %s209
      %s213 = sphi 0, %s212
      %s229 = sphi 0, %s213
      %s237 = sphi 0, %s239
      %s240 = sphi 0, %s237
      %s241 = sphi 0, %s240
      %s257 = sphi 0, %s241
    $region4: #{tpu_custom_call.1} parent=1 // loop_header_branch
      %24 = sbr.rel (%p22) target = $region8
    $region5: #{tpu_custom_call.1} parent=1 // loop_body
      %s26 = ssub.s32 %s21, 1
      %s27 = ssub.s32 %s21, 2
      %s34 = sadd.s32 1, %s29
      %p35 = scmp.ge.s32.totalorder %s34, 1
      %s36 = scalar_select %p35, 0, %s34
      %s37 = sadd.s32 1, %s28
      %s38 = scalar_select %p35, %s37, %s28
      %p39 = scmp.ge.s32.totalorder %s38, 2
      %s40 = scalar_select %p39, 0, %s38
      %s41 = ssub.s32 %s28, %s40
      %s42 = ssub.s32 %s29, %s36
      %s43 = sor.u32 %s41, %s42
      %p44 = scmp.eq.s32.totalorder %s43, 0
      %s46 = sadd.s32 %s45, 1
      %s47 = scalar_select %p44, %s45, %s46
      %p50 = pneg %p44
      %p51 = scmp.eq.s32.totalorder %s21, 1
      %p52 = por %p50, %p51
      %p53 = scmp.ne.s32.totalorder %s45, %s48
      %p54 = scmp.eq.s32.totalorder %s21, 0
      %p55 = por %p53, %p54
      %p56 = scmp.ne.s32.totalorder %s45, %s48
      %p57 = scmp.eq.s32.totalorder %s26, 1
      %p58 = por %p56, %p57
      %p59 = scmp.ne.s32.totalorder %s48, %s49
      %p60 = scmp.eq.s32.totalorder %s26, 0
      %p61 = por %p59, %p60
      %p62 = scmp.ne.s32.totalorder %s48, %s49
      %p63 = scmp.eq.s32.totalorder %s27, 1
      %p64 = por %p62, %p63
      %p66 = scmp.ne.s32.totalorder %s49, %s65
      %p67 = scmp.eq.s32.totalorder %s27, 0
      %p68 = por %p66, %p67
      %s69 = ssub.s32 %s28, %s40
      %p70 = scmp.eq.s32.totalorder %s69, 0
      %s72 = sadd.s32 %s71, 1
      %s73 = scalar_select %p70, %s71, %s72
      %p76 = pneg %p70
      %p77 = scmp.eq.s32.totalorder %s21, 1
      %p78 = por %p76, %p77
      %p79 = scmp.ne.s32.totalorder %s71, %s74
      %p80 = scmp.eq.s32.totalorder %s21, 0
      %p81 = por %p79, %p80
      %p82 = scmp.ne.s32.totalorder %s71, %s74
      %p83 = scmp.eq.s32.totalorder %s26, 1
      %p84 = por %p82, %p83
      %p85 = scmp.ne.s32.totalorder %s74, %s75
      %p86 = scmp.eq.s32.totalorder %s26, 0
      %p87 = por %p85, %p86
      %p88 = scmp.ne.s32.totalorder %s74, %s75
      %p89 = scmp.eq.s32.totalorder %s27, 1
      %p90 = por %p88, %p89
      %p92 = scmp.ne.s32.totalorder %s75, %s91
      %p93 = scmp.eq.s32.totalorder %s27, 0
      %p94 = por %p92, %p93
      %s96 = sadd.s32 %s95, 1
      %p99 = scmp.eq.s32.totalorder %s21, 1
      %p100 = scmp.ne.s32.totalorder %s95, %s97
      %p101 = scmp.eq.s32.totalorder %s21, 0
      %p102 = por %p100, %p101
      %p103 = scmp.ne.s32.totalorder %s95, %s97
      %p104 = scmp.eq.s32.totalorder %s26, 1
      %p105 = por %p103, %p104
      %p106 = scmp.ne.s32.totalorder %s97, %s98
      %p107 = scmp.eq.s32.totalorder %s26, 0
      %p108 = por %p106, %p107
      %p109 = scmp.ne.s32.totalorder %s97, %s98
      %p110 = scmp.eq.s32.totalorder %s27, 1
      %p111 = por %p109, %p110
      %p113 = scmp.ne.s32.totalorder %s98, %s112
      %p114 = scmp.eq.s32.totalorder %s27, 0
      %p115 = por %p113, %p114
      %s117 = sadd.s32 %s116, 1
      %p120 = scmp.eq.s32.totalorder %s21, 1
      %p121 = scmp.ne.s32.totalorder %s116, %s118
      %p122 = scmp.eq.s32.totalorder %s21, 0
      %p123 = por %p121, %p122
      %p124 = scmp.ne.s32.totalorder %s116, %s118
      %p125 = scmp.eq.s32.totalorder %s26, 1
      %p126 = por %p124, %p125
      %p127 = scmp.ne.s32.totalorder %s118, %s119
      %p128 = scmp.eq.s32.totalorder %s26, 0
      %p129 = por %p127, %p128
      %p130 = scmp.ne.s32.totalorder %s118, %s119
      %p131 = scmp.eq.s32.totalorder %s27, 1
      %p132 = por %p130, %p131
      %p134 = scmp.ne.s32.totalorder %s119, %s133
      %p135 = scmp.eq.s32.totalorder %s27, 0
      %p136 = por %p134, %p135
      %s138 = sadd.s32 %s137, 1
      %p141 = scmp.eq.s32.totalorder %s21, 1
      %p142 = scmp.ne.s32.totalorder %s137, %s139
      %p143 = scmp.eq.s32.totalorder %s21, 0
      %p144 = por %p142, %p143
      %p145 = scmp.ne.s32.totalorder %s137, %s139
      %p146 = scmp.eq.s32.totalorder %s26, 1
      %p147 = por %p145, %p146
      %p148 = scmp.ne.s32.totalorder %s139, %s140
      %p149 = scmp.eq.s32.totalorder %s26, 0
      %p150 = por %p148, %p149
      %p151 = scmp.ne.s32.totalorder %s139, %s140
      %p152 = scmp.eq.s32.totalorder %s27, 1
      %p153 = por %p151, %p152
      %p155 = scmp.ne.s32.totalorder %s140, %s154
      %p156 = scmp.eq.s32.totalorder %s27, 0
      %p157 = por %p155, %p156
      %s159 = sadd.s32 %s158, 1
      %p162 = scmp.eq.s32.totalorder %s21, 1
      %p163 = scmp.ne.s32.totalorder %s158, %s160
      %p164 = scmp.eq.s32.totalorder %s21, 0
      %p165 = por %p163, %p164
      %p166 = scmp.ne.s32.totalorder %s158, %s160
      %p167 = scmp.eq.s32.totalorder %s26, 1
      %p168 = por %p166, %p167
      %p169 = scmp.ne.s32.totalorder %s160, %s161
      %p170 = scmp.eq.s32.totalorder %s26, 0
      %p171 = por %p169, %p170
      %p172 = scmp.ne.s32.totalorder %s160, %s161
      %p173 = scmp.eq.s32.totalorder %s27, 1
      %p174 = por %p172, %p173
      %p176 = scmp.ne.s32.totalorder %s161, %s175
      %p177 = scmp.eq.s32.totalorder %s27, 0
      %p178 = por %p176, %p177
      %s179 = ssub.s32 %s28, %s40
      %p180 = scmp.eq.s32.totalorder %s179, 0
      %s182 = sadd.s32 %s181, 1
      %s183 = scalar_select %p180, %s181, %s182
      %p186 = pneg %p180
      %p187 = scmp.eq.s32.totalorder %s21, 1
      %p188 = por %p186, %p187
      %p189 = scmp.ne.s32.totalorder %s181, %s184
      %p190 = scmp.eq.s32.totalorder %s21, 0
      %p191 = por %p189, %p190
      %p192 = scmp.ne.s32.totalorder %s181, %s184
      %p193 = scmp.eq.s32.totalorder %s26, 1
      %p194 = por %p192, %p193
      %p195 = scmp.ne.s32.totalorder %s184, %s185
      %p196 = scmp.eq.s32.totalorder %s26, 0
      %p197 = por %p195, %p196
      %p198 = scmp.ne.s32.totalorder %s184, %s185
      %p199 = scmp.eq.s32.totalorder %s27, 1
      %p200 = por %p198, %p199
      %p202 = scmp.ne.s32.totalorder %s185, %s201
      %p203 = scmp.eq.s32.totalorder %s27, 0
      %p204 = por %p202, %p203
      %s205 = ssub.s32 %s28, %s40
      %s206 = ssub.s32 %s29, %s36
      %s207 = sor.u32 %s205, %s206
      %p208 = scmp.eq.s32.totalorder %s207, 0
      %s210 = sadd.s32 %s209, 1
      %s211 = scalar_select %p208, %s209, %s210
      %p214 = pneg %p208
      %p215 = scmp.eq.s32.totalorder %s21, 1
      %p216 = por %p214, %p215
      %p217 = scmp.ne.s32.totalorder %s209, %s212
      %p218 = scmp.eq.s32.totalorder %s21, 0
      %p219 = por %p217, %p218
      %p220 = scmp.ne.s32.totalorder %s209, %s212
      %p221 = scmp.eq.s32.totalorder %s26, 1
      %p222 = por %p220, %p221
      %p223 = scmp.ne.s32.totalorder %s212, %s213
      %p224 = scmp.eq.s32.totalorder %s26, 0
      %p225 = por %p223, %p224
      %p226 = scmp.ne.s32.totalorder %s212, %s213
      %p227 = scmp.eq.s32.totalorder %s27, 1
      %p228 = por %p226, %p227
      %p230 = scmp.ne.s32.totalorder %s213, %s229
      %p231 = scmp.eq.s32.totalorder %s27, 0
      %p232 = por %p230, %p231
      %s233 = ssub.s32 %s28, %s40
      %s234 = ssub.s32 %s29, %s36
      %s235 = sor.u32 %s233, %s234
      %p236 = scmp.eq.s32.totalorder %s235, 0
      %s238 = sadd.s32 %s237, 1
      %s239 = scalar_select %p236, %s237, %s238
      %p242 = pneg %p236
      %p243 = scmp.eq.s32.totalorder %s21, 1
      %p244 = por %p242, %p243
      %p245 = scmp.ne.s32.totalorder %s237, %s240
      %p246 = scmp.eq.s32.totalorder %s21, 0
      %p247 = por %p245, %p246
      %p248 = scmp.ne.s32.totalorder %s237, %s240
      %p249 = scmp.eq.s32.totalorder %s26, 1
      %p250 = por %p248, %p249
      %p251 = scmp.ne.s32.totalorder %s240, %s241
      %p252 = scmp.eq.s32.totalorder %s26, 0
      %p253 = por %p251, %p252
      %p254 = scmp.ne.s32.totalorder %s240, %s241
      %p255 = scmp.eq.s32.totalorder %s27, 1
      %p256 = por %p254, %p255
      %p258 = scmp.ne.s32.totalorder %s241, %s257
      %p259 = scmp.eq.s32.totalorder %s27, 0
      %p260 = por %p258, %p259
      %p261 = scmp.le.s32.totalorder 1, %s21
      %p262 = scmp.lt.s32.totalorder %s21, 3
      %p263 = pnand %p261, %p262
      %p264 = pneg %p263
      // Predicated region
      $region9: #{tpu_custom_call.1} parent=5 // pred_check
        _
      $region10: #{tpu_custom_call.1} parent=5 // pred_check_branch
        %266 = sbr.rel (%p263) target = $region12
      $region11: #{tpu_custom_call.1} parent=5 // pred_region
        %s267 = ssub.s32 %s21, 1
        // Predicated region
        $region13: #{tpu_custom_call.1} parent=11 // pred_check
          %p268 = pneg %p108
        $region14: #{tpu_custom_call.1} parent=11 // pred_check_branch
          %270 = sbr.rel (%p268) target = $region16
        $region15: #{tpu_custom_call.1} parent=11 // pred_region
          _
        $region16: #{tpu_custom_call.1} parent=11 // pred_fallthru
          _
        // Predicated region
        $region17: #{tpu_custom_call.1} parent=11 // pred_check
          %p271 = pneg %p129
        $region18: #{tpu_custom_call.1} parent=11 // pred_check_branch
          %273 = sbr.rel (%p271) target = $region20
        $region19: #{tpu_custom_call.1} parent=11 // pred_region
          _
        $region20: #{tpu_custom_call.1} parent=11 // pred_fallthru
          _
        // Predicated region
        $region21: #{tpu_custom_call.1} parent=11 // pred_check
          %p274 = pneg %p150
        $region22: #{tpu_custom_call.1} parent=11 // pred_check_branch
          %276 = sbr.rel (%p274) target = $region24
        $region23: #{tpu_custom_call.1} parent=11 // pred_region
          _
        $region24: #{tpu_custom_call.1} parent=11 // pred_fallthru
          _
        // Predicated region
        $region25: #{tpu_custom_call.1} parent=11 // pred_check
          %p277 = pneg %p171
        $region26: #{tpu_custom_call.1} parent=11 // pred_check_branch
          %279 = sbr.rel (%p277) target = $region28
        $region27: #{tpu_custom_call.1} parent=11 // pred_region
          _
        $region28: #{tpu_custom_call.1} parent=11 // pred_fallthru
          _
      $region12: #{tpu_custom_call.1} parent=5 // pred_fallthru
        _
      %p280 = scmp.lt.s32.totalorder %s21, 2
      // Predicated region
      $region29: #{tpu_custom_call.1} parent=5 // pred_check
        %p281 = pneg %p280
      $region30: #{tpu_custom_call.1} parent=5 // pred_check_branch
        %283 = sbr.rel (%p281) target = $region32
      $region31: #{tpu_custom_call.1} parent=5 // pred_region
        // Predicated region
        $region33: #{tpu_custom_call.1} parent=31 // pred_check
          %p284 = pneg %p55
        $region34: #{tpu_custom_call.1} parent=31 // pred_check_branch
          %286 = sbr.rel (%p284) target = $region36
        $region35: #{tpu_custom_call.1} parent=31 // pred_region
          %p287 = scmp.lt.s32.totalorder %s28, 1
          %s288 = scalar_select %p287, %s28, 1
          %p289 = scmp.lt.s32.totalorder %s29, 0
          %s290 = scalar_select %p289, %s29, 0
          %s291 = sadd.s32 %s290, %s288
          %s292 = smul.addr %s291, 8
          %s293 = scalar_lea.vmem %s0, %s292
        $region36: #{tpu_custom_call.1} parent=31 // pred_fallthru
          _
        // Predicated region
        $region37: #{tpu_custom_call.1} parent=31 // pred_check
          %p294 = pneg %p81
        $region38: #{tpu_custom_call.1} parent=31 // pred_check_branch
          %296 = sbr.rel (%p294) target = $region40
        $region39: #{tpu_custom_call.1} parent=31 // pred_region
          %p297 = scmp.lt.s32.totalorder %s28, 1
          %s298 = scalar_select %p297, %s28, 1
          %s299 = smul.addr %s298, 16
          %s300 = smul.addr %s299, 8
          %s301 = scalar_lea.vmem %s1, %s300
        $region40: #{tpu_custom_call.1} parent=31 // pred_fallthru
          _
        // Predicated region
        $region41: #{tpu_custom_call.1} parent=31 // pred_check
          %p302 = pneg %p191
        $region42: #{tpu_custom_call.1} parent=31 // pred_check_branch
          %304 = sbr.rel (%p302) target = $region44
        $region43: #{tpu_custom_call.1} parent=31 // pred_region
          %p305 = scmp.lt.s32.totalorder %s28, 1
          %s306 = scalar_select %p305, %s28, 1
          %s307 = scalar_lea.vmem %s6, %s306
        $region44: #{tpu_custom_call.1} parent=31 // pred_fallthru
          _
      $region32: #{tpu_custom_call.1} parent=5 // pred_fallthru
        _
      %p308 = scmp.le.s32.totalorder 1, %s21
      %p309 = scmp.lt.s32.totalorder %s21, 3
      %p310 = pnand %p308, %p309
      %p311 = pneg %p310
      // Predicated region
      $region45: #{tpu_custom_call.1} parent=5 // pred_check
        _
      $region46: #{tpu_custom_call.1} parent=5 // pred_check_branch
        %313 = sbr.rel (%p310) target = $region48
      $region47: #{tpu_custom_call.1} parent=5 // pred_region
        %s314 = ssub.s32 %s21, 1
        %p315 = scmp.lt.s32.totalorder %s30, 1
        %s316 = scalar_select %p315, %s30, 1
        %p317 = scmp.lt.s32.totalorder %s31, 0
        %s318 = scalar_select %p317, %s31, 0
        %s319 = sadd.s32 %s318, %s316
        %s320 = smul.addr %s319, 8
        %s321 = scalar_lea.vmem %s0, %s320
        %p322 = pneg %p61
        %p323 = pneg %p58
        %p324 = scmp.lt.s32.totalorder %s30, 1
        %s325 = scalar_select %p324, %s30, 1
        %s326 = smul.addr %s325, 16
        %s327 = smul.addr %s326, 8
        %s328 = scalar_lea.vmem %s1, %s327
        %p329 = pneg %p87
        %p330 = pneg %p84
        %p331 = pneg %p108
        %p332 = pneg %p105
        %p333 = pneg %p129
        %p334 = pneg %p126
        %p335 = pneg %p150
        %p336 = pneg %p147
        %p337 = pneg %p171
        %p338 = pneg %p168
        %p339 = scmp.lt.s32.totalorder %s30, 1
        %s340 = scalar_select %p339, %s30, 1
        %s341 = scalar_lea.vmem %s6, %s340
        %p342 = pneg %p197
        %p343 = pneg %p194
        %p344 = pneg %p225
        %p345 = pneg %p222
        %s346 = sand.u32 %s212, 1
        %s347 = scalar_lea.sflag [#allocation4], %s346
        %s348 = sand.u32 %s212, 1
        %s349 = smul.addr %s348, 8
        %s350 = scalar_lea.vmem [#allocation3], %s349
        %p351 = pneg %p253
        %p352 = pneg %p250
        %s353 = sand.u32 %s240, 1
        %s354 = scalar_lea.sflag [#allocation6], %s353
        %s355 = sand.u32 %s240, 1
        %s356 = smul.addr %s355, 8
        %s357 = scalar_lea.vmem [#allocation5], %s356
        %p358 = scmp.lt.s32.totalorder %s30, 1
        %s359 = scalar_select %p358, %s30, 1
        %p360 = scmp.lt.s32.totalorder %s31, 0
        %s361 = scalar_select %p360, %s31, 0
        %s362 = sadd.s32 %s361, %s359
        %s363 = smul.addr %s362, 8
        %s364 = scalar_lea.vmem %s0, %s363
        %p365 = scmp.lt.s32.totalorder %s30, 1
        %s366 = scalar_select %p365, %s30, 1
        %s367 = smul.addr %s366, 16
        %s368 = smul.addr %s367, 8
        %s369 = scalar_lea.vmem %s1, %s368
        %p370 = scmp.lt.s32.totalorder %s30, 1
        %s371 = scalar_select %p370, %s30, 1
        %s372 = scalar_lea.vmem %s6, %s371
        %v373 = vld [vmem:[%s364] sm:$0xff]
        %v374 = vld [vmem:[%s2] sm:$0xff]
        %v375 = vld [vmem:[%s2 + $0x8] sm:$0xff]
        %v376 = vld [vmem:[%s2 + $0x10] sm:$0xff]
        %v377 = vld [vmem:[%s2 + $0x18] sm:$0xff]
        %v378 = vld [vmem:[%s3] sm:$0xff]
        %v379 = vld [vmem:[%s3 + $0x8] sm:$0xff]
        %v380 = vld [vmem:[%s3 + $0x10] sm:$0xff]
        %v381 = vld [vmem:[%s3 + $0x18] sm:$0xff]
        %v382 = vld [vmem:[%s4] sm:$0x1]
        %v383 = vld [vmem:[%s5] sm:$0x1]
        %v384 = vld [vmem:[%s372] sm:$0x1]
        %vm385 = vcmask 261120
        %v387 = vsel %vm385, %v373, 0
        %389 = vmatprep.subr.mxu0 0.0
        %390 = vmatpush1.msra.mxu0 %v374
        %391 = vmatprep.subr.mxu0 0.0
        %392 = vmatpush1.msra.mxu0 %v375
        %393 = vmatprep.subr.mxu0 0.0
        %394 = vmatpush1.msra.mxu0 %v376
        %395 = vmatprep.subr.mxu0 0.0
        %396 = vmatpush1.msra.mxu0 %v377
        %397 = vmatprep.subr.mxu0 0.0
        %398 = vmatpush1.msra.mxu0 0.0
        %399 = vmatprep.subr.mxu0 0.0
        %400 = vmatpush1.msra.mxu0 0.0
        %401 = vmatprep.subr.mxu0 0.0
        %402 = vmatpush1.msra.mxu0 0.0
        %403 = vmatprep.subr.mxu0 0.0
        %404 = vmatpush1.msra.mxu0 0.0
        %405 = vmatprep.subr.mxu0 0.0
        %406 = vmatpush1.msra.mxu0 0.0
        %407 = vmatprep.subr.mxu0 0.0
        %408 = vmatpush1.msra.mxu0 0.0
        %409 = vmatprep.subr.mxu0 0.0
        %410 = vmatpush1.msra.mxu0 0.0
        %411 = vmatprep.subr.mxu0 0.0
        %412 = vmatpush1.msra.mxu0 0.0
        %413 = vmatprep.subr.mxu0 0.0
        %414 = vmatpush1.msra.mxu0 0.0
        %415 = vmatprep.subr.mxu0 0.0
        %416 = vmatpush1.msra.mxu0 0.0
        %417 = vmatprep.subr.mxu0 0.0
        %418 = vmatpush1.msra.mxu0 0.0
        %419 = vmatprep.subr.mxu0 0.0
        %420 = vmatpush1.msra.mxu0 0.0
        %421 = vmatprep.subr.mxu0 0.0
        %422 = vmatpush1.msra.mxu0 0.0
        %423 = vmatprep.subr.mxu0 0.0
        %424 = vmatpush1.msra.mxu0 0.0
        %425 = vmatprep.subr.mxu0 0.0
        %426 = vmatpush1.msra.mxu0 0.0
        %427 = vmatprep.subr.mxu0 0.0
        %428 = vmatpush1.msra.mxu0 0.0
        %429 = vmatprep.subr.mxu0 0.0
        %430 = vmatpush1.msra.mxu0 0.0
        %431 = vmatprep.subr.mxu0 0.0
        %432 = vmatpush1.msra.mxu0 0.0
        %433 = vmatprep.subr.mxu0 0.0
        %434 = vmatpush1.msra.mxu0 0.0
        %435 = vmatprep.subr.mxu0 0.0
        %436 = vmatpush1.msra.mxu0 0.0
        %437 = vmatprep.subr.mxu0 0.0
        %438 = vmatpush1.msra.mxu0 0.0
        %439 = vmatprep.subr.mxu0 0.0
        %440 = vmatpush1.msra.mxu0 0.0
        %441 = vmatprep.subr.mxu0 0.0
        %442 = vmatpush1.msra.mxu0 0.0
        %443 = vmatprep.subr.mxu0 0.0
        %444 = vmatpush1.msra.mxu0 0.0
        %445 = vmatprep.subr.mxu0 0.0
        %446 = vmatpush1.msra.mxu0 0.0
        %447 = vmatprep.subr.mxu0 0.0
        %448 = vmatpush1.msra.mxu0 0.0
        %449 = vmatprep.subr.mxu0 0.0
        %450 = vmatpush1.msra.mxu0 0.0
        %451 = vmatprep.subr.mxu0 0.0
        %452 = vmatpush1.msra.mxu0 0.0
        %453 = vmatprep.mubr.f32.mxu0 0.0
        %454 = vmatmul.mubr.f32.gmra.mrb[0].mxu0 %v387
        %v455 = vpop.f32.mrb[0].mxu0
        %v456 = vadd.f32 0.0, %v455
        %v457 = vpop.f32.mrb[0].mxu0
        %458 = vdwg.mxu0
        %v459 = vld [vmem:[%s369] sm:$0xff]
        %v460 = vld [vmem:[%s369 + $0x8] sm:$0xff]
        %v461 = vld [vmem:[%s369 + $0x10] sm:$0xff]
        %v462 = vld [vmem:[%s369 + $0x18] sm:$0xff]
        %v463 = vld [vmem:[%s369 + $0x20] sm:$0xff]
        %v464 = vld [vmem:[%s369 + $0x28] sm:$0xff]
        %v465 = vld [vmem:[%s369 + $0x30] sm:$0xff]
        %v466 = vld [vmem:[%s369 + $0x38] sm:$0xff]
        %v468 = vlaneseq
        %v469 = vshrl.u32 %v468, 7
        %v470 = vsub.s32 0, %v469
        %v471 = vrot.slane %v382, %v470
        %v474 = vsel %vm385, %v459, 0
        %v477 = vsel %vm385, %v460, 0
        %v480 = vsel %vm385, %v461, 0
        %v483 = vsel %vm385, %v462, 0
        %v486 = vsel %vm385, %v463, 0
        %v489 = vsel %vm385, %v464, 0
        %v492 = vsel %vm385, %v465, 0
        %v495 = vsel %vm385, %v466, 0
        %497 = vmatprep.subr.mxu0 0.0
        %498 = vmatpush1.msra.mxu0 %v378
        %499 = vmatprep.subr.mxu0 0.0
        %500 = vmatpush1.msra.mxu0 %v379
        %501 = vmatprep.subr.mxu0 0.0
        %502 = vmatpush1.msra.mxu0 %v380
        %503 = vmatprep.subr.mxu0 0.0
        %504 = vmatpush1.msra.mxu0 %v381
        %505 = vmatprep.subr.mxu0 0.0
        %506 = vmatpush1.msra.mxu0 0.0
        %507 = vmatprep.subr.mxu0 0.0
        %508 = vmatpush1.msra.mxu0 0.0
        %509 = vmatprep.subr.mxu0 0.0
        %510 = vmatpush1.msra.mxu0 0.0
        %511 = vmatprep.subr.mxu0 0.0
        %512 = vmatpush1.msra.mxu0 0.0
        %513 = vmatprep.subr.mxu0 0.0
        %514 = vmatpush1.msra.mxu0 0.0
        %515 = vmatprep.subr.mxu0 0.0
        %516 = vmatpush1.msra.mxu0 0.0
        %517 = vmatprep.subr.mxu0 0.0
        %518 = vmatpush1.msra.mxu0 0.0
        %519 = vmatprep.subr.mxu0 0.0
        %520 = vmatpush1.msra.mxu0 0.0
        %521 = vmatprep.subr.mxu0 0.0
        %522 = vmatpush1.msra.mxu0 0.0
        %523 = vmatprep.subr.mxu0 0.0
        %524 = vmatpush1.msra.mxu0 0.0
        %525 = vmatprep.subr.mxu0 0.0
        %526 = vmatpush1.msra.mxu0 0.0
        %527 = vmatprep.subr.mxu0 0.0
        %528 = vmatpush1.msra.mxu0 0.0
        %529 = vmatprep.subr.mxu0 0.0
        %530 = vmatpush1.msra.mxu0 0.0
        %531 = vmatprep.subr.mxu0 0.0
        %532 = vmatpush1.msra.mxu0 0.0
        %533 = vmatprep.subr.mxu0 0.0
        %534 = vmatpush1.msra.mxu0 0.0
        %535 = vmatprep.subr.mxu0 0.0
        %536 = vmatpush1.msra.mxu0 0.0
        %537 = vmatprep.subr.mxu0 0.0
        %538 = vmatpush1.msra.mxu0 0.0
        %539 = vmatprep.subr.mxu0 0.0
        %540 = vmatpush1.msra.mxu0 0.0
        %541 = vmatprep.subr.mxu0 0.0
        %542 = vmatpush1.msra.mxu0 0.0
        %543 = vmatprep.subr.mxu0 0.0
        %544 = vmatpush1.msra.mxu0 0.0
        %545 = vmatprep.subr.mxu0 0.0
        %546 = vmatpush1.msra.mxu0 0.0
        %547 = vmatprep.subr.mxu0 0.0
        %548 = vmatpush1.msra.mxu0 0.0
        %549 = vmatprep.subr.mxu0 0.0
        %550 = vmatpush1.msra.mxu0 0.0
        %551 = vmatprep.subr.mxu0 0.0
        %552 = vmatpush1.msra.mxu0 0.0
        %553 = vmatprep.subr.mxu0 0.0
        %554 = vmatpush1.msra.mxu0 0.0
        %555 = vmatprep.subr.mxu0 0.0
        %556 = vmatpush1.msra.mxu0 0.0
        %557 = vmatprep.subr.mxu0 0.0
        %558 = vmatpush1.msra.mxu0 0.0
        %559 = vmatprep.subr.mxu0 0.0
        %560 = vmatpush1.msra.mxu0 0.0
        %561 = vmatprep.mubr.f32.mxu0 0.0
        %562 = vmatmul.mubr.f32.gmra.mrb[0].mxu0 %v474
        %v563 = vpop.f32.mrb[0].mxu0
        %v564 = vadd.f32 %v471, %v563
        %v565 = vpop.f32.mrb[0].mxu0
        %566 = vmatprep.mubr.f32.mxu0 0.0
        %567 = vmatmul.mubr.f32.gmra.mrb[0].mxu0 %v477
        %v568 = vpop.f32.mrb[0].mxu0
        %v569 = vadd.f32 %v471, %v568
        %v570 = vpop.f32.mrb[0].mxu0
        %571 = vmatprep.mubr.f32.mxu0 0.0
        %572 = vmatmul.mubr.f32.gmra.mrb[0].mxu0 %v480
        %v573 = vpop.f32.mrb[0].mxu0
        %v574 = vadd.f32 %v471, %v573
        %v575 = vpop.f32.mrb[0].mxu0
        %576 = vmatprep.mubr.f32.mxu0 0.0
        %577 = vmatmul.mubr.f32.gmra.mrb[0].mxu0 %v483
        %v578 = vpop.f32.mrb[0].mxu0
        %v579 = vadd.f32 %v471, %v578
        %v580 = vpop.f32.mrb[0].mxu0
        %581 = vmatprep.mubr.f32.mxu0 0.0
        %582 = vmatmul.mubr.f32.gmra.mrb[0].mxu0 %v486
        %v583 = vpop.f32.mrb[0].mxu0
        %v584 = vadd.f32 %v471, %v583
        %v585 = vpop.f32.mrb[0].mxu0
        %586 = vmatprep.mubr.f32.mxu0 0.0
        %587 = vmatmul.mubr.f32.gmra.mrb[0].mxu0 %v489
        %v588 = vpop.f32.mrb[0].mxu0
        %v589 = vadd.f32 %v471, %v588
        %v590 = vpop.f32.mrb[0].mxu0
        %591 = vmatprep.mubr.f32.mxu0 0.0
        %592 = vmatmul.mubr.f32.gmra.mrb[0].mxu0 %v492
        %v593 = vpop.f32.mrb[0].mxu0
        %v594 = vadd.f32 %v471, %v593
        %v595 = vpop.f32.mrb[0].mxu0
        %596 = vmatprep.mubr.f32.mxu0 0.0
        %597 = vmatmul.mubr.f32.gmra.mrb[0].mxu0 %v495
        %v598 = vpop.f32.mrb[0].mxu0
        %v599 = vadd.f32 %v471, %v598
        %v600 = vpop.f32.mrb[0].mxu0
        %601 = vdwg.mxu0
        %v610 = vcombine.high %v564, %v564
        %v612 = vunpack.c.l.s4 1966171168
        %v613 = vunpack.c.0.s8 %v612
        %v614 = vlaneseq
        %v615 = vshrl.u32 %v614, 7
        %v616 = vsub.s32 %v613, %v615
        %v617 = vrot.slane %v564, %v616
        %v619 = vunpack.c.l.s4 1966171168
        %v620 = vunpack.c.0.s8 %v619
        %v621 = vlaneseq
        %v622 = vshrl.u32 %v621, 7
        %v623 = vsub.s32 %v620, %v622
        %v624 = vrot.slane %v610, %v623
        %v625 = vcombine.high %v617, %v617
        %v626 = vcombine.high %v624, %v624
        %v628 = vunpack.c.l.s4 1966171168
        %v629 = vunpack.c.0.s8 %v628
        %v630 = vlaneseq
        %v631 = vshrl.u32 %v630, 7
        %v632 = vsub.s32 %v629, %v631
        %v633 = vrot.slane %v617, %v632
        %v635 = vunpack.c.l.s4 1966171168
        %v636 = vunpack.c.0.s8 %v635
        %v637 = vlaneseq
        %v638 = vshrl.u32 %v637, 7
        %v639 = vsub.s32 %v636, %v638
        %v640 = vrot.slane %v624, %v639
        %v642 = vunpack.c.l.s4 1966171168
        %v643 = vunpack.c.0.s8 %v642
        %v644 = vlaneseq
        %v645 = vshrl.u32 %v644, 7
        %v646 = vsub.s32 %v643, %v645
        %v647 = vrot.slane %v625, %v646
        %v649 = vunpack.c.l.s4 1966171168
        %v650 = vunpack.c.0.s8 %v649
        %v651 = vlaneseq
        %v652 = vshrl.u32 %v651, 7
        %v653 = vsub.s32 %v650, %v652
        %v654 = vrot.slane %v626, %v653
        %v655 = vcombine.high %v633, %v633
        %v656 = vcombine.high %v640, %v640
        %v657 = vcombine.high %v647, %v647
        %v658 = vcombine.high %v654, %v654
        %v659 = vcombine.high %v569, %v569
        %v661 = vunpack.c.l.s4 1966171168
        %v662 = vunpack.c.0.s8 %v661
        %v663 = vlaneseq
        %v664 = vshrl.u32 %v663, 7
        %v665 = vsub.s32 %v662, %v664
        %v666 = vrot.slane %v569, %v665
        %v668 = vunpack.c.l.s4 1966171168
        %v669 = vunpack.c.0.s8 %v668
        %v670 = vlaneseq
        %v671 = vshrl.u32 %v670, 7
        %v672 = vsub.s32 %v669, %v671
        %v673 = vrot.slane %v659, %v672
        %v674 = vcombine.high %v666, %v666
        %v675 = vcombine.high %v673, %v673
        %v677 = vunpack.c.l.s4 1966171168
        %v678 = vunpack.c.0.s8 %v677
        %v679 = vlaneseq
        %v680 = vshrl.u32 %v679, 7
        %v681 = vsub.s32 %v678, %v680
        %v682 = vrot.slane %v666, %v681
        %v684 = vunpack.c.l.s4 1966171168
        %v685 = vunpack.c.0.s8 %v684
        %v686 = vlaneseq
        %v687 = vshrl.u32 %v686, 7
        %v688 = vsub.s32 %v685, %v687
        %v689 = vrot.slane %v673, %v688
        %v691 = vunpack.c.l.s4 1966171168
        %v692 = vunpack.c.0.s8 %v691
        %v693 = vlaneseq
        %v694 = vshrl.u32 %v693, 7
        %v695 = vsub.s32 %v692, %v694
        %v696 = vrot.slane %v674, %v695
        %v698 = vunpack.c.l.s4 1966171168
        %v699 = vunpack.c.0.s8 %v698
        %v700 = vlaneseq
        %v701 = vshrl.u32 %v700, 7
        %v702 = vsub.s32 %v699, %v701
        %v703 = vrot.slane %v675, %v702
        %v704 = vcombine.high %v682, %v682
        %v705 = vcombine.high %v689, %v689
        %v706 = vcombine.high %v696, %v696
        %v707 = vcombine.high %v703, %v703
        %v708 = vcombine.high %v574, %v574
        %v710 = vunpack.c.l.s4 1966171168
        %v711 = vunpack.c.0.s8 %v710
        %v712 = vlaneseq
        %v713 = vshrl.u32 %v712, 7
        %v714 = vsub.s32 %v711, %v713
        %v715 = vrot.slane %v574, %v714
        %v717 = vunpack.c.l.s4 1966171168
        %v718 = vunpack.c.0.s8 %v717
        %v719 = vlaneseq
        %v720 = vshrl.u32 %v719, 7
        %v721 = vsub.s32 %v718, %v720
        %v722 = vrot.slane %v708, %v721
        %v723 = vcombine.high %v715, %v715
        %v724 = vcombine.high %v722, %v722
        %v726 = vunpack.c.l.s4 1966171168
        %v727 = vunpack.c.0.s8 %v726
        %v728 = vlaneseq
        %v729 = vshrl.u32 %v728, 7
        %v730 = vsub.s32 %v727, %v729
        %v731 = vrot.slane %v715, %v730
        %v733 = vunpack.c.l.s4 1966171168
        %v734 = vunpack.c.0.s8 %v733
        %v735 = vlaneseq
        %v736 = vshrl.u32 %v735, 7
        %v737 = vsub.s32 %v734, %v736
        %v738 = vrot.slane %v722, %v737
        %v740 = vunpack.c.l.s4 1966171168
        %v741 = vunpack.c.0.s8 %v740
        %v742 = vlaneseq
        %v743 = vshrl.u32 %v742, 7
        %v744 = vsub.s32 %v741, %v743
        %v745 = vrot.slane %v723, %v744
        %v747 = vunpack.c.l.s4 1966171168
        %v748 = vunpack.c.0.s8 %v747
        %v749 = vlaneseq
        %v750 = vshrl.u32 %v749, 7
        %v751 = vsub.s32 %v748, %v750
        %v752 = vrot.slane %v724, %v751
        %v753 = vcombine.high %v731, %v731
        %v754 = vcombine.high %v738, %v738
        %v755 = vcombine.high %v745, %v745
        %v756 = vcombine.high %v752, %v752
        %v757 = vcombine.high %v579, %v579
        %v759 = vunpack.c.l.s4 1966171168
        %v760 = vunpack.c.0.s8 %v759
        %v761 = vlaneseq
        %v762 = vshrl.u32 %v761, 7
        %v763 = vsub.s32 %v760, %v762
        %v764 = vrot.slane %v579, %v763
        %v766 = vunpack.c.l.s4 1966171168
        %v767 = vunpack.c.0.s8 %v766
        %v768 = vlaneseq
        %v769 = vshrl.u32 %v768, 7
        %v770 = vsub.s32 %v767, %v769
        %v771 = vrot.slane %v757, %v770
        %v772 = vcombine.high %v764, %v764
        %v773 = vcombine.high %v771, %v771
        %v775 = vunpack.c.l.s4 1966171168
        %v776 = vunpack.c.0.s8 %v775
        %v777 = vlaneseq
        %v778 = vshrl.u32 %v777, 7
        %v779 = vsub.s32 %v776, %v778
        %v780 = vrot.slane %v764, %v779
        %v782 = vunpack.c.l.s4 1966171168
        %v783 = vunpack.c.0.s8 %v782
        %v784 = vlaneseq
        %v785 = vshrl.u32 %v784, 7
        %v786 = vsub.s32 %v783, %v785
        %v787 = vrot.slane %v771, %v786
        %v789 = vunpack.c.l.s4 1966171168
        %v790 = vunpack.c.0.s8 %v789
        %v791 = vlaneseq
        %v792 = vshrl.u32 %v791, 7
        %v793 = vsub.s32 %v790, %v792
        %v794 = vrot.slane %v772, %v793
        %v796 = vunpack.c.l.s4 1966171168
        %v797 = vunpack.c.0.s8 %v796
        %v798 = vlaneseq
        %v799 = vshrl.u32 %v798, 7
        %v800 = vsub.s32 %v797, %v799
        %v801 = vrot.slane %v773, %v800
        %v802 = vcombine.high %v780, %v780
        %v803 = vcombine.high %v787, %v787
        %v804 = vcombine.high %v794, %v794
        %v805 = vcombine.high %v801, %v801
        %v806 = vcombine.high %v584, %v584
        %v808 = vunpack.c.l.s4 1966171168
        %v809 = vunpack.c.0.s8 %v808
        %v810 = vlaneseq
        %v811 = vshrl.u32 %v810, 7
        %v812 = vsub.s32 %v809, %v811
        %v813 = vrot.slane %v584, %v812
        %v815 = vunpack.c.l.s4 1966171168
        %v816 = vunpack.c.0.s8 %v815
        %v817 = vlaneseq
        %v818 = vshrl.u32 %v817, 7
        %v819 = vsub.s32 %v816, %v818
        %v820 = vrot.slane %v806, %v819
        %v821 = vcombine.high %v813, %v813
        %v822 = vcombine.high %v820, %v820
        %v824 = vunpack.c.l.s4 1966171168
        %v825 = vunpack.c.0.s8 %v824
        %v826 = vlaneseq
        %v827 = vshrl.u32 %v826, 7
        %v828 = vsub.s32 %v825, %v827
        %v829 = vrot.slane %v813, %v828
        %v831 = vunpack.c.l.s4 1966171168
        %v832 = vunpack.c.0.s8 %v831
        %v833 = vlaneseq
        %v834 = vshrl.u32 %v833, 7
        %v835 = vsub.s32 %v832, %v834
        %v836 = vrot.slane %v820, %v835
        %v838 = vunpack.c.l.s4 1966171168
        %v839 = vunpack.c.0.s8 %v838
        %v840 = vlaneseq
        %v841 = vshrl.u32 %v840, 7
        %v842 = vsub.s32 %v839, %v841
        %v843 = vrot.slane %v821, %v842
        %v845 = vunpack.c.l.s4 1966171168
        %v846 = vunpack.c.0.s8 %v845
        %v847 = vlaneseq
        %v848 = vshrl.u32 %v847, 7
        %v849 = vsub.s32 %v846, %v848
        %v850 = vrot.slane %v822, %v849
        %v851 = vcombine.high %v829, %v829
        %v852 = vcombine.high %v836, %v836
        %v853 = vcombine.high %v843, %v843
        %v854 = vcombine.high %v850, %v850
        %v855 = vcombine.high %v589, %v589
        %v857 = vunpack.c.l.s4 1966171168
        %v858 = vunpack.c.0.s8 %v857
        %v859 = vlaneseq
        %v860 = vshrl.u32 %v859, 7
        %v861 = vsub.s32 %v858, %v860
        %v862 = vrot.slane %v589, %v861
        %v864 = vunpack.c.l.s4 1966171168
        %v865 = vunpack.c.0.s8 %v864
        %v866 = vlaneseq
        %v867 = vshrl.u32 %v866, 7
        %v868 = vsub.s32 %v865, %v867
        %v869 = vrot.slane %v855, %v868
        %v870 = vcombine.high %v862, %v862
        %v871 = vcombine.high %v869, %v869
        %v873 = vunpack.c.l.s4 1966171168
        %v874 = vunpack.c.0.s8 %v873
        %v875 = vlaneseq
        %v876 = vshrl.u32 %v875, 7
        %v877 = vsub.s32 %v874, %v876
        %v878 = vrot.slane %v862, %v877
        %v880 = vunpack.c.l.s4 1966171168
        %v881 = vunpack.c.0.s8 %v880
        %v882 = vlaneseq
        %v883 = vshrl.u32 %v882, 7
        %v884 = vsub.s32 %v881, %v883
        %v885 = vrot.slane %v869, %v884
        %v887 = vunpack.c.l.s4 1966171168
        %v888 = vunpack.c.0.s8 %v887
        %v889 = vlaneseq
        %v890 = vshrl.u32 %v889, 7
        %v891 = vsub.s32 %v888, %v890
        %v892 = vrot.slane %v870, %v891
        %v894 = vunpack.c.l.s4 1966171168
        %v895 = vunpack.c.0.s8 %v894
        %v896 = vlaneseq
        %v897 = vshrl.u32 %v896, 7
        %v898 = vsub.s32 %v895, %v897
        %v899 = vrot.slane %v871, %v898
        %v900 = vcombine.high %v878, %v878
        %v901 = vcombine.high %v885, %v885
        %v902 = vcombine.high %v892, %v892
        %v903 = vcombine.high %v899, %v899
        %v904 = vcombine.high %v594, %v594
        %v906 = vunpack.c.l.s4 1966171168
        %v907 = vunpack.c.0.s8 %v906
        %v908 = vlaneseq
        %v909 = vshrl.u32 %v908, 7
        %v910 = vsub.s32 %v907, %v909
        %v911 = vrot.slane %v594, %v910
        %v913 = vunpack.c.l.s4 1966171168
        %v914 = vunpack.c.0.s8 %v913
        %v915 = vlaneseq
        %v916 = vshrl.u32 %v915, 7
        %v917 = vsub.s32 %v914, %v916
        %v918 = vrot.slane %v904, %v917
        %v919 = vcombine.high %v911, %v911
        %v920 = vcombine.high %v918, %v918
        %v922 = vunpack.c.l.s4 1966171168
        %v923 = vunpack.c.0.s8 %v922
        %v924 = vlaneseq
        %v925 = vshrl.u32 %v924, 7
        %v926 = vsub.s32 %v923, %v925
        %v927 = vrot.slane %v911, %v926
        %v929 = vunpack.c.l.s4 1966171168
        %v930 = vunpack.c.0.s8 %v929
        %v931 = vlaneseq
        %v932 = vshrl.u32 %v931, 7
        %v933 = vsub.s32 %v930, %v932
        %v934 = vrot.slane %v918, %v933
        %v936 = vunpack.c.l.s4 1966171168
        %v937 = vunpack.c.0.s8 %v936
        %v938 = vlaneseq
        %v939 = vshrl.u32 %v938, 7
        %v940 = vsub.s32 %v937, %v939
        %v941 = vrot.slane %v919, %v940
        %v943 = vunpack.c.l.s4 1966171168
        %v944 = vunpack.c.0.s8 %v943
        %v945 = vlaneseq
        %v946 = vshrl.u32 %v945, 7
        %v947 = vsub.s32 %v944, %v946
        %v948 = vrot.slane %v920, %v947
        %v949 = vcombine.high %v927, %v927
        %v950 = vcombine.high %v934, %v934
        %v951 = vcombine.high %v941, %v941
        %v952 = vcombine.high %v948, %v948
        %v953 = vcombine.high %v599, %v599
        %v955 = vunpack.c.l.s4 1966171168
        %v956 = vunpack.c.0.s8 %v955
        %v957 = vlaneseq
        %v958 = vshrl.u32 %v957, 7
        %v959 = vsub.s32 %v956, %v958
        %v960 = vrot.slane %v599, %v959
        %v962 = vunpack.c.l.s4 1966171168
        %v963 = vunpack.c.0.s8 %v962
        %v964 = vlaneseq
        %v965 = vshrl.u32 %v964, 7
        %v966 = vsub.s32 %v963, %v965
        %v967 = vrot.slane %v953, %v966
        %v968 = vcombine.high %v960, %v960
        %v969 = vcombine.high %v967, %v967
        %v971 = vunpack.c.l.s4 1966171168
        %v972 = vunpack.c.0.s8 %v971
        %v973 = vlaneseq
        %v974 = vshrl.u32 %v973, 7
        %v975 = vsub.s32 %v972, %v974
        %v976 = vrot.slane %v960, %v975
        %v978 = vunpack.c.l.s4 1966171168
        %v979 = vunpack.c.0.s8 %v978
        %v980 = vlaneseq
        %v981 = vshrl.u32 %v980, 7
        %v982 = vsub.s32 %v979, %v981
        %v983 = vrot.slane %v967, %v982
        %v985 = vunpack.c.l.s4 1966171168
        %v986 = vunpack.c.0.s8 %v985
        %v987 = vlaneseq
        %v988 = vshrl.u32 %v987, 7
        %v989 = vsub.s32 %v986, %v988
        %v990 = vrot.slane %v968, %v989
        %v992 = vunpack.c.l.s4 1966171168
        %v993 = vunpack.c.0.s8 %v992
        %v994 = vlaneseq
        %v995 = vshrl.u32 %v994, 7
        %v996 = vsub.s32 %v993, %v995
        %v997 = vrot.slane %v969, %v996
        %v998 = vcombine.high %v976, %v976
        %v999 = vcombine.high %v983, %v983
        %v1000 = vcombine.high %v990, %v990
        %v1001 = vcombine.high %v997, %v997
        %v1002 = vlaneseq
        %v1003 = vshrl.u32 %v1002, 7
        %v1004 = vsub.s32 0, %v1003
        %v1005 = vrot.slane %v633, %v1004
        %v1006 = vlaneseq
        %v1007 = vshrl.u32 %v1006, 7
        %v1008 = vsub.s32 0, %v1007
        %v1009 = vrot.slane %v647, %v1008
        %v1010 = vlaneseq
        %v1011 = vshrl.u32 %v1010, 7
        %v1012 = vsub.s32 0, %v1011
        %v1013 = vrot.slane %v655, %v1012
        %v1014 = vlaneseq
        %v1015 = vshrl.u32 %v1014, 7
        %v1016 = vsub.s32 0, %v1015
        %v1017 = vrot.slane %v657, %v1016
        %v1018 = vlaneseq
        %v1019 = vshrl.u32 %v1018, 7
        %v1020 = vsub.s32 0, %v1019
        %v1021 = vrot.slane %v640, %v1020
        %v1022 = vlaneseq
        %v1023 = vshrl.u32 %v1022, 7
        %v1024 = vsub.s32 0, %v1023
        %v1025 = vrot.slane %v654, %v1024
        %v1026 = vlaneseq
        %v1027 = vshrl.u32 %v1026, 7
        %v1028 = vsub.s32 0, %v1027
        %v1029 = vrot.slane %v656, %v1028
        %v1030 = vlaneseq
        %v1031 = vshrl.u32 %v1030, 7
        %v1032 = vsub.s32 0, %v1031
        %v1033 = vrot.slane %v658, %v1032
        %v1034 = vlaneseq
        %v1035 = vshrl.u32 %v1034, 7
        %v1036 = vsub.s32 0, %v1035
        %v1037 = vrot.slane %v682, %v1036
        %v1038 = vlaneseq
        %v1039 = vshrl.u32 %v1038, 7
        %v1040 = vsub.s32 0, %v1039
        %v1041 = vrot.slane %v696, %v1040
        %v1042 = vlaneseq
        %v1043 = vshrl.u32 %v1042, 7
        %v1044 = vsub.s32 0, %v1043
        %v1045 = vrot.slane %v704, %v1044
        %v1046 = vlaneseq
        %v1047 = vshrl.u32 %v1046, 7
        %v1048 = vsub.s32 0, %v1047
        %v1049 = vrot.slane %v706, %v1048
        %v1050 = vlaneseq
        %v1051 = vshrl.u32 %v1050, 7
        %v1052 = vsub.s32 0, %v1051
        %v1053 = vrot.slane %v689, %v1052
        %v1054 = vlaneseq
        %v1055 = vshrl.u32 %v1054, 7
        %v1056 = vsub.s32 0, %v1055
        %v1057 = vrot.slane %v703, %v1056
        %v1058 = vlaneseq
        %v1059 = vshrl.u32 %v1058, 7
        %v1060 = vsub.s32 0, %v1059
        %v1061 = vrot.slane %v705, %v1060
        %v1062 = vlaneseq
        %v1063 = vshrl.u32 %v1062, 7
        %v1064 = vsub.s32 0, %v1063
        %v1065 = vrot.slane %v707, %v1064
        %v1066 = vlaneseq
        %v1067 = vshrl.u32 %v1066, 7
        %v1068 = vsub.s32 0, %v1067
        %v1069 = vrot.slane %v731, %v1068
        %v1070 = vlaneseq
        %v1071 = vshrl.u32 %v1070, 7
        %v1072 = vsub.s32 0, %v1071
        %v1073 = vrot.slane %v745, %v1072
        %v1074 = vlaneseq
        %v1075 = vshrl.u32 %v1074, 7
        %v1076 = vsub.s32 0, %v1075
        %v1077 = vrot.slane %v753, %v1076
        %v1078 = vlaneseq
        %v1079 = vshrl.u32 %v1078, 7
        %v1080 = vsub.s32 0, %v1079
        %v1081 = vrot.slane %v755, %v1080
        %v1082 = vlaneseq
        %v1083 = vshrl.u32 %v1082, 7
        %v1084 = vsub.s32 0, %v1083
        %v1085 = vrot.slane %v738, %v1084
        %v1086 = vlaneseq
        %v1087 = vshrl.u32 %v1086, 7
        %v1088 = vsub.s32 0, %v1087
        %v1089 = vrot.slane %v752, %v1088
        %v1090 = vlaneseq
        %v1091 = vshrl.u32 %v1090, 7
        %v1092 = vsub.s32 0, %v1091
        %v1093 = vrot.slane %v754, %v1092
        %v1094 = vlaneseq
        %v1095 = vshrl.u32 %v1094, 7
        %v1096 = vsub.s32 0, %v1095
        %v1097 = vrot.slane %v756, %v1096
        %v1098 = vlaneseq
        %v1099 = vshrl.u32 %v1098, 7
        %v1100 = vsub.s32 0, %v1099
        %v1101 = vrot.slane %v780, %v1100
        %v1102 = vlaneseq
        %v1103 = vshrl.u32 %v1102, 7
        %v1104 = vsub.s32 0, %v1103
        %v1105 = vrot.slane %v794, %v1104
        %v1106 = vlaneseq
        %v1107 = vshrl.u32 %v1106, 7
        %v1108 = vsub.s32 0, %v1107
        %v1109 = vrot.slane %v802, %v1108
        %v1110 = vlaneseq
        %v1111 = vshrl.u32 %v1110, 7
        %v1112 = vsub.s32 0, %v1111
        %v1113 = vrot.slane %v804, %v1112
        %v1114 = vlaneseq
        %v1115 = vshrl.u32 %v1114, 7
        %v1116 = vsub.s32 0, %v1115
        %v1117 = vrot.slane %v787, %v1116
        %v1118 = vlaneseq
        %v1119 = vshrl.u32 %v1118, 7
        %v1120 = vsub.s32 0, %v1119
        %v1121 = vrot.slane %v801, %v1120
        %v1122 = vlaneseq
        %v1123 = vshrl.u32 %v1122, 7
        %v1124 = vsub.s32 0, %v1123
        %v1125 = vrot.slane %v803, %v1124
        %v1126 = vlaneseq
        %v1127 = vshrl.u32 %v1126, 7
        %v1128 = vsub.s32 0, %v1127
        %v1129 = vrot.slane %v805, %v1128
        %v1130 = vlaneseq
        %v1131 = vshrl.u32 %v1130, 7
        %v1132 = vsub.s32 0, %v1131
        %v1133 = vrot.slane %v829, %v1132
        %v1134 = vlaneseq
        %v1135 = vshrl.u32 %v1134, 7
        %v1136 = vsub.s32 0, %v1135
        %v1137 = vrot.slane %v843, %v1136
        %v1138 = vlaneseq
        %v1139 = vshrl.u32 %v1138, 7
        %v1140 = vsub.s32 0, %v1139
        %v1141 = vrot.slane %v851, %v1140
        %v1142 = vlaneseq
        %v1143 = vshrl.u32 %v1142, 7
        %v1144 = vsub.s32 0, %v1143
        %v1145 = vrot.slane %v853, %v1144
        %v1146 = vlaneseq
        %v1147 = vshrl.u32 %v1146, 7
        %v1148 = vsub.s32 0, %v1147
        %v1149 = vrot.slane %v836, %v1148
        %v1150 = vlaneseq
        %v1151 = vshrl.u32 %v1150, 7
        %v1152 = vsub.s32 0, %v1151
        %v1153 = vrot.slane %v850, %v1152
        %v1154 = vlaneseq
        %v1155 = vshrl.u32 %v1154, 7
        %v1156 = vsub.s32 0, %v1155
        %v1157 = vrot.slane %v852, %v1156
        %v1158 = vlaneseq
        %v1159 = vshrl.u32 %v1158, 7
        %v1160 = vsub.s32 0, %v1159
        %v1161 = vrot.slane %v854, %v1160
        %v1162 = vlaneseq
        %v1163 = vshrl.u32 %v1162, 7
        %v1164 = vsub.s32 0, %v1163
        %v1165 = vrot.slane %v878, %v1164
        %v1166 = vlaneseq
        %v1167 = vshrl.u32 %v1166, 7
        %v1168 = vsub.s32 0, %v1167
        %v1169 = vrot.slane %v892, %v1168
        %v1170 = vlaneseq
        %v1171 = vshrl.u32 %v1170, 7
        %v1172 = vsub.s32 0, %v1171
        %v1173 = vrot.slane %v900, %v1172
        %v1174 = vlaneseq
        %v1175 = vshrl.u32 %v1174, 7
        %v1176 = vsub.s32 0, %v1175
        %v1177 = vrot.slane %v902, %v1176
        %v1178 = vlaneseq
        %v1179 = vshrl.u32 %v1178, 7
        %v1180 = vsub.s32 0, %v1179
        %v1181 = vrot.slane %v885, %v1180
        %v1182 = vlaneseq
        %v1183 = vshrl.u32 %v1182, 7
        %v1184 = vsub.s32 0, %v1183
        %v1185 = vrot.slane %v899, %v1184
        %v1186 = vlaneseq
        %v1187 = vshrl.u32 %v1186, 7
        %v1188 = vsub.s32 0, %v1187
        %v1189 = vrot.slane %v901, %v1188
        %v1190 = vlaneseq
        %v1191 = vshrl.u32 %v1190, 7
        %v1192 = vsub.s32 0, %v1191
        %v1193 = vrot.slane %v903, %v1192
        %v1194 = vlaneseq
        %v1195 = vshrl.u32 %v1194, 7
        %v1196 = vsub.s32 0, %v1195
        %v1197 = vrot.slane %v927, %v1196
        %v1198 = vlaneseq
        %v1199 = vshrl.u32 %v1198, 7
        %v1200 = vsub.s32 0, %v1199
        %v1201 = vrot.slane %v941, %v1200
        %v1202 = vlaneseq
        %v1203 = vshrl.u32 %v1202, 7
        %v1204 = vsub.s32 0, %v1203
        %v1205 = vrot.slane %v949, %v1204
        %v1206 = vlaneseq
        %v1207 = vshrl.u32 %v1206, 7
        %v1208 = vsub.s32 0, %v1207
        %v1209 = vrot.slane %v951, %v1208
        %v1210 = vlaneseq
        %v1211 = vshrl.u32 %v1210, 7
        %v1212 = vsub.s32 0, %v1211
        %v1213 = vrot.slane %v934, %v1212
        %v1214 = vlaneseq
        %v1215 = vshrl.u32 %v1214, 7
        %v1216 = vsub.s32 0, %v1215
        %v1217 = vrot.slane %v948, %v1216
        %v1218 = vlaneseq
        %v1219 = vshrl.u32 %v1218, 7
        %v1220 = vsub.s32 0, %v1219
        %v1221 = vrot.slane %v950, %v1220
        %v1222 = vlaneseq
        %v1223 = vshrl.u32 %v1222, 7
        %v1224 = vsub.s32 0, %v1223
        %v1225 = vrot.slane %v952, %v1224
        %v1226 = vlaneseq
        %v1227 = vshrl.u32 %v1226, 7
        %v1228 = vsub.s32 0, %v1227
        %v1229 = vrot.slane %v976, %v1228
        %v1230 = vlaneseq
        %v1231 = vshrl.u32 %v1230, 7
        %v1232 = vsub.s32 0, %v1231
        %v1233 = vrot.slane %v990, %v1232
        %v1234 = vlaneseq
        %v1235 = vshrl.u32 %v1234, 7
        %v1236 = vsub.s32 0, %v1235
        %v1237 = vrot.slane %v998, %v1236
        %v1238 = vlaneseq
        %v1239 = vshrl.u32 %v1238, 7
        %v1240 = vsub.s32 0, %v1239
        %v1241 = vrot.slane %v1000, %v1240
        %v1242 = vlaneseq
        %v1243 = vshrl.u32 %v1242, 7
        %v1244 = vsub.s32 0, %v1243
        %v1245 = vrot.slane %v983, %v1244
        %v1246 = vlaneseq
        %v1247 = vshrl.u32 %v1246, 7
        %v1248 = vsub.s32 0, %v1247
        %v1249 = vrot.slane %v997, %v1248
        %v1250 = vlaneseq
        %v1251 = vshrl.u32 %v1250, 7
        %v1252 = vsub.s32 0, %v1251
        %v1253 = vrot.slane %v999, %v1252
        %v1254 = vlaneseq
        %v1255 = vshrl.u32 %v1254, 7
        %v1256 = vsub.s32 0, %v1255
        %v1257 = vrot.slane %v1001, %v1256
        %v1322 = vadd.f32 %v1005, %v456
        %v1323 = vadd.f32 %v1009, %v456
        %v1324 = vadd.f32 %v1013, %v456
        %v1325 = vadd.f32 %v1017, %v456
        %v1326 = vadd.f32 %v1021, %v456
        %v1327 = vadd.f32 %v1025, %v456
        %v1328 = vadd.f32 %v1029, %v456
        %v1329 = vadd.f32 %v1033, %v456
        %v1330 = vadd.f32 %v1037, %v456
        %v1331 = vadd.f32 %v1041, %v456
        %v1332 = vadd.f32 %v1045, %v456
        %v1333 = vadd.f32 %v1049, %v456
        %v1334 = vadd.f32 %v1053, %v456
        %v1335 = vadd.f32 %v1057, %v456
        %v1336 = vadd.f32 %v1061, %v456
        %v1337 = vadd.f32 %v1065, %v456
        %v1338 = vadd.f32 %v1069, %v456
        %v1339 = vadd.f32 %v1073, %v456
        %v1340 = vadd.f32 %v1077, %v456
        %v1341 = vadd.f32 %v1081, %v456
        %v1342 = vadd.f32 %v1085, %v456
        %v1343 = vadd.f32 %v1089, %v456
        %v1344 = vadd.f32 %v1093, %v456
        %v1345 = vadd.f32 %v1097, %v456
        %v1346 = vadd.f32 %v1101, %v456
        %v1347 = vadd.f32 %v1105, %v456
        %v1348 = vadd.f32 %v1109, %v456
        %v1349 = vadd.f32 %v1113, %v456
        %v1350 = vadd.f32 %v1117, %v456
        %v1351 = vadd.f32 %v1121, %v456
        %v1352 = vadd.f32 %v1125, %v456
        %v1353 = vadd.f32 %v1129, %v456
        %v1354 = vadd.f32 %v1133, %v456
        %v1355 = vadd.f32 %v1137, %v456
        %v1356 = vadd.f32 %v1141, %v456
        %v1357 = vadd.f32 %v1145, %v456
        %v1358 = vadd.f32 %v1149, %v456
        %v1359 = vadd.f32 %v1153, %v456
        %v1360 = vadd.f32 %v1157, %v456
        %v1361 = vadd.f32 %v1161, %v456
        %v1362 = vadd.f32 %v1165, %v456
        %v1363 = vadd.f32 %v1169, %v456
        %v1364 = vadd.f32 %v1173, %v456
        %v1365 = vadd.f32 %v1177, %v456
        %v1366 = vadd.f32 %v1181, %v456
        %v1367 = vadd.f32 %v1185, %v456
        %v1368 = vadd.f32 %v1189, %v456
        %v1369 = vadd.f32 %v1193, %v456
        %v1370 = vadd.f32 %v1197, %v456
        %v1371 = vadd.f32 %v1201, %v456
        %v1372 = vadd.f32 %v1205, %v456
        %v1373 = vadd.f32 %v1209, %v456
        %v1374 = vadd.f32 %v1213, %v456
        %v1375 = vadd.f32 %v1217, %v456
        %v1376 = vadd.f32 %v1221, %v456
        %v1377 = vadd.f32 %v1225, %v456
        %v1378 = vadd.f32 %v1229, %v456
        %v1379 = vadd.f32 %v1233, %v456
        %v1380 = vadd.f32 %v1237, %v456
        %v1381 = vadd.f32 %v1241, %v456
        %v1382 = vadd.f32 %v1245, %v456
        %v1383 = vadd.f32 %v1249, %v456
        %v1384 = vadd.f32 %v1253, %v456
        %v1385 = vadd.f32 %v1257, %v456
        %v1386 = vmul.f32 %v1322, 0.01
        %v1387 = vmul.f32 %v1323, 0.01
        %v1388 = vmul.f32 %v1324, 0.01
        %v1389 = vmul.f32 %v1325, 0.01
        %v1390 = vmul.f32 %v1326, 0.01
        %v1391 = vmul.f32 %v1327, 0.01
        %v1392 = vmul.f32 %v1328, 0.01
        %v1393 = vmul.f32 %v1329, 0.01
        %v1394 = vmul.f32 %v1330, 0.01
        %v1395 = vmul.f32 %v1331, 0.01
        %v1396 = vmul.f32 %v1332, 0.01
        %v1397 = vmul.f32 %v1333, 0.01
        %v1398 = vmul.f32 %v1334, 0.01
        %v1399 = vmul.f32 %v1335, 0.01
        %v1400 = vmul.f32 %v1336, 0.01
        %v1401 = vmul.f32 %v1337, 0.01
        %v1402 = vmul.f32 %v1338, 0.01
        %v1403 = vmul.f32 %v1339, 0.01
        %v1404 = vmul.f32 %v1340, 0.01
        %v1405 = vmul.f32 %v1341, 0.01
        %v1406 = vmul.f32 %v1342, 0.01
        %v1407 = vmul.f32 %v1343, 0.01
        %v1408 = vmul.f32 %v1344, 0.01
        %v1409 = vmul.f32 %v1345, 0.01
        %v1410 = vmul.f32 %v1346, 0.01
        %v1411 = vmul.f32 %v1347, 0.01
        %v1412 = vmul.f32 %v1348, 0.01
        %v1413 = vmul.f32 %v1349, 0.01
        %v1414 = vmul.f32 %v1350, 0.01
        %v1415 = vmul.f32 %v1351, 0.01
        %v1416 = vmul.f32 %v1352, 0.01
        %v1417 = vmul.f32 %v1353, 0.01
        %v1418 = vmul.f32 %v1354, 0.01
        %v1419 = vmul.f32 %v1355, 0.01
        %v1420 = vmul.f32 %v1356, 0.01
        %v1421 = vmul.f32 %v1357, 0.01
        %v1422 = vmul.f32 %v1358, 0.01
        %v1423 = vmul.f32 %v1359, 0.01
        %v1424 = vmul.f32 %v1360, 0.01
        %v1425 = vmul.f32 %v1361, 0.01
        %v1426 = vmul.f32 %v1362, 0.01
        %v1427 = vmul.f32 %v1363, 0.01
        %v1428 = vmul.f32 %v1364, 0.01
        %v1429 = vmul.f32 %v1365, 0.01
        %v1430 = vmul.f32 %v1366, 0.01
        %v1431 = vmul.f32 %v1367, 0.01
        %v1432 = vmul.f32 %v1368, 0.01
        %v1433 = vmul.f32 %v1369, 0.01
        %v1434 = vmul.f32 %v1370, 0.01
        %v1435 = vmul.f32 %v1371, 0.01
        %v1436 = vmul.f32 %v1372, 0.01
        %v1437 = vmul.f32 %v1373, 0.01
        %v1438 = vmul.f32 %v1374, 0.01
        %v1439 = vmul.f32 %v1375, 0.01
        %v1440 = vmul.f32 %v1376, 0.01
        %v1441 = vmul.f32 %v1377, 0.01
        %v1442 = vmul.f32 %v1378, 0.01
        %v1443 = vmul.f32 %v1379, 0.01
        %v1444 = vmul.f32 %v1380, 0.01
        %v1445 = vmul.f32 %v1381, 0.01
        %v1446 = vmul.f32 %v1382, 0.01
        %v1447 = vmul.f32 %v1383, 0.01
        %v1448 = vmul.f32 %v1384, 0.01
        %v1449 = vmul.f32 %v1385, 0.01
        %v1450 = vmax.f32 %v1322, %v1386
        %v1451 = vmax.f32 %v1323, %v1387
        %v1452 = vmax.f32 %v1324, %v1388
        %v1453 = vmax.f32 %v1325, %v1389
        %v1454 = vmax.f32 %v1326, %v1390
        %v1455 = vmax.f32 %v1327, %v1391
        %v1456 = vmax.f32 %v1328, %v1392
        %v1457 = vmax.f32 %v1329, %v1393
        %v1458 = vmax.f32 %v1330, %v1394
        %v1459 = vmax.f32 %v1331, %v1395
        %v1460 = vmax.f32 %v1332, %v1396
        %v1461 = vmax.f32 %v1333, %v1397
        %v1462 = vmax.f32 %v1334, %v1398
        %v1463 = vmax.f32 %v1335, %v1399
        %v1464 = vmax.f32 %v1336, %v1400
        %v1465 = vmax.f32 %v1337, %v1401
        %v1466 = vmax.f32 %v1338, %v1402
        %v1467 = vmax.f32 %v1339, %v1403
        %v1468 = vmax.f32 %v1340, %v1404
        %v1469 = vmax.f32 %v1341, %v1405
        %v1470 = vmax.f32 %v1342, %v1406
        %v1471 = vmax.f32 %v1343, %v1407
        %v1472 = vmax.f32 %v1344, %v1408
        %v1473 = vmax.f32 %v1345, %v1409
        %v1474 = vmax.f32 %v1346, %v1410
        %v1475 = vmax.f32 %v1347, %v1411
        %v1476 = vmax.f32 %v1348, %v1412
        %v1477 = vmax.f32 %v1349, %v1413
        %v1478 = vmax.f32 %v1350, %v1414
        %v1479 = vmax.f32 %v1351, %v1415
        %v1480 = vmax.f32 %v1352, %v1416
        %v1481 = vmax.f32 %v1353, %v1417
        %v1482 = vmax.f32 %v1354, %v1418
        %v1483 = vmax.f32 %v1355, %v1419
        %v1484 = vmax.f32 %v1356, %v1420
        %v1485 = vmax.f32 %v1357, %v1421
        %v1486 = vmax.f32 %v1358, %v1422
        %v1487 = vmax.f32 %v1359, %v1423
        %v1488 = vmax.f32 %v1360, %v1424
        %v1489 = vmax.f32 %v1361, %v1425
        %v1490 = vmax.f32 %v1362, %v1426
        %v1491 = vmax.f32 %v1363, %v1427
        %v1492 = vmax.f32 %v1364, %v1428
        %v1493 = vmax.f32 %v1365, %v1429
        %v1494 = vmax.f32 %v1366, %v1430
        %v1495 = vmax.f32 %v1367, %v1431
        %v1496 = vmax.f32 %v1368, %v1432
        %v1497 = vmax.f32 %v1369, %v1433
        %v1498 = vmax.f32 %v1370, %v1434
        %v1499 = vmax.f32 %v1371, %v1435
        %v1500 = vmax.f32 %v1372, %v1436
        %v1501 = vmax.f32 %v1373, %v1437
        %v1502 = vmax.f32 %v1374, %v1438
        %v1503 = vmax.f32 %v1375, %v1439
        %v1504 = vmax.f32 %v1376, %v1440
        %v1505 = vmax.f32 %v1377, %v1441
        %v1506 = vmax.f32 %v1378, %v1442
        %v1507 = vmax.f32 %v1379, %v1443
        %v1508 = vmax.f32 %v1380, %v1444
        %v1509 = vmax.f32 %v1381, %v1445
        %v1510 = vmax.f32 %v1382, %v1446
        %v1511 = vmax.f32 %v1383, %v1447
        %v1512 = vmax.f32 %v1384, %v1448
        %v1513 = vmax.f32 %v1385, %v1449
        %v1515 = vlaneseq
        %v1516 = vshrl.u32 %v1515, 7
        %v1517 = vsub.s32 0, %v1516
        %v1518 = vrot.slane %v383, %v1517
        %v1520 = vmul.f32 %v1450, %v1518
        %v1521 = vmul.f32 %v1451, %v1518
        %v1522 = vmul.f32 %v1452, %v1518
        %v1523 = vmul.f32 %v1453, %v1518
        %v1524 = vmul.f32 %v1454, %v1518
        %v1525 = vmul.f32 %v1455, %v1518
        %v1526 = vmul.f32 %v1456, %v1518
        %v1527 = vmul.f32 %v1457, %v1518
        %v1528 = vmul.f32 %v1458, %v1518
        %v1529 = vmul.f32 %v1459, %v1518
        %v1530 = vmul.f32 %v1460, %v1518
        %v1531 = vmul.f32 %v1461, %v1518
        %v1532 = vmul.f32 %v1462, %v1518
        %v1533 = vmul.f32 %v1463, %v1518
        %v1534 = vmul.f32 %v1464, %v1518
        %v1535 = vmul.f32 %v1465, %v1518
        %v1536 = vmul.f32 %v1466, %v1518
        %v1537 = vmul.f32 %v1467, %v1518
        %v1538 = vmul.f32 %v1468, %v1518
        %v1539 = vmul.f32 %v1469, %v1518
        %v1540 = vmul.f32 %v1470, %v1518
        %v1541 = vmul.f32 %v1471, %v1518
        %v1542 = vmul.f32 %v1472, %v1518
        %v1543 = vmul.f32 %v1473, %v1518
        %v1544 = vmul.f32 %v1474, %v1518
        %v1545 = vmul.f32 %v1475, %v1518
        %v1546 = vmul.f32 %v1476, %v1518
        %v1547 = vmul.f32 %v1477, %v1518
        %v1548 = vmul.f32 %v1478, %v1518
        %v1549 = vmul.f32 %v1479, %v1518
        %v1550 = vmul.f32 %v1480, %v1518
        %v1551 = vmul.f32 %v1481, %v1518
        %v1552 = vmul.f32 %v1482, %v1518
        %v1553 = vmul.f32 %v1483, %v1518
        %v1554 = vmul.f32 %v1484, %v1518
        %v1555 = vmul.f32 %v1485, %v1518
        %v1556 = vmul.f32 %v1486, %v1518
        %v1557 = vmul.f32 %v1487, %v1518
        %v1558 = vmul.f32 %v1488, %v1518
        %v1559 = vmul.f32 %v1489, %v1518
        %v1560 = vmul.f32 %v1490, %v1518
        %v1561 = vmul.f32 %v1491, %v1518
        %v1562 = vmul.f32 %v1492, %v1518
        %v1563 = vmul.f32 %v1493, %v1518
        %v1564 = vmul.f32 %v1494, %v1518
        %v1565 = vmul.f32 %v1495, %v1518
        %v1566 = vmul.f32 %v1496, %v1518
        %v1567 = vmul.f32 %v1497, %v1518
        %v1568 = vmul.f32 %v1498, %v1518
        %v1569 = vmul.f32 %v1499, %v1518
        %v1570 = vmul.f32 %v1500, %v1518
        %v1571 = vmul.f32 %v1501, %v1518
        %v1572 = vmul.f32 %v1502, %v1518
        %v1573 = vmul.f32 %v1503, %v1518
        %v1574 = vmul.f32 %v1504, %v1518
        %v1575 = vmul.f32 %v1505, %v1518
        %v1576 = vmul.f32 %v1506, %v1518
        %v1577 = vmul.f32 %v1507, %v1518
        %v1578 = vmul.f32 %v1508, %v1518
        %v1579 = vmul.f32 %v1509, %v1518
        %v1580 = vmul.f32 %v1510, %v1518
        %v1581 = vmul.f32 %v1511, %v1518
        %v1582 = vmul.f32 %v1512, %v1518
        %v1583 = vmul.f32 %v1513, %v1518
        %v1584 = vsel %vm385, %v1520, 0.0
        %1585 = vadd.xlane.f32.xlu0 %v1584
        %v1586 = vpop.xlane.xlu0 %1585
        %v1587 = vsel %vm385, %v1521, 0.0
        %1588 = vadd.xlane.f32.xlu0 %v1587
        %v1589 = vpop.xlane.xlu0 %1588
        %v1590 = vsel %vm385, %v1522, 0.0
        %1591 = vadd.xlane.f32.xlu0 %v1590
        %v1592 = vpop.xlane.xlu0 %1591
        %v1593 = vsel %vm385, %v1523, 0.0
        %1594 = vadd.xlane.f32.xlu0 %v1593
        %v1595 = vpop.xlane.xlu0 %1594
        %v1596 = vsel %vm385, %v1524, 0.0
        %1597 = vadd.xlane.f32.xlu0 %v1596
        %v1598 = vpop.xlane.xlu0 %1597
        %v1599 = vsel %vm385, %v1525, 0.0
        %1600 = vadd.xlane.f32.xlu0 %v1599
        %v1601 = vpop.xlane.xlu0 %1600
        %v1602 = vsel %vm385, %v1526, 0.0
        %1603 = vadd.xlane.f32.xlu0 %v1602
        %v1604 = vpop.xlane.xlu0 %1603
        %v1605 = vsel %vm385, %v1527, 0.0
        %1606 = vadd.xlane.f32.xlu0 %v1605
        %v1607 = vpop.xlane.xlu0 %1606
        %v1608 = vsel %vm385, %v1528, 0.0
        %1609 = vadd.xlane.f32.xlu0 %v1608
        %v1610 = vpop.xlane.xlu0 %1609
        %v1611 = vsel %vm385, %v1529, 0.0
        %1612 = vadd.xlane.f32.xlu0 %v1611
        %v1613 = vpop.xlane.xlu0 %1612
        %v1614 = vsel %vm385, %v1530, 0.0
        %1615 = vadd.xlane.f32.xlu0 %v1614
        %v1616 = vpop.xlane.xlu0 %1615
        %v1617 = vsel %vm385, %v1531, 0.0
        %1618 = vadd.xlane.f32.xlu0 %v1617
        %v1619 = vpop.xlane.xlu0 %1618
        %v1620 = vsel %vm385, %v1532, 0.0
        %1621 = vadd.xlane.f32.xlu0 %v1620
        %v1622 = vpop.xlane.xlu0 %1621
        %v1623 = vsel %vm385, %v1533, 0.0
        %1624 = vadd.xlane.f32.xlu0 %v1623
        %v1625 = vpop.xlane.xlu0 %1624
        %v1626 = vsel %vm385, %v1534, 0.0
        %1627 = vadd.xlane.f32.xlu0 %v1626
        %v1628 = vpop.xlane.xlu0 %1627
        %v1629 = vsel %vm385, %v1535, 0.0
        %1630 = vadd.xlane.f32.xlu0 %v1629
        %v1631 = vpop.xlane.xlu0 %1630
        %v1632 = vsel %vm385, %v1536, 0.0
        %1633 = vadd.xlane.f32.xlu0 %v1632
        %v1634 = vpop.xlane.xlu0 %1633
        %v1635 = vsel %vm385, %v1537, 0.0
        %1636 = vadd.xlane.f32.xlu0 %v1635
        %v1637 = vpop.xlane.xlu0 %1636
        %v1638 = vsel %vm385, %v1538, 0.0
        %1639 = vadd.xlane.f32.xlu0 %v1638
        %v1640 = vpop.xlane.xlu0 %1639
        %v1641 = vsel %vm385, %v1539, 0.0
        %1642 = vadd.xlane.f32.xlu0 %v1641
        %v1643 = vpop.xlane.xlu0 %1642
        %v1644 = vsel %vm385, %v1540, 0.0
        %1645 = vadd.xlane.f32.xlu0 %v1644
        %v1646 = vpop.xlane.xlu0 %1645
        %v1647 = vsel %vm385, %v1541, 0.0
        %1648 = vadd.xlane.f32.xlu0 %v1647
        %v1649 = vpop.xlane.xlu0 %1648
        %v1650 = vsel %vm385, %v1542, 0.0
        %1651 = vadd.xlane.f32.xlu0 %v1650
        %v1652 = vpop.xlane.xlu0 %1651
        %v1653 = vsel %vm385, %v1543, 0.0
        %1654 = vadd.xlane.f32.xlu0 %v1653
        %v1655 = vpop.xlane.xlu0 %1654
        %v1656 = vsel %vm385, %v1544, 0.0
        %1657 = vadd.xlane.f32.xlu0 %v1656
        %v1658 = vpop.xlane.xlu0 %1657
        %v1659 = vsel %vm385, %v1545, 0.0
        %1660 = vadd.xlane.f32.xlu0 %v1659
        %v1661 = vpop.xlane.xlu0 %1660
        %v1662 = vsel %vm385, %v1546, 0.0
        %1663 = vadd.xlane.f32.xlu0 %v1662
        %v1664 = vpop.xlane.xlu0 %1663
        %v1665 = vsel %vm385, %v1547, 0.0
        %1666 = vadd.xlane.f32.xlu0 %v1665
        %v1667 = vpop.xlane.xlu0 %1666
        %v1668 = vsel %vm385, %v1548, 0.0
        %1669 = vadd.xlane.f32.xlu0 %v1668
        %v1670 = vpop.xlane.xlu0 %1669
        %v1671 = vsel %vm385, %v1549, 0.0
        %1672 = vadd.xlane.f32.xlu0 %v1671
        %v1673 = vpop.xlane.xlu0 %1672
        %v1674 = vsel %vm385, %v1550, 0.0
        %1675 = vadd.xlane.f32.xlu0 %v1674
        %v1676 = vpop.xlane.xlu0 %1675
        %v1677 = vsel %vm385, %v1551, 0.0
        %1678 = vadd.xlane.f32.xlu0 %v1677
        %v1679 = vpop.xlane.xlu0 %1678
        %v1680 = vsel %vm385, %v1552, 0.0
        %1681 = vadd.xlane.f32.xlu0 %v1680
        %v1682 = vpop.xlane.xlu0 %1681
        %v1683 = vsel %vm385, %v1553, 0.0
        %1684 = vadd.xlane.f32.xlu0 %v1683
        %v1685 = vpop.xlane.xlu0 %1684
        %v1686 = vsel %vm385, %v1554, 0.0
        %1687 = vadd.xlane.f32.xlu0 %v1686
        %v1688 = vpop.xlane.xlu0 %1687
        %v1689 = vsel %vm385, %v1555, 0.0
        %1690 = vadd.xlane.f32.xlu0 %v1689
        %v1691 = vpop.xlane.xlu0 %1690
        %v1692 = vsel %vm385, %v1556, 0.0
        %1693 = vadd.xlane.f32.xlu0 %v1692
        %v1694 = vpop.xlane.xlu0 %1693
        %v1695 = vsel %vm385, %v1557, 0.0
        %1696 = vadd.xlane.f32.xlu0 %v1695
        %v1697 = vpop.xlane.xlu0 %1696
        %v1698 = vsel %vm385, %v1558, 0.0
        %1699 = vadd.xlane.f32.xlu0 %v1698
        %v1700 = vpop.xlane.xlu0 %1699
        %v1701 = vsel %vm385, %v1559, 0.0
        %1702 = vadd.xlane.f32.xlu0 %v1701
        %v1703 = vpop.xlane.xlu0 %1702
        %v1704 = vsel %vm385, %v1560, 0.0
        %1705 = vadd.xlane.f32.xlu0 %v1704
        %v1706 = vpop.xlane.xlu0 %1705
        %v1707 = vsel %vm385, %v1561, 0.0
        %1708 = vadd.xlane.f32.xlu0 %v1707
        %v1709 = vpop.xlane.xlu0 %1708
        %v1710 = vsel %vm385, %v1562, 0.0
        %1711 = vadd.xlane.f32.xlu0 %v1710
        %v1712 = vpop.xlane.xlu0 %1711
        %v1713 = vsel %vm385, %v1563, 0.0
        %1714 = vadd.xlane.f32.xlu0 %v1713
        %v1715 = vpop.xlane.xlu0 %1714
        %v1716 = vsel %vm385, %v1564, 0.0
        %1717 = vadd.xlane.f32.xlu0 %v1716
        %v1718 = vpop.xlane.xlu0 %1717
        %v1719 = vsel %vm385, %v1565, 0.0
        %1720 = vadd.xlane.f32.xlu0 %v1719
        %v1721 = vpop.xlane.xlu0 %1720
        %v1722 = vsel %vm385, %v1566, 0.0
        %1723 = vadd.xlane.f32.xlu0 %v1722
        %v1724 = vpop.xlane.xlu0 %1723
        %v1725 = vsel %vm385, %v1567, 0.0
        %1726 = vadd.xlane.f32.xlu0 %v1725
        %v1727 = vpop.xlane.xlu0 %1726
        %v1728 = vsel %vm385, %v1568, 0.0
        %1729 = vadd.xlane.f32.xlu0 %v1728
        %v1730 = vpop.xlane.xlu0 %1729
        %v1731 = vsel %vm385, %v1569, 0.0
        %1732 = vadd.xlane.f32.xlu0 %v1731
        %v1733 = vpop.xlane.xlu0 %1732
        %v1734 = vsel %vm385, %v1570, 0.0
        %1735 = vadd.xlane.f32.xlu0 %v1734
        %v1736 = vpop.xlane.xlu0 %1735
        %v1737 = vsel %vm385, %v1571, 0.0
        %1738 = vadd.xlane.f32.xlu0 %v1737
        %v1739 = vpop.xlane.xlu0 %1738
        %v1740 = vsel %vm385, %v1572, 0.0
        %1741 = vadd.xlane.f32.xlu0 %v1740
        %v1742 = vpop.xlane.xlu0 %1741
        %v1743 = vsel %vm385, %v1573, 0.0
        %1744 = vadd.xlane.f32.xlu0 %v1743
        %v1745 = vpop.xlane.xlu0 %1744
        %v1746 = vsel %vm385, %v1574, 0.0
        %1747 = vadd.xlane.f32.xlu0 %v1746
        %v1748 = vpop.xlane.xlu0 %1747
        %v1749 = vsel %vm385, %v1575, 0.0
        %1750 = vadd.xlane.f32.xlu0 %v1749
        %v1751 = vpop.xlane.xlu0 %1750
        %v1752 = vsel %vm385, %v1576, 0.0
        %1753 = vadd.xlane.f32.xlu0 %v1752
        %v1754 = vpop.xlane.xlu0 %1753
        %v1755 = vsel %vm385, %v1577, 0.0
        %1756 = vadd.xlane.f32.xlu0 %v1755
        %v1757 = vpop.xlane.xlu0 %1756
        %v1758 = vsel %vm385, %v1578, 0.0
        %1759 = vadd.xlane.f32.xlu0 %v1758
        %v1760 = vpop.xlane.xlu0 %1759
        %v1761 = vsel %vm385, %v1579, 0.0
        %1762 = vadd.xlane.f32.xlu0 %v1761
        %v1763 = vpop.xlane.xlu0 %1762
        %v1764 = vsel %vm385, %v1580, 0.0
        %1765 = vadd.xlane.f32.xlu0 %v1764
        %v1766 = vpop.xlane.xlu0 %1765
        %v1767 = vsel %vm385, %v1581, 0.0
        %1768 = vadd.xlane.f32.xlu0 %v1767
        %v1769 = vpop.xlane.xlu0 %1768
        %v1770 = vsel %vm385, %v1582, 0.0
        %1771 = vadd.xlane.f32.xlu0 %v1770
        %v1772 = vpop.xlane.xlu0 %1771
        %v1773 = vsel %vm385, %v1583, 0.0
        %1774 = vadd.xlane.f32.xlu0 %v1773
        %v1775 = vpop.xlane.xlu0 %1774
        %v1840 = vlaneseq
        %v1841 = vand.u32 %v1840, 127
        %v1842 = vlaneseq
        %v1843 = vshrl.u32 %v1842, 7
        %v1844 = vsub.s32 %v1841, %v1843
        %v1845 = vrot.slane %v1586, %v1844
        %v1846 = vlaneseq
        %v1847 = vshrl.u32 %v1846, 7
        %v1848 = vsub.s32 %v1841, %v1847
        %v1849 = vrot.slane %v1589, %v1848
        %v1850 = vlaneseq
        %v1851 = vshrl.u32 %v1850, 7
        %v1852 = vsub.s32 %v1841, %v1851
        %v1853 = vrot.slane %v1592, %v1852
        %v1854 = vlaneseq
        %v1855 = vshrl.u32 %v1854, 7
        %v1856 = vsub.s32 %v1841, %v1855
        %v1857 = vrot.slane %v1595, %v1856
        %v1858 = vlaneseq
        %v1859 = vshrl.u32 %v1858, 7
        %v1860 = vsub.s32 %v1841, %v1859
        %v1861 = vrot.slane %v1598, %v1860
        %v1862 = vlaneseq
        %v1863 = vshrl.u32 %v1862, 7
        %v1864 = vsub.s32 %v1841, %v1863
        %v1865 = vrot.slane %v1601, %v1864
        %v1866 = vlaneseq
        %v1867 = vshrl.u32 %v1866, 7
        %v1868 = vsub.s32 %v1841, %v1867
        %v1869 = vrot.slane %v1604, %v1868
        %v1870 = vlaneseq
        %v1871 = vshrl.u32 %v1870, 7
        %v1872 = vsub.s32 %v1841, %v1871
        %v1873 = vrot.slane %v1607, %v1872
        %v1874 = vlaneseq
        %v1875 = vshrl.u32 %v1874, 7
        %v1876 = vsub.s32 %v1841, %v1875
        %v1877 = vrot.slane %v1610, %v1876
        %v1878 = vlaneseq
        %v1879 = vshrl.u32 %v1878, 7
        %v1880 = vsub.s32 %v1841, %v1879
        %v1881 = vrot.slane %v1613, %v1880
        %v1882 = vlaneseq
        %v1883 = vshrl.u32 %v1882, 7
        %v1884 = vsub.s32 %v1841, %v1883
        %v1885 = vrot.slane %v1616, %v1884
        %v1886 = vlaneseq
        %v1887 = vshrl.u32 %v1886, 7
        %v1888 = vsub.s32 %v1841, %v1887
        %v1889 = vrot.slane %v1619, %v1888
        %v1890 = vlaneseq
        %v1891 = vshrl.u32 %v1890, 7
        %v1892 = vsub.s32 %v1841, %v1891
        %v1893 = vrot.slane %v1622, %v1892
        %v1894 = vlaneseq
        %v1895 = vshrl.u32 %v1894, 7
        %v1896 = vsub.s32 %v1841, %v1895
        %v1897 = vrot.slane %v1625, %v1896
        %v1898 = vlaneseq
        %v1899 = vshrl.u32 %v1898, 7
        %v1900 = vsub.s32 %v1841, %v1899
        %v1901 = vrot.slane %v1628, %v1900
        %v1902 = vlaneseq
        %v1903 = vshrl.u32 %v1902, 7
        %v1904 = vsub.s32 %v1841, %v1903
        %v1905 = vrot.slane %v1631, %v1904
        %v1906 = vlaneseq
        %v1907 = vshrl.u32 %v1906, 7
        %v1908 = vsub.s32 %v1841, %v1907
        %v1909 = vrot.slane %v1634, %v1908
        %v1910 = vlaneseq
        %v1911 = vshrl.u32 %v1910, 7
        %v1912 = vsub.s32 %v1841, %v1911
        %v1913 = vrot.slane %v1637, %v1912
        %v1914 = vlaneseq
        %v1915 = vshrl.u32 %v1914, 7
        %v1916 = vsub.s32 %v1841, %v1915
        %v1917 = vrot.slane %v1640, %v1916
        %v1918 = vlaneseq
        %v1919 = vshrl.u32 %v1918, 7
        %v1920 = vsub.s32 %v1841, %v1919
        %v1921 = vrot.slane %v1643, %v1920
        %v1922 = vlaneseq
        %v1923 = vshrl.u32 %v1922, 7
        %v1924 = vsub.s32 %v1841, %v1923
        %v1925 = vrot.slane %v1646, %v1924
        %v1926 = vlaneseq
        %v1927 = vshrl.u32 %v1926, 7
        %v1928 = vsub.s32 %v1841, %v1927
        %v1929 = vrot.slane %v1649, %v1928
        %v1930 = vlaneseq
        %v1931 = vshrl.u32 %v1930, 7
        %v1932 = vsub.s32 %v1841, %v1931
        %v1933 = vrot.slane %v1652, %v1932
        %v1934 = vlaneseq
        %v1935 = vshrl.u32 %v1934, 7
        %v1936 = vsub.s32 %v1841, %v1935
        %v1937 = vrot.slane %v1655, %v1936
        %v1938 = vlaneseq
        %v1939 = vshrl.u32 %v1938, 7
        %v1940 = vsub.s32 %v1841, %v1939
        %v1941 = vrot.slane %v1658, %v1940
        %v1942 = vlaneseq
        %v1943 = vshrl.u32 %v1942, 7
        %v1944 = vsub.s32 %v1841, %v1943
        %v1945 = vrot.slane %v1661, %v1944
        %v1946 = vlaneseq
        %v1947 = vshrl.u32 %v1946, 7
        %v1948 = vsub.s32 %v1841, %v1947
        %v1949 = vrot.slane %v1664, %v1948
        %v1950 = vlaneseq
        %v1951 = vshrl.u32 %v1950, 7
        %v1952 = vsub.s32 %v1841, %v1951
        %v1953 = vrot.slane %v1667, %v1952
        %v1954 = vlaneseq
        %v1955 = vshrl.u32 %v1954, 7
        %v1956 = vsub.s32 %v1841, %v1955
        %v1957 = vrot.slane %v1670, %v1956
        %v1958 = vlaneseq
        %v1959 = vshrl.u32 %v1958, 7
        %v1960 = vsub.s32 %v1841, %v1959
        %v1961 = vrot.slane %v1673, %v1960
        %v1962 = vlaneseq
        %v1963 = vshrl.u32 %v1962, 7
        %v1964 = vsub.s32 %v1841, %v1963
        %v1965 = vrot.slane %v1676, %v1964
        %v1966 = vlaneseq
        %v1967 = vshrl.u32 %v1966, 7
        %v1968 = vsub.s32 %v1841, %v1967
        %v1969 = vrot.slane %v1679, %v1968
        %v1970 = vlaneseq
        %v1971 = vshrl.u32 %v1970, 7
        %v1972 = vsub.s32 %v1841, %v1971
        %v1973 = vrot.slane %v1682, %v1972
        %v1974 = vlaneseq
        %v1975 = vshrl.u32 %v1974, 7
        %v1976 = vsub.s32 %v1841, %v1975
        %v1977 = vrot.slane %v1685, %v1976
        %v1978 = vlaneseq
        %v1979 = vshrl.u32 %v1978, 7
        %v1980 = vsub.s32 %v1841, %v1979
        %v1981 = vrot.slane %v1688, %v1980
        %v1982 = vlaneseq
        %v1983 = vshrl.u32 %v1982, 7
        %v1984 = vsub.s32 %v1841, %v1983
        %v1985 = vrot.slane %v1691, %v1984
        %v1986 = vlaneseq
        %v1987 = vshrl.u32 %v1986, 7
        %v1988 = vsub.s32 %v1841, %v1987
        %v1989 = vrot.slane %v1694, %v1988
        %v1990 = vlaneseq
        %v1991 = vshrl.u32 %v1990, 7
        %v1992 = vsub.s32 %v1841, %v1991
        %v1993 = vrot.slane %v1697, %v1992
        %v1994 = vlaneseq
        %v1995 = vshrl.u32 %v1994, 7
        %v1996 = vsub.s32 %v1841, %v1995
        %v1997 = vrot.slane %v1700, %v1996
        %v1998 = vlaneseq
        %v1999 = vshrl.u32 %v1998, 7
        %v2000 = vsub.s32 %v1841, %v1999
        %v2001 = vrot.slane %v1703, %v2000
        %v2002 = vlaneseq
        %v2003 = vshrl.u32 %v2002, 7
        %v2004 = vsub.s32 %v1841, %v2003
        %v2005 = vrot.slane %v1706, %v2004
        %v2006 = vlaneseq
        %v2007 = vshrl.u32 %v2006, 7
        %v2008 = vsub.s32 %v1841, %v2007
        %v2009 = vrot.slane %v1709, %v2008
        %v2010 = vlaneseq
        %v2011 = vshrl.u32 %v2010, 7
        %v2012 = vsub.s32 %v1841, %v2011
        %v2013 = vrot.slane %v1712, %v2012
        %v2014 = vlaneseq
        %v2015 = vshrl.u32 %v2014, 7
        %v2016 = vsub.s32 %v1841, %v2015
        %v2017 = vrot.slane %v1715, %v2016
        %v2018 = vlaneseq
        %v2019 = vshrl.u32 %v2018, 7
        %v2020 = vsub.s32 %v1841, %v2019
        %v2021 = vrot.slane %v1718, %v2020
        %v2022 = vlaneseq
        %v2023 = vshrl.u32 %v2022, 7
        %v2024 = vsub.s32 %v1841, %v2023
        %v2025 = vrot.slane %v1721, %v2024
        %v2026 = vlaneseq
        %v2027 = vshrl.u32 %v2026, 7
        %v2028 = vsub.s32 %v1841, %v2027
        %v2029 = vrot.slane %v1724, %v2028
        %v2030 = vlaneseq
        %v2031 = vshrl.u32 %v2030, 7
        %v2032 = vsub.s32 %v1841, %v2031
        %v2033 = vrot.slane %v1727, %v2032
        %v2034 = vlaneseq
        %v2035 = vshrl.u32 %v2034, 7
        %v2036 = vsub.s32 %v1841, %v2035
        %v2037 = vrot.slane %v1730, %v2036
        %v2038 = vlaneseq
        %v2039 = vshrl.u32 %v2038, 7
        %v2040 = vsub.s32 %v1841, %v2039
        %v2041 = vrot.slane %v1733, %v2040
        %v2042 = vlaneseq
        %v2043 = vshrl.u32 %v2042, 7
        %v2044 = vsub.s32 %v1841, %v2043
        %v2045 = vrot.slane %v1736, %v2044
        %v2046 = vlaneseq
        %v2047 = vshrl.u32 %v2046, 7
        %v2048 = vsub.s32 %v1841, %v2047
        %v2049 = vrot.slane %v1739, %v2048
        %v2050 = vlaneseq
        %v2051 = vshrl.u32 %v2050, 7
        %v2052 = vsub.s32 %v1841, %v2051
        %v2053 = vrot.slane %v1742, %v2052
        %v2054 = vlaneseq
        %v2055 = vshrl.u32 %v2054, 7
        %v2056 = vsub.s32 %v1841, %v2055
        %v2057 = vrot.slane %v1745, %v2056
        %v2058 = vlaneseq
        %v2059 = vshrl.u32 %v2058, 7
        %v2060 = vsub.s32 %v1841, %v2059
        %v2061 = vrot.slane %v1748, %v2060
        %v2062 = vlaneseq
        %v2063 = vshrl.u32 %v2062, 7
        %v2064 = vsub.s32 %v1841, %v2063
        %v2065 = vrot.slane %v1751, %v2064
        %v2066 = vlaneseq
        %v2067 = vshrl.u32 %v2066, 7
        %v2068 = vsub.s32 %v1841, %v2067
        %v2069 = vrot.slane %v1754, %v2068
        %v2070 = vlaneseq
        %v2071 = vshrl.u32 %v2070, 7
        %v2072 = vsub.s32 %v1841, %v2071
        %v2073 = vrot.slane %v1757, %v2072
        %v2074 = vlaneseq
        %v2075 = vshrl.u32 %v2074, 7
        %v2076 = vsub.s32 %v1841, %v2075
        %v2077 = vrot.slane %v1760, %v2076
        %v2078 = vlaneseq
        %v2079 = vshrl.u32 %v2078, 7
        %v2080 = vsub.s32 %v1841, %v2079
        %v2081 = vrot.slane %v1763, %v2080
        %v2082 = vlaneseq
        %v2083 = vshrl.u32 %v2082, 7
        %v2084 = vsub.s32 %v1841, %v2083
        %v2085 = vrot.slane %v1766, %v2084
        %v2086 = vlaneseq
        %v2087 = vshrl.u32 %v2086, 7
        %v2088 = vsub.s32 %v1841, %v2087
        %v2089 = vrot.slane %v1769, %v2088
        %v2090 = vlaneseq
        %v2091 = vshrl.u32 %v2090, 7
        %v2092 = vsub.s32 %v1841, %v2091
        %v2093 = vrot.slane %v1772, %v2092
        %v2094 = vlaneseq
        %v2095 = vshrl.u32 %v2094, 7
        %v2096 = vsub.s32 %v1841, %v2095
        %v2097 = vrot.slane %v1775, %v2096
        %vm2098 = vcmask 1041409
        %v2099 = vsel %vm2098, %v1849, %v1845
        %vm2100 = vcmask 1042434
        %v2101 = vsel %vm2100, %v1853, %v2099
        %vm2102 = vcmask 1043459
        %v2103 = vsel %vm2102, %v1857, %v2101
        %vm2104 = vcmask 1044484
        %v2105 = vsel %vm2104, %v1861, %v2103
        %vm2106 = vcmask 1045509
        %v2107 = vsel %vm2106, %v1865, %v2105
        %vm2108 = vcmask 1046534
        %v2109 = vsel %vm2108, %v1869, %v2107
        %vm2110 = vcmask 1047559
        %v2111 = vsel %vm2110, %v1873, %v2109
        %v2112 = vsel %vm2098, %v1881, %v1877
        %v2113 = vsel %vm2100, %v1885, %v2112
        %v2114 = vsel %vm2102, %v1889, %v2113
        %v2115 = vsel %vm2104, %v1893, %v2114
        %v2116 = vsel %vm2106, %v1897, %v2115
        %v2117 = vsel %vm2108, %v1901, %v2116
        %v2118 = vsel %vm2110, %v1905, %v2117
        %v2119 = vsel %vm2098, %v1913, %v1909
        %v2120 = vsel %vm2100, %v1917, %v2119
        %v2121 = vsel %vm2102, %v1921, %v2120
        %v2122 = vsel %vm2104, %v1925, %v2121
        %v2123 = vsel %vm2106, %v1929, %v2122
        %v2124 = vsel %vm2108, %v1933, %v2123
        %v2125 = vsel %vm2110, %v1937, %v2124
        %v2126 = vsel %vm2098, %v1945, %v1941
        %v2127 = vsel %vm2100, %v1949, %v2126
        %v2128 = vsel %vm2102, %v1953, %v2127
        %v2129 = vsel %vm2104, %v1957, %v2128
        %v2130 = vsel %vm2106, %v1961, %v2129
        %v2131 = vsel %vm2108, %v1965, %v2130
        %v2132 = vsel %vm2110, %v1969, %v2131
        %v2133 = vsel %vm2098, %v1977, %v1973
        %v2134 = vsel %vm2100, %v1981, %v2133
        %v2135 = vsel %vm2102, %v1985, %v2134
        %v2136 = vsel %vm2104, %v1989, %v2135
        %v2137 = vsel %vm2106, %v1993, %v2136
        %v2138 = vsel %vm2108, %v1997, %v2137
        %v2139 = vsel %vm2110, %v2001, %v2138
        %v2140 = vsel %vm2098, %v2009, %v2005
        %v2141 = vsel %vm2100, %v2013, %v2140
        %v2142 = vsel %vm2102, %v2017, %v2141
        %v2143 = vsel %vm2104, %v2021, %v2142
        %v2144 = vsel %vm2106, %v2025, %v2143
        %v2145 = vsel %vm2108, %v2029, %v2144
        %v2146 = vsel %vm2110, %v2033, %v2145
        %v2147 = vsel %vm2098, %v2041, %v2037
        %v2148 = vsel %vm2100, %v2045, %v2147
        %v2149 = vsel %vm2102, %v2049, %v2148
        %v2150 = vsel %vm2104, %v2053, %v2149
        %v2151 = vsel %vm2106, %v2057, %v2150
        %v2152 = vsel %vm2108, %v2061, %v2151
        %v2153 = vsel %vm2110, %v2065, %v2152
        %v2154 = vsel %vm2098, %v2073, %v2069
        %v2155 = vsel %vm2100, %v2077, %v2154
        %v2156 = vsel %vm2102, %v2081, %v2155
        %v2157 = vsel %vm2104, %v2085, %v2156
        %v2158 = vsel %vm2106, %v2089, %v2157
        %v2159 = vsel %vm2108, %v2093, %v2158
        %v2160 = vsel %vm2110, %v2097, %v2159
        %vm2169 = vcmask 64512
        %2170 = vst.msk [vmem:[#allocation2] sm:$0xff] %vm2169, %v2111
        %2171 = vst.msk [vmem:[#allocation2 + $0x8] sm:$0xff] %vm2169, %v2118
        %2172 = vst.msk [vmem:[#allocation2 + $0x10] sm:$0xff] %vm2169, %v2125
        %2173 = vst.msk [vmem:[#allocation2 + $0x18] sm:$0xff] %vm2169, %v2132
        %2174 = vst.msk [vmem:[#allocation2 + $0x20] sm:$0xff] %vm2169, %v2139
        %2175 = vst.msk [vmem:[#allocation2 + $0x28] sm:$0xff] %vm2169, %v2146
        %2176 = vst.msk [vmem:[#allocation2 + $0x30] sm:$0xff] %vm2169, %v2153
        %2177 = vst.msk [vmem:[#allocation2 + $0x38] sm:$0xff] %vm2169, %v2160
        %s2178 = scalar_lea.vmem %s369, 64
        %v2179 = vld [vmem:[%s2178] sm:$0xff]
        %v2180 = vld [vmem:[%s2178 + $0x8] sm:$0xff]
        %v2181 = vld [vmem:[%s2178 + $0x10] sm:$0xff]
        %v2182 = vld [vmem:[%s2178 + $0x18] sm:$0xff]
        %v2183 = vld [vmem:[%s2178 + $0x20] sm:$0xff]
        %v2184 = vld [vmem:[%s2178 + $0x28] sm:$0xff]
        %v2185 = vld [vmem:[%s2178 + $0x30] sm:$0xff]
        %v2186 = vld [vmem:[%s2178 + $0x38] sm:$0xff]
        %v2188 = vsel %vm385, %v2179, 0
        %v2191 = vsel %vm385, %v2180, 0
        %v2194 = vsel %vm385, %v2181, 0
        %v2197 = vsel %vm385, %v2182, 0
        %v2200 = vsel %vm385, %v2183, 0
        %v2203 = vsel %vm385, %v2184, 0
        %v2206 = vsel %vm385, %v2185, 0
        %v2209 = vsel %vm385, %v2186, 0
        %2211 = vmatprep.subr.mxu0 0.0
        %2212 = vmatpush1.msra.mxu0 %v378
        %2213 = vmatprep.subr.mxu0 0.0
        %2214 = vmatpush1.msra.mxu0 %v379
        %2215 = vmatprep.subr.mxu0 0.0
        %2216 = vmatpush1.msra.mxu0 %v380
        %2217 = vmatprep.subr.mxu0 0.0
        %2218 = vmatpush1.msra.mxu0 %v381
        %2219 = vmatprep.subr.mxu0 0.0
        %2220 = vmatpush1.msra.mxu0 0.0
        %2221 = vmatprep.subr.mxu0 0.0
        %2222 = vmatpush1.msra.mxu0 0.0
        %2223 = vmatprep.subr.mxu0 0.0
        %2224 = vmatpush1.msra.mxu0 0.0
        %2225 = vmatprep.subr.mxu0 0.0
        %2226 = vmatpush1.msra.mxu0 0.0
        %2227 = vmatprep.subr.mxu0 0.0
        %2228 = vmatpush1.msra.mxu0 0.0
        %2229 = vmatprep.subr.mxu0 0.0
        %2230 = vmatpush1.msra.mxu0 0.0
        %2231 = vmatprep.subr.mxu0 0.0
        %2232 = vmatpush1.msra.mxu0 0.0
        %2233 = vmatprep.subr.mxu0 0.0
        %2234 = vmatpush1.msra.mxu0 0.0
        %2235 = vmatprep.subr.mxu0 0.0
        %2236 = vmatpush1.msra.mxu0 0.0
        %2237 = vmatprep.subr.mxu0 0.0
        %2238 = vmatpush1.msra.mxu0 0.0
        %2239 = vmatprep.subr.mxu0 0.0
        %2240 = vmatpush1.msra.mxu0 0.0
        %2241 = vmatprep.subr.mxu0 0.0
        %2242 = vmatpush1.msra.mxu0 0.0
        %2243 = vmatprep.subr.mxu0 0.0
        %2244 = vmatpush1.msra.mxu0 0.0
        %2245 = vmatprep.subr.mxu0 0.0
        %2246 = vmatpush1.msra.mxu0 0.0
        %2247 = vmatprep.subr.mxu0 0.0
        %2248 = vmatpush1.msra.mxu0 0.0
        %2249 = vmatprep.subr.mxu0 0.0
        %2250 = vmatpush1.msra.mxu0 0.0
        %2251 = vmatprep.subr.mxu0 0.0
        %2252 = vmatpush1.msra.mxu0 0.0
        %2253 = vmatprep.subr.mxu0 0.0
        %2254 = vmatpush1.msra.mxu0 0.0
        %2255 = vmatprep.subr.mxu0 0.0
        %2256 = vmatpush1.msra.mxu0 0.0
        %2257 = vmatprep.subr.mxu0 0.0
        %2258 = vmatpush1.msra.mxu0 0.0
        %2259 = vmatprep.subr.mxu0 0.0
        %2260 = vmatpush1.msra.mxu0 0.0
        %2261 = vmatprep.subr.mxu0 0.0
        %2262 = vmatpush1.msra.mxu0 0.0
        %2263 = vmatprep.subr.mxu0 0.0
        %2264 = vmatpush1.msra.mxu0 0.0
        %2265 = vmatprep.subr.mxu0 0.0
        %2266 = vmatpush1.msra.mxu0 0.0
        %2267 = vmatprep.subr.mxu0 0.0
        %2268 = vmatpush1.msra.mxu0 0.0
        %2269 = vmatprep.subr.mxu0 0.0
        %2270 = vmatpush1.msra.mxu0 0.0
        %2271 = vmatprep.subr.mxu0 0.0
        %2272 = vmatpush1.msra.mxu0 0.0
        %2273 = vmatprep.subr.mxu0 0.0
        %2274 = vmatpush1.msra.mxu0 0.0
        %2275 = vmatprep.mubr.f32.mxu0 0.0
        %2276 = vmatmul.mubr.f32.gmra.mrb[0].mxu0 %v2188
        %v2277 = vpop.f32.mrb[0].mxu0
        %v2278 = vadd.f32 %v471, %v2277
        %v2279 = vpop.f32.mrb[0].mxu0
        %2280 = vmatprep.mubr.f32.mxu0 0.0
        %2281 = vmatmul.mubr.f32.gmra.mrb[0].mxu0 %v2191
        %v2282 = vpop.f32.mrb[0].mxu0
        %v2283 = vadd.f32 %v471, %v2282
        %v2284 = vpop.f32.mrb[0].mxu0
        %2285 = vmatprep.mubr.f32.mxu0 0.0
        %2286 = vmatmul.mubr.f32.gmra.mrb[0].mxu0 %v2194
        %v2287 = vpop.f32.mrb[0].mxu0
        %v2288 = vadd.f32 %v471, %v2287
        %v2289 = vpop.f32.mrb[0].mxu0
        %2290 = vmatprep.mubr.f32.mxu0 0.0
        %2291 = vmatmul.mubr.f32.gmra.mrb[0].mxu0 %v2197
        %v2292 = vpop.f32.mrb[0].mxu0
        %v2293 = vadd.f32 %v471, %v2292
        %v2294 = vpop.f32.mrb[0].mxu0
        %2295 = vmatprep.mubr.f32.mxu0 0.0
        %2296 = vmatmul.mubr.f32.gmra.mrb[0].mxu0 %v2200
        %v2297 = vpop.f32.mrb[0].mxu0
        %v2298 = vadd.f32 %v471, %v2297
        %v2299 = vpop.f32.mrb[0].mxu0
        %2300 = vmatprep.mubr.f32.mxu0 0.0
        %2301 = vmatmul.mubr.f32.gmra.mrb[0].mxu0 %v2203
        %v2302 = vpop.f32.mrb[0].mxu0
        %v2303 = vadd.f32 %v471, %v2302
        %v2304 = vpop.f32.mrb[0].mxu0
        %2305 = vmatprep.mubr.f32.mxu0 0.0
        %2306 = vmatmul.mubr.f32.gmra.mrb[0].mxu0 %v2206
        %v2307 = vpop.f32.mrb[0].mxu0
        %v2308 = vadd.f32 %v471, %v2307
        %v2309 = vpop.f32.mrb[0].mxu0
        %2310 = vmatprep.mubr.f32.mxu0 0.0
        %2311 = vmatmul.mubr.f32.gmra.mrb[0].mxu0 %v2209
        %v2312 = vpop.f32.mrb[0].mxu0
        %v2313 = vadd.f32 %v471, %v2312
        %v2314 = vpop.f32.mrb[0].mxu0
        %2315 = vdwg.mxu0
        %v2324 = vcombine.high %v2278, %v2278
        %v2326 = vunpack.c.l.s4 1966171168
        %v2327 = vunpack.c.0.s8 %v2326
        %v2328 = vlaneseq
        %v2329 = vshrl.u32 %v2328, 7
        %v2330 = vsub.s32 %v2327, %v2329
        %v2331 = vrot.slane %v2278, %v2330
        %v2333 = vunpack.c.l.s4 1966171168
        %v2334 = vunpack.c.0.s8 %v2333
        %v2335 = vlaneseq
        %v2336 = vshrl.u32 %v2335, 7
        %v2337 = vsub.s32 %v2334, %v2336
        %v2338 = vrot.slane %v2324, %v2337
        %v2339 = vcombine.high %v2331, %v2331
        %v2340 = vcombine.high %v2338, %v2338
        %v2342 = vunpack.c.l.s4 1966171168
        %v2343 = vunpack.c.0.s8 %v2342
        %v2344 = vlaneseq
        %v2345 = vshrl.u32 %v2344, 7
        %v2346 = vsub.s32 %v2343, %v2345
        %v2347 = vrot.slane %v2331, %v2346
        %v2349 = vunpack.c.l.s4 1966171168
        %v2350 = vunpack.c.0.s8 %v2349
        %v2351 = vlaneseq
        %v2352 = vshrl.u32 %v2351, 7
        %v2353 = vsub.s32 %v2350, %v2352
        %v2354 = vrot.slane %v2338, %v2353
        %v2356 = vunpack.c.l.s4 1966171168
        %v2357 = vunpack.c.0.s8 %v2356
        %v2358 = vlaneseq
        %v2359 = vshrl.u32 %v2358, 7
        %v2360 = vsub.s32 %v2357, %v2359
        %v2361 = vrot.slane %v2339, %v2360
        %v2363 = vunpack.c.l.s4 1966171168
        %v2364 = vunpack.c.0.s8 %v2363
        %v2365 = vlaneseq
        %v2366 = vshrl.u32 %v2365, 7
        %v2367 = vsub.s32 %v2364, %v2366
        %v2368 = vrot.slane %v2340, %v2367
        %v2369 = vcombine.high %v2347, %v2347
        %v2370 = vcombine.high %v2354, %v2354
        %v2371 = vcombine.high %v2361, %v2361
        %v2372 = vcombine.high %v2368, %v2368
        %v2373 = vcombine.high %v2283, %v2283
        %v2375 = vunpack.c.l.s4 1966171168
        %v2376 = vunpack.c.0.s8 %v2375
        %v2377 = vlaneseq
        %v2378 = vshrl.u32 %v2377, 7
        %v2379 = vsub.s32 %v2376, %v2378
        %v2380 = vrot.slane %v2283, %v2379
        %v2382 = vunpack.c.l.s4 1966171168
        %v2383 = vunpack.c.0.s8 %v2382
        %v2384 = vlaneseq
        %v2385 = vshrl.u32 %v2384, 7
        %v2386 = vsub.s32 %v2383, %v2385
        %v2387 = vrot.slane %v2373, %v2386
        %v2388 = vcombine.high %v2380, %v2380
        %v2389 = vcombine.high %v2387, %v2387
        %v2391 = vunpack.c.l.s4 1966171168
        %v2392 = vunpack.c.0.s8 %v2391
        %v2393 = vlaneseq
        %v2394 = vshrl.u32 %v2393, 7
        %v2395 = vsub.s32 %v2392, %v2394
        %v2396 = vrot.slane %v2380, %v2395
        %v2398 = vunpack.c.l.s4 1966171168
        %v2399 = vunpack.c.0.s8 %v2398
        %v2400 = vlaneseq
        %v2401 = vshrl.u32 %v2400, 7
        %v2402 = vsub.s32 %v2399, %v2401
        %v2403 = vrot.slane %v2387, %v2402
        %v2405 = vunpack.c.l.s4 1966171168
        %v2406 = vunpack.c.0.s8 %v2405
        %v2407 = vlaneseq
        %v2408 = vshrl.u32 %v2407, 7
        %v2409 = vsub.s32 %v2406, %v2408
        %v2410 = vrot.slane %v2388, %v2409
        %v2412 = vunpack.c.l.s4 1966171168
        %v2413 = vunpack.c.0.s8 %v2412
        %v2414 = vlaneseq
        %v2415 = vshrl.u32 %v2414, 7
        %v2416 = vsub.s32 %v2413, %v2415
        %v2417 = vrot.slane %v2389, %v2416
        %v2418 = vcombine.high %v2396, %v2396
        %v2419 = vcombine.high %v2403, %v2403
        %v2420 = vcombine.high %v2410, %v2410
        %v2421 = vcombine.high %v2417, %v2417
        %v2422 = vcombine.high %v2288, %v2288
        %v2424 = vunpack.c.l.s4 1966171168
        %v2425 = vunpack.c.0.s8 %v2424
        %v2426 = vlaneseq
        %v2427 = vshrl.u32 %v2426, 7
        %v2428 = vsub.s32 %v2425, %v2427
        %v2429 = vrot.slane %v2288, %v2428
        %v2431 = vunpack.c.l.s4 1966171168
        %v2432 = vunpack.c.0.s8 %v2431
        %v2433 = vlaneseq
        %v2434 = vshrl.u32 %v2433, 7
        %v2435 = vsub.s32 %v2432, %v2434
        %v2436 = vrot.slane %v2422, %v2435
        %v2437 = vcombine.high %v2429, %v2429
        %v2438 = vcombine.high %v2436, %v2436
        %v2440 = vunpack.c.l.s4 1966171168
        %v2441 = vunpack.c.0.s8 %v2440
        %v2442 = vlaneseq
        %v2443 = vshrl.u32 %v2442, 7
        %v2444 = vsub.s32 %v2441, %v2443
        %v2445 = vrot.slane %v2429, %v2444
        %v2447 = vunpack.c.l.s4 1966171168
        %v2448 = vunpack.c.0.s8 %v2447
        %v2449 = vlaneseq
        %v2450 = vshrl.u32 %v2449, 7
        %v2451 = vsub.s32 %v2448, %v2450
        %v2452 = vrot.slane %v2436, %v2451
        %v2454 = vunpack.c.l.s4 1966171168
        %v2455 = vunpack.c.0.s8 %v2454
        %v2456 = vlaneseq
        %v2457 = vshrl.u32 %v2456, 7
        %v2458 = vsub.s32 %v2455, %v2457
        %v2459 = vrot.slane %v2437, %v2458
        %v2461 = vunpack.c.l.s4 1966171168
        %v2462 = vunpack.c.0.s8 %v2461
        %v2463 = vlaneseq
        %v2464 = vshrl.u32 %v2463, 7
        %v2465 = vsub.s32 %v2462, %v2464
        %v2466 = vrot.slane %v2438, %v2465
        %v2467 = vcombine.high %v2445, %v2445
        %v2468 = vcombine.high %v2452, %v2452
        %v2469 = vcombine.high %v2459, %v2459
        %v2470 = vcombine.high %v2466, %v2466
        %v2471 = vcombine.high %v2293, %v2293
        %v2473 = vunpack.c.l.s4 1966171168
        %v2474 = vunpack.c.0.s8 %v2473
        %v2475 = vlaneseq
        %v2476 = vshrl.u32 %v2475, 7
        %v2477 = vsub.s32 %v2474, %v2476
        %v2478 = vrot.slane %v2293, %v2477
        %v2480 = vunpack.c.l.s4 1966171168
        %v2481 = vunpack.c.0.s8 %v2480
        %v2482 = vlaneseq
        %v2483 = vshrl.u32 %v2482, 7
        %v2484 = vsub.s32 %v2481, %v2483
        %v2485 = vrot.slane %v2471, %v2484
        %v2486 = vcombine.high %v2478, %v2478
        %v2487 = vcombine.high %v2485, %v2485
        %v2489 = vunpack.c.l.s4 1966171168
        %v2490 = vunpack.c.0.s8 %v2489
        %v2491 = vlaneseq
        %v2492 = vshrl.u32 %v2491, 7
        %v2493 = vsub.s32 %v2490, %v2492
        %v2494 = vrot.slane %v2478, %v2493
        %v2496 = vunpack.c.l.s4 1966171168
        %v2497 = vunpack.c.0.s8 %v2496
        %v2498 = vlaneseq
        %v2499 = vshrl.u32 %v2498, 7
        %v2500 = vsub.s32 %v2497, %v2499
        %v2501 = vrot.slane %v2485, %v2500
        %v2503 = vunpack.c.l.s4 1966171168
        %v2504 = vunpack.c.0.s8 %v2503
        %v2505 = vlaneseq
        %v2506 = vshrl.u32 %v2505, 7
        %v2507 = vsub.s32 %v2504, %v2506
        %v2508 = vrot.slane %v2486, %v2507
        %v2510 = vunpack.c.l.s4 1966171168
        %v2511 = vunpack.c.0.s8 %v2510
        %v2512 = vlaneseq
        %v2513 = vshrl.u32 %v2512, 7
        %v2514 = vsub.s32 %v2511, %v2513
        %v2515 = vrot.slane %v2487, %v2514
        %v2516 = vcombine.high %v2494, %v2494
        %v2517 = vcombine.high %v2501, %v2501
        %v2518 = vcombine.high %v2508, %v2508
        %v2519 = vcombine.high %v2515, %v2515
        %v2520 = vcombine.high %v2298, %v2298
        %v2522 = vunpack.c.l.s4 1966171168
        %v2523 = vunpack.c.0.s8 %v2522
        %v2524 = vlaneseq
        %v2525 = vshrl.u32 %v2524, 7
        %v2526 = vsub.s32 %v2523, %v2525
        %v2527 = vrot.slane %v2298, %v2526
        %v2529 = vunpack.c.l.s4 1966171168
        %v2530 = vunpack.c.0.s8 %v2529
        %v2531 = vlaneseq
        %v2532 = vshrl.u32 %v2531, 7
        %v2533 = vsub.s32 %v2530, %v2532
        %v2534 = vrot.slane %v2520, %v2533
        %v2535 = vcombine.high %v2527, %v2527
        %v2536 = vcombine.high %v2534, %v2534
        %v2538 = vunpack.c.l.s4 1966171168
        %v2539 = vunpack.c.0.s8 %v2538
        %v2540 = vlaneseq
        %v2541 = vshrl.u32 %v2540, 7
        %v2542 = vsub.s32 %v2539, %v2541
        %v2543 = vrot.slane %v2527, %v2542
        %v2545 = vunpack.c.l.s4 1966171168
        %v2546 = vunpack.c.0.s8 %v2545
        %v2547 = vlaneseq
        %v2548 = vshrl.u32 %v2547, 7
        %v2549 = vsub.s32 %v2546, %v2548
        %v2550 = vrot.slane %v2534, %v2549
        %v2552 = vunpack.c.l.s4 1966171168
        %v2553 = vunpack.c.0.s8 %v2552
        %v2554 = vlaneseq
        %v2555 = vshrl.u32 %v2554, 7
        %v2556 = vsub.s32 %v2553, %v2555
        %v2557 = vrot.slane %v2535, %v2556
        %v2559 = vunpack.c.l.s4 1966171168
        %v2560 = vunpack.c.0.s8 %v2559
        %v2561 = vlaneseq
        %v2562 = vshrl.u32 %v2561, 7
        %v2563 = vsub.s32 %v2560, %v2562
        %v2564 = vrot.slane %v2536, %v2563
        %v2565 = vcombine.high %v2543, %v2543
        %v2566 = vcombine.high %v2550, %v2550
        %v2567 = vcombine.high %v2557, %v2557
        %v2568 = vcombine.high %v2564, %v2564
        %v2569 = vcombine.high %v2303, %v2303
        %v2571 = vunpack.c.l.s4 1966171168
        %v2572 = vunpack.c.0.s8 %v2571
        %v2573 = vlaneseq
        %v2574 = vshrl.u32 %v2573, 7
        %v2575 = vsub.s32 %v2572, %v2574
        %v2576 = vrot.slane %v2303, %v2575
        %v2578 = vunpack.c.l.s4 1966171168
        %v2579 = vunpack.c.0.s8 %v2578
        %v2580 = vlaneseq
        %v2581 = vshrl.u32 %v2580, 7
        %v2582 = vsub.s32 %v2579, %v2581
        %v2583 = vrot.slane %v2569, %v2582
        %v2584 = vcombine.high %v2576, %v2576
        %v2585 = vcombine.high %v2583, %v2583
        %v2587 = vunpack.c.l.s4 1966171168
        %v2588 = vunpack.c.0.s8 %v2587
        %v2589 = vlaneseq
        %v2590 = vshrl.u32 %v2589, 7
        %v2591 = vsub.s32 %v2588, %v2590
        %v2592 = vrot.slane %v2576, %v2591
        %v2594 = vunpack.c.l.s4 1966171168
        %v2595 = vunpack.c.0.s8 %v2594
        %v2596 = vlaneseq
        %v2597 = vshrl.u32 %v2596, 7
        %v2598 = vsub.s32 %v2595, %v2597
        %v2599 = vrot.slane %v2583, %v2598
        %v2601 = vunpack.c.l.s4 1966171168
        %v2602 = vunpack.c.0.s8 %v2601
        %v2603 = vlaneseq
        %v2604 = vshrl.u32 %v2603, 7
        %v2605 = vsub.s32 %v2602, %v2604
        %v2606 = vrot.slane %v2584, %v2605
        %v2608 = vunpack.c.l.s4 1966171168
        %v2609 = vunpack.c.0.s8 %v2608
        %v2610 = vlaneseq
        %v2611 = vshrl.u32 %v2610, 7
        %v2612 = vsub.s32 %v2609, %v2611
        %v2613 = vrot.slane %v2585, %v2612
        %v2614 = vcombine.high %v2592, %v2592
        %v2615 = vcombine.high %v2599, %v2599
        %v2616 = vcombine.high %v2606, %v2606
        %v2617 = vcombine.high %v2613, %v2613
        %v2618 = vcombine.high %v2308, %v2308
        %v2620 = vunpack.c.l.s4 1966171168
        %v2621 = vunpack.c.0.s8 %v2620
        %v2622 = vlaneseq
        %v2623 = vshrl.u32 %v2622, 7
        %v2624 = vsub.s32 %v2621, %v2623
        %v2625 = vrot.slane %v2308, %v2624
        %v2627 = vunpack.c.l.s4 1966171168
        %v2628 = vunpack.c.0.s8 %v2627
        %v2629 = vlaneseq
        %v2630 = vshrl.u32 %v2629, 7
        %v2631 = vsub.s32 %v2628, %v2630
        %v2632 = vrot.slane %v2618, %v2631
        %v2633 = vcombine.high %v2625, %v2625
        %v2634 = vcombine.high %v2632, %v2632
        %v2636 = vunpack.c.l.s4 1966171168
        %v2637 = vunpack.c.0.s8 %v2636
        %v2638 = vlaneseq
        %v2639 = vshrl.u32 %v2638, 7
        %v2640 = vsub.s32 %v2637, %v2639
        %v2641 = vrot.slane %v2625, %v2640
        %v2643 = vunpack.c.l.s4 1966171168
        %v2644 = vunpack.c.0.s8 %v2643
        %v2645 = vlaneseq
        %v2646 = vshrl.u32 %v2645, 7
        %v2647 = vsub.s32 %v2644, %v2646
        %v2648 = vrot.slane %v2632, %v2647
        %v2650 = vunpack.c.l.s4 1966171168
        %v2651 = vunpack.c.0.s8 %v2650
        %v2652 = vlaneseq
        %v2653 = vshrl.u32 %v2652, 7
        %v2654 = vsub.s32 %v2651, %v2653
        %v2655 = vrot.slane %v2633, %v2654
        %v2657 = vunpack.c.l.s4 1966171168
        %v2658 = vunpack.c.0.s8 %v2657
        %v2659 = vlaneseq
        %v2660 = vshrl.u32 %v2659, 7
        %v2661 = vsub.s32 %v2658, %v2660
        %v2662 = vrot.slane %v2634, %v2661
        %v2663 = vcombine.high %v2641, %v2641
        %v2664 = vcombine.high %v2648, %v2648
        %v2665 = vcombine.high %v2655, %v2655
        %v2666 = vcombine.high %v2662, %v2662
        %v2667 = vcombine.high %v2313, %v2313
        %v2669 = vunpack.c.l.s4 1966171168
        %v2670 = vunpack.c.0.s8 %v2669
        %v2671 = vlaneseq
        %v2672 = vshrl.u32 %v2671, 7
        %v2673 = vsub.s32 %v2670, %v2672
        %v2674 = vrot.slane %v2313, %v2673
        %v2676 = vunpack.c.l.s4 1966171168
        %v2677 = vunpack.c.0.s8 %v2676
        %v2678 = vlaneseq
        %v2679 = vshrl.u32 %v2678, 7
        %v2680 = vsub.s32 %v2677, %v2679
        %v2681 = vrot.slane %v2667, %v2680
        %v2682 = vcombine.high %v2674, %v2674
        %v2683 = vcombine.high %v2681, %v2681
        %v2685 = vunpack.c.l.s4 1966171168
        %v2686 = vunpack.c.0.s8 %v2685
        %v2687 = vlaneseq
        %v2688 = vshrl.u32 %v2687, 7
        %v2689 = vsub.s32 %v2686, %v2688
        %v2690 = vrot.slane %v2674, %v2689
        %v2692 = vunpack.c.l.s4 1966171168
        %v2693 = vunpack.c.0.s8 %v2692
        %v2694 = vlaneseq
        %v2695 = vshrl.u32 %v2694, 7
        %v2696 = vsub.s32 %v2693, %v2695
        %v2697 = vrot.slane %v2681, %v2696
        %v2699 = vunpack.c.l.s4 1966171168
        %v2700 = vunpack.c.0.s8 %v2699
        %v2701 = vlaneseq
        %v2702 = vshrl.u32 %v2701, 7
        %v2703 = vsub.s32 %v2700, %v2702
        %v2704 = vrot.slane %v2682, %v2703
        %v2706 = vunpack.c.l.s4 1966171168
        %v2707 = vunpack.c.0.s8 %v2706
        %v2708 = vlaneseq
        %v2709 = vshrl.u32 %v2708, 7
        %v2710 = vsub.s32 %v2707, %v2709
        %v2711 = vrot.slane %v2683, %v2710
        %v2712 = vcombine.high %v2690, %v2690
        %v2713 = vcombine.high %v2697, %v2697
        %v2714 = vcombine.high %v2704, %v2704
        %v2715 = vcombine.high %v2711, %v2711
        %v2716 = vlaneseq
        %v2717 = vshrl.u32 %v2716, 7
        %v2718 = vsub.s32 0, %v2717
        %v2719 = vrot.slane %v2347, %v2718
        %v2720 = vlaneseq
        %v2721 = vshrl.u32 %v2720, 7
        %v2722 = vsub.s32 0, %v2721
        %v2723 = vrot.slane %v2361, %v2722
        %v2724 = vlaneseq
        %v2725 = vshrl.u32 %v2724, 7
        %v2726 = vsub.s32 0, %v2725
        %v2727 = vrot.slane %v2369, %v2726
        %v2728 = vlaneseq
        %v2729 = vshrl.u32 %v2728, 7
        %v2730 = vsub.s32 0, %v2729
        %v2731 = vrot.slane %v2371, %v2730
        %v2732 = vlaneseq
        %v2733 = vshrl.u32 %v2732, 7
        %v2734 = vsub.s32 0, %v2733
        %v2735 = vrot.slane %v2354, %v2734
        %v2736 = vlaneseq
        %v2737 = vshrl.u32 %v2736, 7
        %v2738 = vsub.s32 0, %v2737
        %v2739 = vrot.slane %v2368, %v2738
        %v2740 = vlaneseq
        %v2741 = vshrl.u32 %v2740, 7
        %v2742 = vsub.s32 0, %v2741
        %v2743 = vrot.slane %v2370, %v2742
        %v2744 = vlaneseq
        %v2745 = vshrl.u32 %v2744, 7
        %v2746 = vsub.s32 0, %v2745
        %v2747 = vrot.slane %v2372, %v2746
        %v2748 = vlaneseq
        %v2749 = vshrl.u32 %v2748, 7
        %v2750 = vsub.s32 0, %v2749
        %v2751 = vrot.slane %v2396, %v2750
        %v2752 = vlaneseq
        %v2753 = vshrl.u32 %v2752, 7
        %v2754 = vsub.s32 0, %v2753
        %v2755 = vrot.slane %v2410, %v2754
        %v2756 = vlaneseq
        %v2757 = vshrl.u32 %v2756, 7
        %v2758 = vsub.s32 0, %v2757
        %v2759 = vrot.slane %v2418, %v2758
        %v2760 = vlaneseq
        %v2761 = vshrl.u32 %v2760, 7
        %v2762 = vsub.s32 0, %v2761
        %v2763 = vrot.slane %v2420, %v2762
        %v2764 = vlaneseq
        %v2765 = vshrl.u32 %v2764, 7
        %v2766 = vsub.s32 0, %v2765
        %v2767 = vrot.slane %v2403, %v2766
        %v2768 = vlaneseq
        %v2769 = vshrl.u32 %v2768, 7
        %v2770 = vsub.s32 0, %v2769
        %v2771 = vrot.slane %v2417, %v2770
        %v2772 = vlaneseq
        %v2773 = vshrl.u32 %v2772, 7
        %v2774 = vsub.s32 0, %v2773
        %v2775 = vrot.slane %v2419, %v2774
        %v2776 = vlaneseq
        %v2777 = vshrl.u32 %v2776, 7
        %v2778 = vsub.s32 0, %v2777
        %v2779 = vrot.slane %v2421, %v2778
        %v2780 = vlaneseq
        %v2781 = vshrl.u32 %v2780, 7
        %v2782 = vsub.s32 0, %v2781
        %v2783 = vrot.slane %v2445, %v2782
        %v2784 = vlaneseq
        %v2785 = vshrl.u32 %v2784, 7
        %v2786 = vsub.s32 0, %v2785
        %v2787 = vrot.slane %v2459, %v2786
        %v2788 = vlaneseq
        %v2789 = vshrl.u32 %v2788, 7
        %v2790 = vsub.s32 0, %v2789
        %v2791 = vrot.slane %v2467, %v2790
        %v2792 = vlaneseq
        %v2793 = vshrl.u32 %v2792, 7
        %v2794 = vsub.s32 0, %v2793
        %v2795 = vrot.slane %v2469, %v2794
        %v2796 = vlaneseq
        %v2797 = vshrl.u32 %v2796, 7
        %v2798 = vsub.s32 0, %v2797
        %v2799 = vrot.slane %v2452, %v2798
        %v2800 = vlaneseq
        %v2801 = vshrl.u32 %v2800, 7
        %v2802 = vsub.s32 0, %v2801
        %v2803 = vrot.slane %v2466, %v2802
        %v2804 = vlaneseq
        %v2805 = vshrl.u32 %v2804, 7
        %v2806 = vsub.s32 0, %v2805
        %v2807 = vrot.slane %v2468, %v2806
        %v2808 = vlaneseq
        %v2809 = vshrl.u32 %v2808, 7
        %v2810 = vsub.s32 0, %v2809
        %v2811 = vrot.slane %v2470, %v2810
        %v2812 = vlaneseq
        %v2813 = vshrl.u32 %v2812, 7
        %v2814 = vsub.s32 0, %v2813
        %v2815 = vrot.slane %v2494, %v2814
        %v2816 = vlaneseq
        %v2817 = vshrl.u32 %v2816, 7
        %v2818 = vsub.s32 0, %v2817
        %v2819 = vrot.slane %v2508, %v2818
        %v2820 = vlaneseq
        %v2821 = vshrl.u32 %v2820, 7
        %v2822 = vsub.s32 0, %v2821
        %v2823 = vrot.slane %v2516, %v2822
        %v2824 = vlaneseq
        %v2825 = vshrl.u32 %v2824, 7
        %v2826 = vsub.s32 0, %v2825
        %v2827 = vrot.slane %v2518, %v2826
        %v2828 = vlaneseq
        %v2829 = vshrl.u32 %v2828, 7
        %v2830 = vsub.s32 0, %v2829
        %v2831 = vrot.slane %v2501, %v2830
        %v2832 = vlaneseq
        %v2833 = vshrl.u32 %v2832, 7
        %v2834 = vsub.s32 0, %v2833
        %v2835 = vrot.slane %v2515, %v2834
        %v2836 = vlaneseq
        %v2837 = vshrl.u32 %v2836, 7
        %v2838 = vsub.s32 0, %v2837
        %v2839 = vrot.slane %v2517, %v2838
        %v2840 = vlaneseq
        %v2841 = vshrl.u32 %v2840, 7
        %v2842 = vsub.s32 0, %v2841
        %v2843 = vrot.slane %v2519, %v2842
        %v2844 = vlaneseq
        %v2845 = vshrl.u32 %v2844, 7
        %v2846 = vsub.s32 0, %v2845
        %v2847 = vrot.slane %v2543, %v2846
        %v2848 = vlaneseq
        %v2849 = vshrl.u32 %v2848, 7
        %v2850 = vsub.s32 0, %v2849
        %v2851 = vrot.slane %v2557, %v2850
        %v2852 = vlaneseq
        %v2853 = vshrl.u32 %v2852, 7
        %v2854 = vsub.s32 0, %v2853
        %v2855 = vrot.slane %v2565, %v2854
        %v2856 = vlaneseq
        %v2857 = vshrl.u32 %v2856, 7
        %v2858 = vsub.s32 0, %v2857
        %v2859 = vrot.slane %v2567, %v2858
        %v2860 = vlaneseq
        %v2861 = vshrl.u32 %v2860, 7
        %v2862 = vsub.s32 0, %v2861
        %v2863 = vrot.slane %v2550, %v2862
        %v2864 = vlaneseq
        %v2865 = vshrl.u32 %v2864, 7
        %v2866 = vsub.s32 0, %v2865
        %v2867 = vrot.slane %v2564, %v2866
        %v2868 = vlaneseq
        %v2869 = vshrl.u32 %v2868, 7
        %v2870 = vsub.s32 0, %v2869
        %v2871 = vrot.slane %v2566, %v2870
        %v2872 = vlaneseq
        %v2873 = vshrl.u32 %v2872, 7
        %v2874 = vsub.s32 0, %v2873
        %v2875 = vrot.slane %v2568, %v2874
        %v2876 = vlaneseq
        %v2877 = vshrl.u32 %v2876, 7
        %v2878 = vsub.s32 0, %v2877
        %v2879 = vrot.slane %v2592, %v2878
        %v2880 = vlaneseq
        %v2881 = vshrl.u32 %v2880, 7
        %v2882 = vsub.s32 0, %v2881
        %v2883 = vrot.slane %v2606, %v2882
        %v2884 = vlaneseq
        %v2885 = vshrl.u32 %v2884, 7
        %v2886 = vsub.s32 0, %v2885
        %v2887 = vrot.slane %v2614, %v2886
        %v2888 = vlaneseq
        %v2889 = vshrl.u32 %v2888, 7
        %v2890 = vsub.s32 0, %v2889
        %v2891 = vrot.slane %v2616, %v2890
        %v2892 = vlaneseq
        %v2893 = vshrl.u32 %v2892, 7
        %v2894 = vsub.s32 0, %v2893
        %v2895 = vrot.slane %v2599, %v2894
        %v2896 = vlaneseq
        %v2897 = vshrl.u32 %v2896, 7
        %v2898 = vsub.s32 0, %v2897
        %v2899 = vrot.slane %v2613, %v2898
        %v2900 = vlaneseq
        %v2901 = vshrl.u32 %v2900, 7
        %v2902 = vsub.s32 0, %v2901
        %v2903 = vrot.slane %v2615, %v2902
        %v2904 = vlaneseq
        %v2905 = vshrl.u32 %v2904, 7
        %v2906 = vsub.s32 0, %v2905
        %v2907 = vrot.slane %v2617, %v2906
        %v2908 = vlaneseq
        %v2909 = vshrl.u32 %v2908, 7
        %v2910 = vsub.s32 0, %v2909
        %v2911 = vrot.slane %v2641, %v2910
        %v2912 = vlaneseq
        %v2913 = vshrl.u32 %v2912, 7
        %v2914 = vsub.s32 0, %v2913
        %v2915 = vrot.slane %v2655, %v2914
        %v2916 = vlaneseq
        %v2917 = vshrl.u32 %v2916, 7
        %v2918 = vsub.s32 0, %v2917
        %v2919 = vrot.slane %v2663, %v2918
        %v2920 = vlaneseq
        %v2921 = vshrl.u32 %v2920, 7
        %v2922 = vsub.s32 0, %v2921
        %v2923 = vrot.slane %v2665, %v2922
        %v2924 = vlaneseq
        %v2925 = vshrl.u32 %v2924, 7
        %v2926 = vsub.s32 0, %v2925
        %v2927 = vrot.slane %v2648, %v2926
        %v2928 = vlaneseq
        %v2929 = vshrl.u32 %v2928, 7
        %v2930 = vsub.s32 0, %v2929
        %v2931 = vrot.slane %v2662, %v2930
        %v2932 = vlaneseq
        %v2933 = vshrl.u32 %v2932, 7
        %v2934 = vsub.s32 0, %v2933
        %v2935 = vrot.slane %v2664, %v2934
        %v2936 = vlaneseq
        %v2937 = vshrl.u32 %v2936, 7
        %v2938 = vsub.s32 0, %v2937
        %v2939 = vrot.slane %v2666, %v2938
        %v2940 = vlaneseq
        %v2941 = vshrl.u32 %v2940, 7
        %v2942 = vsub.s32 0, %v2941
        %v2943 = vrot.slane %v2690, %v2942
        %v2944 = vlaneseq
        %v2945 = vshrl.u32 %v2944, 7
        %v2946 = vsub.s32 0, %v2945
        %v2947 = vrot.slane %v2704, %v2946
        %v2948 = vlaneseq
        %v2949 = vshrl.u32 %v2948, 7
        %v2950 = vsub.s32 0, %v2949
        %v2951 = vrot.slane %v2712, %v2950
        %v2952 = vlaneseq
        %v2953 = vshrl.u32 %v2952, 7
        %v2954 = vsub.s32 0, %v2953
        %v2955 = vrot.slane %v2714, %v2954
        %v2956 = vlaneseq
        %v2957 = vshrl.u32 %v2956, 7
        %v2958 = vsub.s32 0, %v2957
        %v2959 = vrot.slane %v2697, %v2958
        %v2960 = vlaneseq
        %v2961 = vshrl.u32 %v2960, 7
        %v2962 = vsub.s32 0, %v2961
        %v2963 = vrot.slane %v2711, %v2962
        %v2964 = vlaneseq
        %v2965 = vshrl.u32 %v2964, 7
        %v2966 = vsub.s32 0, %v2965
        %v2967 = vrot.slane %v2713, %v2966
        %v2968 = vlaneseq
        %v2969 = vshrl.u32 %v2968, 7
        %v2970 = vsub.s32 0, %v2969
        %v2971 = vrot.slane %v2715, %v2970
        %v3036 = vadd.f32 %v2719, %v456
        %v3037 = vadd.f32 %v2723, %v456
        %v3038 = vadd.f32 %v2727, %v456
        %v3039 = vadd.f32 %v2731, %v456
        %v3040 = vadd.f32 %v2735, %v456
        %v3041 = vadd.f32 %v2739, %v456
        %v3042 = vadd.f32 %v2743, %v456
        %v3043 = vadd.f32 %v2747, %v456
        %v3044 = vadd.f32 %v2751, %v456
        %v3045 = vadd.f32 %v2755, %v456
        %v3046 = vadd.f32 %v2759, %v456
        %v3047 = vadd.f32 %v2763, %v456
        %v3048 = vadd.f32 %v2767, %v456
        %v3049 = vadd.f32 %v2771, %v456
        %v3050 = vadd.f32 %v2775, %v456
        %v3051 = vadd.f32 %v2779, %v456
        %v3052 = vadd.f32 %v2783, %v456
        %v3053 = vadd.f32 %v2787, %v456
        %v3054 = vadd.f32 %v2791, %v456
        %v3055 = vadd.f32 %v2795, %v456
        %v3056 = vadd.f32 %v2799, %v456
        %v3057 = vadd.f32 %v2803, %v456
        %v3058 = vadd.f32 %v2807, %v456
        %v3059 = vadd.f32 %v2811, %v456
        %v3060 = vadd.f32 %v2815, %v456
        %v3061 = vadd.f32 %v2819, %v456
        %v3062 = vadd.f32 %v2823, %v456
        %v3063 = vadd.f32 %v2827, %v456
        %v3064 = vadd.f32 %v2831, %v456
        %v3065 = vadd.f32 %v2835, %v456
        %v3066 = vadd.f32 %v2839, %v456
        %v3067 = vadd.f32 %v2843, %v456
        %v3068 = vadd.f32 %v2847, %v456
        %v3069 = vadd.f32 %v2851, %v456
        %v3070 = vadd.f32 %v2855, %v456
        %v3071 = vadd.f32 %v2859, %v456
        %v3072 = vadd.f32 %v2863, %v456
        %v3073 = vadd.f32 %v2867, %v456
        %v3074 = vadd.f32 %v2871, %v456
        %v3075 = vadd.f32 %v2875, %v456
        %v3076 = vadd.f32 %v2879, %v456
        %v3077 = vadd.f32 %v2883, %v456
        %v3078 = vadd.f32 %v2887, %v456
        %v3079 = vadd.f32 %v2891, %v456
        %v3080 = vadd.f32 %v2895, %v456
        %v3081 = vadd.f32 %v2899, %v456
        %v3082 = vadd.f32 %v2903, %v456
        %v3083 = vadd.f32 %v2907, %v456
        %v3084 = vadd.f32 %v2911, %v456
        %v3085 = vadd.f32 %v2915, %v456
        %v3086 = vadd.f32 %v2919, %v456
        %v3087 = vadd.f32 %v2923, %v456
        %v3088 = vadd.f32 %v2927, %v456
        %v3089 = vadd.f32 %v2931, %v456
        %v3090 = vadd.f32 %v2935, %v456
        %v3091 = vadd.f32 %v2939, %v456
        %v3092 = vadd.f32 %v2943, %v456
        %v3093 = vadd.f32 %v2947, %v456
        %v3094 = vadd.f32 %v2951, %v456
        %v3095 = vadd.f32 %v2955, %v456
        %v3096 = vadd.f32 %v2959, %v456
        %v3097 = vadd.f32 %v2963, %v456
        %v3098 = vadd.f32 %v2967, %v456
        %v3099 = vadd.f32 %v2971, %v456
        %v3100 = vmul.f32 %v3036, 0.01
        %v3101 = vmul.f32 %v3037, 0.01
        %v3102 = vmul.f32 %v3038, 0.01
        %v3103 = vmul.f32 %v3039, 0.01
        %v3104 = vmul.f32 %v3040, 0.01
        %v3105 = vmul.f32 %v3041, 0.01
        %v3106 = vmul.f32 %v3042, 0.01
        %v3107 = vmul.f32 %v3043, 0.01
        %v3108 = vmul.f32 %v3044, 0.01
        %v3109 = vmul.f32 %v3045, 0.01
        %v3110 = vmul.f32 %v3046, 0.01
        %v3111 = vmul.f32 %v3047, 0.01
        %v3112 = vmul.f32 %v3048, 0.01
        %v3113 = vmul.f32 %v3049, 0.01
        %v3114 = vmul.f32 %v3050, 0.01
        %v3115 = vmul.f32 %v3051, 0.01
        %v3116 = vmul.f32 %v3052, 0.01
        %v3117 = vmul.f32 %v3053, 0.01
        %v3118 = vmul.f32 %v3054, 0.01
        %v3119 = vmul.f32 %v3055, 0.01
        %v3120 = vmul.f32 %v3056, 0.01
        %v3121 = vmul.f32 %v3057, 0.01
        %v3122 = vmul.f32 %v3058, 0.01
        %v3123 = vmul.f32 %v3059, 0.01
        %v3124 = vmul.f32 %v3060, 0.01
        %v3125 = vmul.f32 %v3061, 0.01
        %v3126 = vmul.f32 %v3062, 0.01
        %v3127 = vmul.f32 %v3063, 0.01
        %v3128 = vmul.f32 %v3064, 0.01
        %v3129 = vmul.f32 %v3065, 0.01
        %v3130 = vmul.f32 %v3066, 0.01
        %v3131 = vmul.f32 %v3067, 0.01
        %v3132 = vmul.f32 %v3068, 0.01
        %v3133 = vmul.f32 %v3069, 0.01
        %v3134 = vmul.f32 %v3070, 0.01
        %v3135 = vmul.f32 %v3071, 0.01
        %v3136 = vmul.f32 %v3072, 0.01
        %v3137 = vmul.f32 %v3073, 0.01
        %v3138 = vmul.f32 %v3074, 0.01
        %v3139 = vmul.f32 %v3075, 0.01
        %v3140 = vmul.f32 %v3076, 0.01
        %v3141 = vmul.f32 %v3077, 0.01
        %v3142 = vmul.f32 %v3078, 0.01
        %v3143 = vmul.f32 %v3079, 0.01
        %v3144 = vmul.f32 %v3080, 0.01
        %v3145 = vmul.f32 %v3081, 0.01
        %v3146 = vmul.f32 %v3082, 0.01
        %v3147 = vmul.f32 %v3083, 0.01
        %v3148 = vmul.f32 %v3084, 0.01
        %v3149 = vmul.f32 %v3085, 0.01
        %v3150 = vmul.f32 %v3086, 0.01
        %v3151 = vmul.f32 %v3087, 0.01
        %v3152 = vmul.f32 %v3088, 0.01
        %v3153 = vmul.f32 %v3089, 0.01
        %v3154 = vmul.f32 %v3090, 0.01
        %v3155 = vmul.f32 %v3091, 0.01
        %v3156 = vmul.f32 %v3092, 0.01
        %v3157 = vmul.f32 %v3093, 0.01
        %v3158 = vmul.f32 %v3094, 0.01
        %v3159 = vmul.f32 %v3095, 0.01
        %v3160 = vmul.f32 %v3096, 0.01
        %v3161 = vmul.f32 %v3097, 0.01
        %v3162 = vmul.f32 %v3098, 0.01
        %v3163 = vmul.f32 %v3099, 0.01
        %v3164 = vmax.f32 %v3036, %v3100
        %v3165 = vmax.f32 %v3037, %v3101
        %v3166 = vmax.f32 %v3038, %v3102
        %v3167 = vmax.f32 %v3039, %v3103
        %v3168 = vmax.f32 %v3040, %v3104
        %v3169 = vmax.f32 %v3041, %v3105
        %v3170 = vmax.f32 %v3042, %v3106
        %v3171 = vmax.f32 %v3043, %v3107
        %v3172 = vmax.f32 %v3044, %v3108
        %v3173 = vmax.f32 %v3045, %v3109
        %v3174 = vmax.f32 %v3046, %v3110
        %v3175 = vmax.f32 %v3047, %v3111
        %v3176 = vmax.f32 %v3048, %v3112
        %v3177 = vmax.f32 %v3049, %v3113
        %v3178 = vmax.f32 %v3050, %v3114
        %v3179 = vmax.f32 %v3051, %v3115
        %v3180 = vmax.f32 %v3052, %v3116
        %v3181 = vmax.f32 %v3053, %v3117
        %v3182 = vmax.f32 %v3054, %v3118
        %v3183 = vmax.f32 %v3055, %v3119
        %v3184 = vmax.f32 %v3056, %v3120
        %v3185 = vmax.f32 %v3057, %v3121
        %v3186 = vmax.f32 %v3058, %v3122
        %v3187 = vmax.f32 %v3059, %v3123
        %v3188 = vmax.f32 %v3060, %v3124
        %v3189 = vmax.f32 %v3061, %v3125
        %v3190 = vmax.f32 %v3062, %v3126
        %v3191 = vmax.f32 %v3063, %v3127
        %v3192 = vmax.f32 %v3064, %v3128
        %v3193 = vmax.f32 %v3065, %v3129
        %v3194 = vmax.f32 %v3066, %v3130
        %v3195 = vmax.f32 %v3067, %v3131
        %v3196 = vmax.f32 %v3068, %v3132
        %v3197 = vmax.f32 %v3069, %v3133
        %v3198 = vmax.f32 %v3070, %v3134
        %v3199 = vmax.f32 %v3071, %v3135
        %v3200 = vmax.f32 %v3072, %v3136
        %v3201 = vmax.f32 %v3073, %v3137
        %v3202 = vmax.f32 %v3074, %v3138
        %v3203 = vmax.f32 %v3075, %v3139
        %v3204 = vmax.f32 %v3076, %v3140
        %v3205 = vmax.f32 %v3077, %v3141
        %v3206 = vmax.f32 %v3078, %v3142
        %v3207 = vmax.f32 %v3079, %v3143
        %v3208 = vmax.f32 %v3080, %v3144
        %v3209 = vmax.f32 %v3081, %v3145
        %v3210 = vmax.f32 %v3082, %v3146
        %v3211 = vmax.f32 %v3083, %v3147
        %v3212 = vmax.f32 %v3084, %v3148
        %v3213 = vmax.f32 %v3085, %v3149
        %v3214 = vmax.f32 %v3086, %v3150
        %v3215 = vmax.f32 %v3087, %v3151
        %v3216 = vmax.f32 %v3088, %v3152
        %v3217 = vmax.f32 %v3089, %v3153
        %v3218 = vmax.f32 %v3090, %v3154
        %v3219 = vmax.f32 %v3091, %v3155
        %v3220 = vmax.f32 %v3092, %v3156
        %v3221 = vmax.f32 %v3093, %v3157
        %v3222 = vmax.f32 %v3094, %v3158
        %v3223 = vmax.f32 %v3095, %v3159
        %v3224 = vmax.f32 %v3096, %v3160
        %v3225 = vmax.f32 %v3097, %v3161
        %v3226 = vmax.f32 %v3098, %v3162
        %v3227 = vmax.f32 %v3099, %v3163
        %v3228 = vmul.f32 %v3164, %v1518
        %v3229 = vmul.f32 %v3165, %v1518
        %v3230 = vmul.f32 %v3166, %v1518
        %v3231 = vmul.f32 %v3167, %v1518
        %v3232 = vmul.f32 %v3168, %v1518
        %v3233 = vmul.f32 %v3169, %v1518
        %v3234 = vmul.f32 %v3170, %v1518
        %v3235 = vmul.f32 %v3171, %v1518
        %v3236 = vmul.f32 %v3172, %v1518
        %v3237 = vmul.f32 %v3173, %v1518
        %v3238 = vmul.f32 %v3174, %v1518
        %v3239 = vmul.f32 %v3175, %v1518
        %v3240 = vmul.f32 %v3176, %v1518
        %v3241 = vmul.f32 %v3177, %v1518
        %v3242 = vmul.f32 %v3178, %v1518
        %v3243 = vmul.f32 %v3179, %v1518
        %v3244 = vmul.f32 %v3180, %v1518
        %v3245 = vmul.f32 %v3181, %v1518
        %v3246 = vmul.f32 %v3182, %v1518
        %v3247 = vmul.f32 %v3183, %v1518
        %v3248 = vmul.f32 %v3184, %v1518
        %v3249 = vmul.f32 %v3185, %v1518
        %v3250 = vmul.f32 %v3186, %v1518
        %v3251 = vmul.f32 %v3187, %v1518
        %v3252 = vmul.f32 %v3188, %v1518
        %v3253 = vmul.f32 %v3189, %v1518
        %v3254 = vmul.f32 %v3190, %v1518
        %v3255 = vmul.f32 %v3191, %v1518
        %v3256 = vmul.f32 %v3192, %v1518
        %v3257 = vmul.f32 %v3193, %v1518
        %v3258 = vmul.f32 %v3194, %v1518
        %v3259 = vmul.f32 %v3195, %v1518
        %v3260 = vmul.f32 %v3196, %v1518
        %v3261 = vmul.f32 %v3197, %v1518
        %v3262 = vmul.f32 %v3198, %v1518
        %v3263 = vmul.f32 %v3199, %v1518
        %v3264 = vmul.f32 %v3200, %v1518
        %v3265 = vmul.f32 %v3201, %v1518
        %v3266 = vmul.f32 %v3202, %v1518
        %v3267 = vmul.f32 %v3203, %v1518
        %v3268 = vmul.f32 %v3204, %v1518
        %v3269 = vmul.f32 %v3205, %v1518
        %v3270 = vmul.f32 %v3206, %v1518
        %v3271 = vmul.f32 %v3207, %v1518
        %v3272 = vmul.f32 %v3208, %v1518
        %v3273 = vmul.f32 %v3209, %v1518
        %v3274 = vmul.f32 %v3210, %v1518
        %v3275 = vmul.f32 %v3211, %v1518
        %v3276 = vmul.f32 %v3212, %v1518
        %v3277 = vmul.f32 %v3213, %v1518
        %v3278 = vmul.f32 %v3214, %v1518
        %v3279 = vmul.f32 %v3215, %v1518
        %v3280 = vmul.f32 %v3216, %v1518
        %v3281 = vmul.f32 %v3217, %v1518
        %v3282 = vmul.f32 %v3218, %v1518
        %v3283 = vmul.f32 %v3219, %v1518
        %v3284 = vmul.f32 %v3220, %v1518
        %v3285 = vmul.f32 %v3221, %v1518
        %v3286 = vmul.f32 %v3222, %v1518
        %v3287 = vmul.f32 %v3223, %v1518
        %v3288 = vmul.f32 %v3224, %v1518
        %v3289 = vmul.f32 %v3225, %v1518
        %v3290 = vmul.f32 %v3226, %v1518
        %v3291 = vmul.f32 %v3227, %v1518
        %v3292 = vsel %vm385, %v3228, 0.0
        %3293 = vadd.xlane.f32.xlu0 %v3292
        %v3294 = vpop.xlane.xlu0 %3293
        %v3295 = vsel %vm385, %v3229, 0.0
        %3296 = vadd.xlane.f32.xlu0 %v3295
        %v3297 = vpop.xlane.xlu0 %3296
        %v3298 = vsel %vm385, %v3230, 0.0
        %3299 = vadd.xlane.f32.xlu0 %v3298
        %v3300 = vpop.xlane.xlu0 %3299
        %v3301 = vsel %vm385, %v3231, 0.0
        %3302 = vadd.xlane.f32.xlu0 %v3301
        %v3303 = vpop.xlane.xlu0 %3302
        %v3304 = vsel %vm385, %v3232, 0.0
        %3305 = vadd.xlane.f32.xlu0 %v3304
        %v3306 = vpop.xlane.xlu0 %3305
        %v3307 = vsel %vm385, %v3233, 0.0
        %3308 = vadd.xlane.f32.xlu0 %v3307
        %v3309 = vpop.xlane.xlu0 %3308
        %v3310 = vsel %vm385, %v3234, 0.0
        %3311 = vadd.xlane.f32.xlu0 %v3310
        %v3312 = vpop.xlane.xlu0 %3311
        %v3313 = vsel %vm385, %v3235, 0.0
        %3314 = vadd.xlane.f32.xlu0 %v3313
        %v3315 = vpop.xlane.xlu0 %3314
        %v3316 = vsel %vm385, %v3236, 0.0
        %3317 = vadd.xlane.f32.xlu0 %v3316
        %v3318 = vpop.xlane.xlu0 %3317
        %v3319 = vsel %vm385, %v3237, 0.0
        %3320 = vadd.xlane.f32.xlu0 %v3319
        %v3321 = vpop.xlane.xlu0 %3320
        %v3322 = vsel %vm385, %v3238, 0.0
        %3323 = vadd.xlane.f32.xlu0 %v3322
        %v3324 = vpop.xlane.xlu0 %3323
        %v3325 = vsel %vm385, %v3239, 0.0
        %3326 = vadd.xlane.f32.xlu0 %v3325
        %v3327 = vpop.xlane.xlu0 %3326
        %v3328 = vsel %vm385, %v3240, 0.0
        %3329 = vadd.xlane.f32.xlu0 %v3328
        %v3330 = vpop.xlane.xlu0 %3329
        %v3331 = vsel %vm385, %v3241, 0.0
        %3332 = vadd.xlane.f32.xlu0 %v3331
        %v3333 = vpop.xlane.xlu0 %3332
        %v3334 = vsel %vm385, %v3242, 0.0
        %3335 = vadd.xlane.f32.xlu0 %v3334
        %v3336 = vpop.xlane.xlu0 %3335
        %v3337 = vsel %vm385, %v3243, 0.0
        %3338 = vadd.xlane.f32.xlu0 %v3337
        %v3339 = vpop.xlane.xlu0 %3338
        %v3340 = vsel %vm385, %v3244, 0.0
        %3341 = vadd.xlane.f32.xlu0 %v3340
        %v3342 = vpop.xlane.xlu0 %3341
        %v3343 = vsel %vm385, %v3245, 0.0
        %3344 = vadd.xlane.f32.xlu0 %v3343
        %v3345 = vpop.xlane.xlu0 %3344
        %v3346 = vsel %vm385, %v3246, 0.0
        %3347 = vadd.xlane.f32.xlu0 %v3346
        %v3348 = vpop.xlane.xlu0 %3347
        %v3349 = vsel %vm385, %v3247, 0.0
        %3350 = vadd.xlane.f32.xlu0 %v3349
        %v3351 = vpop.xlane.xlu0 %3350
        %v3352 = vsel %vm385, %v3248, 0.0
        %3353 = vadd.xlane.f32.xlu0 %v3352
        %v3354 = vpop.xlane.xlu0 %3353
        %v3355 = vsel %vm385, %v3249, 0.0
        %3356 = vadd.xlane.f32.xlu0 %v3355
        %v3357 = vpop.xlane.xlu0 %3356
        %v3358 = vsel %vm385, %v3250, 0.0
        %3359 = vadd.xlane.f32.xlu0 %v3358
        %v3360 = vpop.xlane.xlu0 %3359
        %v3361 = vsel %vm385, %v3251, 0.0
        %3362 = vadd.xlane.f32.xlu0 %v3361
        %v3363 = vpop.xlane.xlu0 %3362
        %v3364 = vsel %vm385, %v3252, 0.0
        %3365 = vadd.xlane.f32.xlu0 %v3364
        %v3366 = vpop.xlane.xlu0 %3365
        %v3367 = vsel %vm385, %v3253, 0.0
        %3368 = vadd.xlane.f32.xlu0 %v3367
        %v3369 = vpop.xlane.xlu0 %3368
        %v3370 = vsel %vm385, %v3254, 0.0
        %3371 = vadd.xlane.f32.xlu0 %v3370
        %v3372 = vpop.xlane.xlu0 %3371
        %v3373 = vsel %vm385, %v3255, 0.0
        %3374 = vadd.xlane.f32.xlu0 %v3373
        %v3375 = vpop.xlane.xlu0 %3374
        %v3376 = vsel %vm385, %v3256, 0.0
        %3377 = vadd.xlane.f32.xlu0 %v3376
        %v3378 = vpop.xlane.xlu0 %3377
        %v3379 = vsel %vm385, %v3257, 0.0
        %3380 = vadd.xlane.f32.xlu0 %v3379
        %v3381 = vpop.xlane.xlu0 %3380
        %v3382 = vsel %vm385, %v3258, 0.0
        %3383 = vadd.xlane.f32.xlu0 %v3382
        %v3384 = vpop.xlane.xlu0 %3383
        %v3385 = vsel %vm385, %v3259, 0.0
        %3386 = vadd.xlane.f32.xlu0 %v3385
        %v3387 = vpop.xlane.xlu0 %3386
        %v3388 = vsel %vm385, %v3260, 0.0
        %3389 = vadd.xlane.f32.xlu0 %v3388
        %v3390 = vpop.xlane.xlu0 %3389
        %v3391 = vsel %vm385, %v3261, 0.0
        %3392 = vadd.xlane.f32.xlu0 %v3391
        %v3393 = vpop.xlane.xlu0 %3392
        %v3394 = vsel %vm385, %v3262, 0.0
        %3395 = vadd.xlane.f32.xlu0 %v3394
        %v3396 = vpop.xlane.xlu0 %3395
        %v3397 = vsel %vm385, %v3263, 0.0
        %3398 = vadd.xlane.f32.xlu0 %v3397
        %v3399 = vpop.xlane.xlu0 %3398
        %v3400 = vsel %vm385, %v3264, 0.0
        %3401 = vadd.xlane.f32.xlu0 %v3400
        %v3402 = vpop.xlane.xlu0 %3401
        %v3403 = vsel %vm385, %v3265, 0.0
        %3404 = vadd.xlane.f32.xlu0 %v3403
        %v3405 = vpop.xlane.xlu0 %3404
        %v3406 = vsel %vm385, %v3266, 0.0
        %3407 = vadd.xlane.f32.xlu0 %v3406
        %v3408 = vpop.xlane.xlu0 %3407
        %v3409 = vsel %vm385, %v3267, 0.0
        %3410 = vadd.xlane.f32.xlu0 %v3409
        %v3411 = vpop.xlane.xlu0 %3410
        %v3412 = vsel %vm385, %v3268, 0.0
        %3413 = vadd.xlane.f32.xlu0 %v3412
        %v3414 = vpop.xlane.xlu0 %3413
        %v3415 = vsel %vm385, %v3269, 0.0
        %3416 = vadd.xlane.f32.xlu0 %v3415
        %v3417 = vpop.xlane.xlu0 %3416
        %v3418 = vsel %vm385, %v3270, 0.0
        %3419 = vadd.xlane.f32.xlu0 %v3418
        %v3420 = vpop.xlane.xlu0 %3419
        %v3421 = vsel %vm385, %v3271, 0.0
        %3422 = vadd.xlane.f32.xlu0 %v3421
        %v3423 = vpop.xlane.xlu0 %3422
        %v3424 = vsel %vm385, %v3272, 0.0
        %3425 = vadd.xlane.f32.xlu0 %v3424
        %v3426 = vpop.xlane.xlu0 %3425
        %v3427 = vsel %vm385, %v3273, 0.0
        %3428 = vadd.xlane.f32.xlu0 %v3427
        %v3429 = vpop.xlane.xlu0 %3428
        %v3430 = vsel %vm385, %v3274, 0.0
        %3431 = vadd.xlane.f32.xlu0 %v3430
        %v3432 = vpop.xlane.xlu0 %3431
        %v3433 = vsel %vm385, %v3275, 0.0
        %3434 = vadd.xlane.f32.xlu0 %v3433
        %v3435 = vpop.xlane.xlu0 %3434
        %v3436 = vsel %vm385, %v3276, 0.0
        %3437 = vadd.xlane.f32.xlu0 %v3436
        %v3438 = vpop.xlane.xlu0 %3437
        %v3439 = vsel %vm385, %v3277, 0.0
        %3440 = vadd.xlane.f32.xlu0 %v3439
        %v3441 = vpop.xlane.xlu0 %3440
        %v3442 = vsel %vm385, %v3278, 0.0
        %3443 = vadd.xlane.f32.xlu0 %v3442
        %v3444 = vpop.xlane.xlu0 %3443
        %v3445 = vsel %vm385, %v3279, 0.0
        %3446 = vadd.xlane.f32.xlu0 %v3445
        %v3447 = vpop.xlane.xlu0 %3446
        %v3448 = vsel %vm385, %v3280, 0.0
        %3449 = vadd.xlane.f32.xlu0 %v3448
        %v3450 = vpop.xlane.xlu0 %3449
        %v3451 = vsel %vm385, %v3281, 0.0
        %3452 = vadd.xlane.f32.xlu0 %v3451
        %v3453 = vpop.xlane.xlu0 %3452
        %v3454 = vsel %vm385, %v3282, 0.0
        %3455 = vadd.xlane.f32.xlu0 %v3454
        %v3456 = vpop.xlane.xlu0 %3455
        %v3457 = vsel %vm385, %v3283, 0.0
        %3458 = vadd.xlane.f32.xlu0 %v3457
        %v3459 = vpop.xlane.xlu0 %3458
        %v3460 = vsel %vm385, %v3284, 0.0
        %3461 = vadd.xlane.f32.xlu0 %v3460
        %v3462 = vpop.xlane.xlu0 %3461
        %v3463 = vsel %vm385, %v3285, 0.0
        %3464 = vadd.xlane.f32.xlu0 %v3463
        %v3465 = vpop.xlane.xlu0 %3464
        %v3466 = vsel %vm385, %v3286, 0.0
        %3467 = vadd.xlane.f32.xlu0 %v3466
        %v3468 = vpop.xlane.xlu0 %3467
        %v3469 = vsel %vm385, %v3287, 0.0
        %3470 = vadd.xlane.f32.xlu0 %v3469
        %v3471 = vpop.xlane.xlu0 %3470
        %v3472 = vsel %vm385, %v3288, 0.0
        %3473 = vadd.xlane.f32.xlu0 %v3472
        %v3474 = vpop.xlane.xlu0 %3473
        %v3475 = vsel %vm385, %v3289, 0.0
        %3476 = vadd.xlane.f32.xlu0 %v3475
        %v3477 = vpop.xlane.xlu0 %3476
        %v3478 = vsel %vm385, %v3290, 0.0
        %3479 = vadd.xlane.f32.xlu0 %v3478
        %v3480 = vpop.xlane.xlu0 %3479
        %v3481 = vsel %vm385, %v3291, 0.0
        %3482 = vadd.xlane.f32.xlu0 %v3481
        %v3483 = vpop.xlane.xlu0 %3482
        %v3548 = vlaneseq
        %v3549 = vshrl.u32 %v3548, 7
        %v3550 = vsub.s32 %v1841, %v3549
        %v3551 = vrot.slane %v3294, %v3550
        %v3552 = vlaneseq
        %v3553 = vshrl.u32 %v3552, 7
        %v3554 = vsub.s32 %v1841, %v3553
        %v3555 = vrot.slane %v3297, %v3554
        %v3556 = vlaneseq
        %v3557 = vshrl.u32 %v3556, 7
        %v3558 = vsub.s32 %v1841, %v3557
        %v3559 = vrot.slane %v3300, %v3558
        %v3560 = vlaneseq
        %v3561 = vshrl.u32 %v3560, 7
        %v3562 = vsub.s32 %v1841, %v3561
        %v3563 = vrot.slane %v3303, %v3562
        %v3564 = vlaneseq
        %v3565 = vshrl.u32 %v3564, 7
        %v3566 = vsub.s32 %v1841, %v3565
        %v3567 = vrot.slane %v3306, %v3566
        %v3568 = vlaneseq
        %v3569 = vshrl.u32 %v3568, 7
        %v3570 = vsub.s32 %v1841, %v3569
        %v3571 = vrot.slane %v3309, %v3570
        %v3572 = vlaneseq
        %v3573 = vshrl.u32 %v3572, 7
        %v3574 = vsub.s32 %v1841, %v3573
        %v3575 = vrot.slane %v3312, %v3574
        %v3576 = vlaneseq
        %v3577 = vshrl.u32 %v3576, 7
        %v3578 = vsub.s32 %v1841, %v3577
        %v3579 = vrot.slane %v3315, %v3578
        %v3580 = vlaneseq
        %v3581 = vshrl.u32 %v3580, 7
        %v3582 = vsub.s32 %v1841, %v3581
        %v3583 = vrot.slane %v3318, %v3582
        %v3584 = vlaneseq
        %v3585 = vshrl.u32 %v3584, 7
        %v3586 = vsub.s32 %v1841, %v3585
        %v3587 = vrot.slane %v3321, %v3586
        %v3588 = vlaneseq
        %v3589 = vshrl.u32 %v3588, 7
        %v3590 = vsub.s32 %v1841, %v3589
        %v3591 = vrot.slane %v3324, %v3590
        %v3592 = vlaneseq
        %v3593 = vshrl.u32 %v3592, 7
        %v3594 = vsub.s32 %v1841, %v3593
        %v3595 = vrot.slane %v3327, %v3594
        %v3596 = vlaneseq
        %v3597 = vshrl.u32 %v3596, 7
        %v3598 = vsub.s32 %v1841, %v3597
        %v3599 = vrot.slane %v3330, %v3598
        %v3600 = vlaneseq
        %v3601 = vshrl.u32 %v3600, 7
        %v3602 = vsub.s32 %v1841, %v3601
        %v3603 = vrot.slane %v3333, %v3602
        %v3604 = vlaneseq
        %v3605 = vshrl.u32 %v3604, 7
        %v3606 = vsub.s32 %v1841, %v3605
        %v3607 = vrot.slane %v3336, %v3606
        %v3608 = vlaneseq
        %v3609 = vshrl.u32 %v3608, 7
        %v3610 = vsub.s32 %v1841, %v3609
        %v3611 = vrot.slane %v3339, %v3610
        %v3612 = vlaneseq
        %v3613 = vshrl.u32 %v3612, 7
        %v3614 = vsub.s32 %v1841, %v3613
        %v3615 = vrot.slane %v3342, %v3614
        %v3616 = vlaneseq
        %v3617 = vshrl.u32 %v3616, 7
        %v3618 = vsub.s32 %v1841, %v3617
        %v3619 = vrot.slane %v3345, %v3618
        %v3620 = vlaneseq
        %v3621 = vshrl.u32 %v3620, 7
        %v3622 = vsub.s32 %v1841, %v3621
        %v3623 = vrot.slane %v3348, %v3622
        %v3624 = vlaneseq
        %v3625 = vshrl.u32 %v3624, 7
        %v3626 = vsub.s32 %v1841, %v3625
        %v3627 = vrot.slane %v3351, %v3626
        %v3628 = vlaneseq
        %v3629 = vshrl.u32 %v3628, 7
        %v3630 = vsub.s32 %v1841, %v3629
        %v3631 = vrot.slane %v3354, %v3630
        %v3632 = vlaneseq
        %v3633 = vshrl.u32 %v3632, 7
        %v3634 = vsub.s32 %v1841, %v3633
        %v3635 = vrot.slane %v3357, %v3634
        %v3636 = vlaneseq
        %v3637 = vshrl.u32 %v3636, 7
        %v3638 = vsub.s32 %v1841, %v3637
        %v3639 = vrot.slane %v3360, %v3638
        %v3640 = vlaneseq
        %v3641 = vshrl.u32 %v3640, 7
        %v3642 = vsub.s32 %v1841, %v3641
        %v3643 = vrot.slane %v3363, %v3642
        %v3644 = vlaneseq
        %v3645 = vshrl.u32 %v3644, 7
        %v3646 = vsub.s32 %v1841, %v3645
        %v3647 = vrot.slane %v3366, %v3646
        %v3648 = vlaneseq
        %v3649 = vshrl.u32 %v3648, 7
        %v3650 = vsub.s32 %v1841, %v3649
        %v3651 = vrot.slane %v3369, %v3650
        %v3652 = vlaneseq
        %v3653 = vshrl.u32 %v3652, 7
        %v3654 = vsub.s32 %v1841, %v3653
        %v3655 = vrot.slane %v3372, %v3654
        %v3656 = vlaneseq
        %v3657 = vshrl.u32 %v3656, 7
        %v3658 = vsub.s32 %v1841, %v3657
        %v3659 = vrot.slane %v3375, %v3658
        %v3660 = vlaneseq
        %v3661 = vshrl.u32 %v3660, 7
        %v3662 = vsub.s32 %v1841, %v3661
        %v3663 = vrot.slane %v3378, %v3662
        %v3664 = vlaneseq
        %v3665 = vshrl.u32 %v3664, 7
        %v3666 = vsub.s32 %v1841, %v3665
        %v3667 = vrot.slane %v3381, %v3666
        %v3668 = vlaneseq
        %v3669 = vshrl.u32 %v3668, 7
        %v3670 = vsub.s32 %v1841, %v3669
        %v3671 = vrot.slane %v3384, %v3670
        %v3672 = vlaneseq
        %v3673 = vshrl.u32 %v3672, 7
        %v3674 = vsub.s32 %v1841, %v3673
        %v3675 = vrot.slane %v3387, %v3674
        %v3676 = vlaneseq
        %v3677 = vshrl.u32 %v3676, 7
        %v3678 = vsub.s32 %v1841, %v3677
        %v3679 = vrot.slane %v3390, %v3678
        %v3680 = vlaneseq
        %v3681 = vshrl.u32 %v3680, 7
        %v3682 = vsub.s32 %v1841, %v3681
        %v3683 = vrot.slane %v3393, %v3682
        %v3684 = vlaneseq
        %v3685 = vshrl.u32 %v3684, 7
        %v3686 = vsub.s32 %v1841, %v3685
        %v3687 = vrot.slane %v3396, %v3686
        %v3688 = vlaneseq
        %v3689 = vshrl.u32 %v3688, 7
        %v3690 = vsub.s32 %v1841, %v3689
        %v3691 = vrot.slane %v3399, %v3690
        %v3692 = vlaneseq
        %v3693 = vshrl.u32 %v3692, 7
        %v3694 = vsub.s32 %v1841, %v3693
        %v3695 = vrot.slane %v3402, %v3694
        %v3696 = vlaneseq
        %v3697 = vshrl.u32 %v3696, 7
        %v3698 = vsub.s32 %v1841, %v3697
        %v3699 = vrot.slane %v3405, %v3698
        %v3700 = vlaneseq
        %v3701 = vshrl.u32 %v3700, 7
        %v3702 = vsub.s32 %v1841, %v3701
        %v3703 = vrot.slane %v3408, %v3702
        %v3704 = vlaneseq
        %v3705 = vshrl.u32 %v3704, 7
        %v3706 = vsub.s32 %v1841, %v3705
        %v3707 = vrot.slane %v3411, %v3706
        %v3708 = vlaneseq
        %v3709 = vshrl.u32 %v3708, 7
        %v3710 = vsub.s32 %v1841, %v3709
        %v3711 = vrot.slane %v3414, %v3710
        %v3712 = vlaneseq
        %v3713 = vshrl.u32 %v3712, 7
        %v3714 = vsub.s32 %v1841, %v3713
        %v3715 = vrot.slane %v3417, %v3714
        %v3716 = vlaneseq
        %v3717 = vshrl.u32 %v3716, 7
        %v3718 = vsub.s32 %v1841, %v3717
        %v3719 = vrot.slane %v3420, %v3718
        %v3720 = vlaneseq
        %v3721 = vshrl.u32 %v3720, 7
        %v3722 = vsub.s32 %v1841, %v3721
        %v3723 = vrot.slane %v3423, %v3722
        %v3724 = vlaneseq
        %v3725 = vshrl.u32 %v3724, 7
        %v3726 = vsub.s32 %v1841, %v3725
        %v3727 = vrot.slane %v3426, %v3726
        %v3728 = vlaneseq
        %v3729 = vshrl.u32 %v3728, 7
        %v3730 = vsub.s32 %v1841, %v3729
        %v3731 = vrot.slane %v3429, %v3730
        %v3732 = vlaneseq
        %v3733 = vshrl.u32 %v3732, 7
        %v3734 = vsub.s32 %v1841, %v3733
        %v3735 = vrot.slane %v3432, %v3734
        %v3736 = vlaneseq
        %v3737 = vshrl.u32 %v3736, 7
        %v3738 = vsub.s32 %v1841, %v3737
        %v3739 = vrot.slane %v3435, %v3738
        %v3740 = vlaneseq
        %v3741 = vshrl.u32 %v3740, 7
        %v3742 = vsub.s32 %v1841, %v3741
        %v3743 = vrot.slane %v3438, %v3742
        %v3744 = vlaneseq
        %v3745 = vshrl.u32 %v3744, 7
        %v3746 = vsub.s32 %v1841, %v3745
        %v3747 = vrot.slane %v3441, %v3746
        %v3748 = vlaneseq
        %v3749 = vshrl.u32 %v3748, 7
        %v3750 = vsub.s32 %v1841, %v3749
        %v3751 = vrot.slane %v3444, %v3750
        %v3752 = vlaneseq
        %v3753 = vshrl.u32 %v3752, 7
        %v3754 = vsub.s32 %v1841, %v3753
        %v3755 = vrot.slane %v3447, %v3754
        %v3756 = vlaneseq
        %v3757 = vshrl.u32 %v3756, 7
        %v3758 = vsub.s32 %v1841, %v3757
        %v3759 = vrot.slane %v3450, %v3758
        %v3760 = vlaneseq
        %v3761 = vshrl.u32 %v3760, 7
        %v3762 = vsub.s32 %v1841, %v3761
        %v3763 = vrot.slane %v3453, %v3762
        %v3764 = vlaneseq
        %v3765 = vshrl.u32 %v3764, 7
        %v3766 = vsub.s32 %v1841, %v3765
        %v3767 = vrot.slane %v3456, %v3766
        %v3768 = vlaneseq
        %v3769 = vshrl.u32 %v3768, 7
        %v3770 = vsub.s32 %v1841, %v3769
        %v3771 = vrot.slane %v3459, %v3770
        %v3772 = vlaneseq
        %v3773 = vshrl.u32 %v3772, 7
        %v3774 = vsub.s32 %v1841, %v3773
        %v3775 = vrot.slane %v3462, %v3774
        %v3776 = vlaneseq
        %v3777 = vshrl.u32 %v3776, 7
        %v3778 = vsub.s32 %v1841, %v3777
        %v3779 = vrot.slane %v3465, %v3778
        %v3780 = vlaneseq
        %v3781 = vshrl.u32 %v3780, 7
        %v3782 = vsub.s32 %v1841, %v3781
        %v3783 = vrot.slane %v3468, %v3782
        %v3784 = vlaneseq
        %v3785 = vshrl.u32 %v3784, 7
        %v3786 = vsub.s32 %v1841, %v3785
        %v3787 = vrot.slane %v3471, %v3786
        %v3788 = vlaneseq
        %v3789 = vshrl.u32 %v3788, 7
        %v3790 = vsub.s32 %v1841, %v3789
        %v3791 = vrot.slane %v3474, %v3790
        %v3792 = vlaneseq
        %v3793 = vshrl.u32 %v3792, 7
        %v3794 = vsub.s32 %v1841, %v3793
        %v3795 = vrot.slane %v3477, %v3794
        %v3796 = vlaneseq
        %v3797 = vshrl.u32 %v3796, 7
        %v3798 = vsub.s32 %v1841, %v3797
        %v3799 = vrot.slane %v3480, %v3798
        %v3800 = vlaneseq
        %v3801 = vshrl.u32 %v3800, 7
        %v3802 = vsub.s32 %v1841, %v3801
        %v3803 = vrot.slane %v3483, %v3802
        %v3804 = vsel %vm2098, %v3555, %v3551
        %v3805 = vsel %vm2100, %v3559, %v3804
        %v3806 = vsel %vm2102, %v3563, %v3805
        %v3807 = vsel %vm2104, %v3567, %v3806
        %v3808 = vsel %vm2106, %v3571, %v3807
        %v3809 = vsel %vm2108, %v3575, %v3808
        %v3810 = vsel %vm2110, %v3579, %v3809
        %v3811 = vsel %vm2098, %v3587, %v3583
        %v3812 = vsel %vm2100, %v3591, %v3811
        %v3813 = vsel %vm2102, %v3595, %v3812
        %v3814 = vsel %vm2104, %v3599, %v3813
        %v3815 = vsel %vm2106, %v3603, %v3814
        %v3816 = vsel %vm2108, %v3607, %v3815
        %v3817 = vsel %vm2110, %v3611, %v3816
        %v3818 = vsel %vm2098, %v3619, %v3615
        %v3819 = vsel %vm2100, %v3623, %v3818
        %v3820 = vsel %vm2102, %v3627, %v3819
        %v3821 = vsel %vm2104, %v3631, %v3820
        %v3822 = vsel %vm2106, %v3635, %v3821
        %v3823 = vsel %vm2108, %v3639, %v3822
        %v3824 = vsel %vm2110, %v3643, %v3823
        %v3825 = vsel %vm2098, %v3651, %v3647
        %v3826 = vsel %vm2100, %v3655, %v3825
        %v3827 = vsel %vm2102, %v3659, %v3826
        %v3828 = vsel %vm2104, %v3663, %v3827
        %v3829 = vsel %vm2106, %v3667, %v3828
        %v3830 = vsel %vm2108, %v3671, %v3829
        %v3831 = vsel %vm2110, %v3675, %v3830
        %v3832 = vsel %vm2098, %v3683, %v3679
        %v3833 = vsel %vm2100, %v3687, %v3832
        %v3834 = vsel %vm2102, %v3691, %v3833
        %v3835 = vsel %vm2104, %v3695, %v3834
        %v3836 = vsel %vm2106, %v3699, %v3835
        %v3837 = vsel %vm2108, %v3703, %v3836
        %v3838 = vsel %vm2110, %v3707, %v3837
        %v3839 = vsel %vm2098, %v3715, %v3711
        %v3840 = vsel %vm2100, %v3719, %v3839
        %v3841 = vsel %vm2102, %v3723, %v3840
        %v3842 = vsel %vm2104, %v3727, %v3841
        %v3843 = vsel %vm2106, %v3731, %v3842
        %v3844 = vsel %vm2108, %v3735, %v3843
        %v3845 = vsel %vm2110, %v3739, %v3844
        %v3846 = vsel %vm2098, %v3747, %v3743
        %v3847 = vsel %vm2100, %v3751, %v3846
        %v3848 = vsel %vm2102, %v3755, %v3847
        %v3849 = vsel %vm2104, %v3759, %v3848
        %v3850 = vsel %vm2106, %v3763, %v3849
        %v3851 = vsel %vm2108, %v3767, %v3850
        %v3852 = vsel %vm2110, %v3771, %v3851
        %v3853 = vsel %vm2098, %v3779, %v3775
        %v3854 = vsel %vm2100, %v3783, %v3853
        %v3855 = vsel %vm2102, %v3787, %v3854
        %v3856 = vsel %vm2104, %v3791, %v3855
        %v3857 = vsel %vm2106, %v3795, %v3856
        %v3858 = vsel %vm2108, %v3799, %v3857
        %v3859 = vsel %vm2110, %v3803, %v3858
        %s3868 = scalar_lea.vmem [#allocation2], 64
        %3869 = vst.msk [vmem:[%s3868] sm:$0xff] %vm2169, %v3810
        %3870 = vst.msk [vmem:[%s3868 + $0x8] sm:$0xff] %vm2169, %v3817
        %3871 = vst.msk [vmem:[%s3868 + $0x10] sm:$0xff] %vm2169, %v3824
        %3872 = vst.msk [vmem:[%s3868 + $0x18] sm:$0xff] %vm2169, %v3831
        %3873 = vst.msk [vmem:[%s3868 + $0x20] sm:$0xff] %vm2169, %v3838
        %3874 = vst.msk [vmem:[%s3868 + $0x28] sm:$0xff] %vm2169, %v3845
        %3875 = vst.msk [vmem:[%s3868 + $0x30] sm:$0xff] %vm2169, %v3852
        %3876 = vst.msk [vmem:[%s3868 + $0x38] sm:$0xff] %vm2169, %v3859
        %v3877 = vld [vmem:[#allocation2] sm:$0xff]
        %v3878 = vld [vmem:[#allocation2 + $0x8] sm:$0xff]
        %v3879 = vld [vmem:[#allocation2 + $0x10] sm:$0xff]
        %v3880 = vld [vmem:[#allocation2 + $0x18] sm:$0xff]
        %v3881 = vld [vmem:[#allocation2 + $0x20] sm:$0xff]
        %v3882 = vld [vmem:[#allocation2 + $0x28] sm:$0xff]
        %v3883 = vld [vmem:[#allocation2 + $0x30] sm:$0xff]
        %v3884 = vld [vmem:[#allocation2 + $0x38] sm:$0xff]
        %v3885 = vld [vmem:[#allocation2 + $0x40] sm:$0xff]
        %v3886 = vld [vmem:[#allocation2 + $0x48] sm:$0xff]
        %v3887 = vld [vmem:[#allocation2 + $0x50] sm:$0xff]
        %v3888 = vld [vmem:[#allocation2 + $0x58] sm:$0xff]
        %v3889 = vld [vmem:[#allocation2 + $0x60] sm:$0xff]
        %v3890 = vld [vmem:[#allocation2 + $0x68] sm:$0xff]
        %v3891 = vld [vmem:[#allocation2 + $0x70] sm:$0xff]
        %v3892 = vld [vmem:[#allocation2 + $0x78] sm:$0xff]
        %3893 = vxpose.xlu0.b32.start [1/16] %v3877, 128
        %3894 = vxpose.xlu0.b32.cont [2/16] %v3878, 128
        %3895 = vxpose.xlu0.b32.cont [3/16] %v3879, 128
        %3896 = vxpose.xlu0.b32.cont [4/16] %v3880, 128
        %3897 = vxpose.xlu0.b32.cont [5/16] %v3881, 128
        %3898 = vxpose.xlu0.b32.cont [6/16] %v3882, 128
        %3899 = vxpose.xlu0.b32.cont [7/16] %v3883, 128
        %3900 = vxpose.xlu0.b32.cont [8/16] %v3884, 128
        %3901 = vxpose.xlu0.b32.cont [9/16] %v3885, 128
        %3902 = vxpose.xlu0.b32.cont [10/16] %v3886, 128
        %3903 = vxpose.xlu0.b32.cont [11/16] %v3887, 128
        %3904 = vxpose.xlu0.b32.cont [12/16] %v3888, 128
        %3905 = vxpose.xlu0.b32.cont [13/16] %v3889, 128
        %3906 = vxpose.xlu0.b32.cont [14/16] %v3890, 128
        %3907 = vxpose.xlu0.b32.cont [15/16] %v3891, 128
        %3908 = vxpose.xlu0.b32.end [16/16] %v3892, 128
        %v3909 = vpop.trf.xlu0
        %v3910 = vpop.trf.xlu0
        %v3911 = vpop.trf.xlu0
        %v3912 = vpop.trf.xlu0
        %v3913 = vpop.trf.xlu0
        %v3914 = vpop.trf.xlu0
        %v3915 = vpop.trf.xlu0
        %v3916 = vpop.trf.xlu0
        %v3917 = vpop.trf.xlu0
        %v3918 = vpop.trf.xlu0
        %v3919 = vpop.trf.xlu0
        %v3920 = vpop.trf.xlu0
        %v3921 = vpop.trf.xlu0
        %v3922 = vpop.trf.xlu0
        %v3923 = vpop.trf.xlu0
        %v3924 = vpop.trf.xlu0
        %v3926 = vlaneseq
        %v3927 = vshrl.u32 %v3926, 7
        %v3928 = vsub.s32 0, %v3927
        %v3929 = vrot.slane %v384, %v3928
        %v3931 = vadd.f32 %v3909, %v3929
        %3932 = vmax.xlane.f32.xlu0 %v3931
        %v3933 = vpop.xlane.xlu0 %3932
        %v3934 = vsub.f32 %v3931, %v3933
        %v3935 = vmul.f32 %v3934, 1.442695
        %v3936 = vpow.pop %v3935
        %3937 = vadd.xlane.f32.xlu0 %v3936
        %v3938 = vpop.xlane.xlu0 %3937
        %v3939 = vrcp.pop %v3938
        %v3940 = vmul.f32 %v3936, %v3939
        %3941 = vst [vmem:[%s357] sm:$0xff] %v3940
        %v3942 = vld [vmem:[%s369] sm:$0xff]
        %v3943 = vld [vmem:[%s369 + $0x8] sm:$0xff]
        %v3944 = vld [vmem:[%s369 + $0x10] sm:$0xff]
        %v3945 = vld [vmem:[%s369 + $0x18] sm:$0xff]
        %v3946 = vld [vmem:[%s369 + $0x20] sm:$0xff]
        %v3947 = vld [vmem:[%s369 + $0x28] sm:$0xff]
        %v3948 = vld [vmem:[%s369 + $0x30] sm:$0xff]
        %v3949 = vld [vmem:[%s369 + $0x38] sm:$0xff]
        %v3950 = vld [vmem:[%s369 + $0x40] sm:$0xff]
        %v3951 = vld [vmem:[%s369 + $0x48] sm:$0xff]
        %v3952 = vld [vmem:[%s369 + $0x50] sm:$0xff]
        %v3953 = vld [vmem:[%s369 + $0x58] sm:$0xff]
        %v3954 = vld [vmem:[%s369 + $0x60] sm:$0xff]
        %v3955 = vld [vmem:[%s369 + $0x68] sm:$0xff]
        %v3956 = vld [vmem:[%s369 + $0x70] sm:$0xff]
        %v3957 = vld [vmem:[%s369 + $0x78] sm:$0xff]
        %3958 = vmatprep.subr.mxu0 0.0
        %3959 = vmatpush1.msra.mxu0 %v3942
        %3960 = vmatprep.subr.mxu0 0.0
        %3961 = vmatpush1.msra.mxu0 %v3943
        %3962 = vmatprep.subr.mxu0 0.0
        %3963 = vmatpush1.msra.mxu0 %v3944
        %3964 = vmatprep.subr.mxu0 0.0
        %3965 = vmatpush1.msra.mxu0 %v3945
        %3966 = vmatprep.subr.mxu0 0.0
        %3967 = vmatpush1.msra.mxu0 %v3946
        %3968 = vmatprep.subr.mxu0 0.0
        %3969 = vmatpush1.msra.mxu0 %v3947
        %3970 = vmatprep.subr.mxu0 0.0
        %3971 = vmatpush1.msra.mxu0 %v3948
        %3972 = vmatprep.subr.mxu0 0.0
        %3973 = vmatpush1.msra.mxu0 %v3949
        %3974 = vmatprep.subr.mxu0 0.0
        %3975 = vmatpush1.msra.mxu0 %v3950
        %3976 = vmatprep.subr.mxu0 0.0
        %3977 = vmatpush1.msra.mxu0 %v3951
        %3978 = vmatprep.subr.mxu0 0.0
        %3979 = vmatpush1.msra.mxu0 %v3952
        %3980 = vmatprep.subr.mxu0 0.0
        %3981 = vmatpush1.msra.mxu0 %v3953
        %3982 = vmatprep.subr.mxu0 0.0
        %3983 = vmatpush1.msra.mxu0 %v3954
        %3984 = vmatprep.subr.mxu0 0.0
        %3985 = vmatpush1.msra.mxu0 %v3955
        %3986 = vmatprep.subr.mxu0 0.0
        %3987 = vmatpush1.msra.mxu0 %v3956
        %3988 = vmatprep.subr.mxu0 0.0
        %3989 = vmatpush1.msra.mxu0 %v3957
        %3990 = vmatprep.subr.mxu0 0.0
        %3991 = vmatpush1.msra.mxu0 0.0
        %3992 = vmatprep.subr.mxu0 0.0
        %3993 = vmatpush1.msra.mxu0 0.0
        %3994 = vmatprep.subr.mxu0 0.0
        %3995 = vmatpush1.msra.mxu0 0.0
        %3996 = vmatprep.subr.mxu0 0.0
        %3997 = vmatpush1.msra.mxu0 0.0
        %3998 = vmatprep.subr.mxu0 0.0
        %3999 = vmatpush1.msra.mxu0 0.0
        %4000 = vmatprep.subr.mxu0 0.0
        %4001 = vmatpush1.msra.mxu0 0.0
        %4002 = vmatprep.subr.mxu0 0.0
        %4003 = vmatpush1.msra.mxu0 0.0
        %4004 = vmatprep.subr.mxu0 0.0
        %4005 = vmatpush1.msra.mxu0 0.0
        %4006 = vmatprep.subr.mxu0 0.0
        %4007 = vmatpush1.msra.mxu0 0.0
        %4008 = vmatprep.subr.mxu0 0.0
        %4009 = vmatpush1.msra.mxu0 0.0
        %4010 = vmatprep.subr.mxu0 0.0
        %4011 = vmatpush1.msra.mxu0 0.0
        %4012 = vmatprep.subr.mxu0 0.0
        %4013 = vmatpush1.msra.mxu0 0.0
        %4014 = vmatprep.subr.mxu0 0.0
        %4015 = vmatpush1.msra.mxu0 0.0
        %4016 = vmatprep.subr.mxu0 0.0
        %4017 = vmatpush1.msra.mxu0 0.0
        %4018 = vmatprep.subr.mxu0 0.0
        %4019 = vmatpush1.msra.mxu0 0.0
        %4020 = vmatprep.subr.mxu0 0.0
        %4021 = vmatpush1.msra.mxu0 0.0
        %4022 = vmatprep.mubr.f32.mxu0 0.0
        %4023 = vmatmul.mubr.f32.gmra.mrb[0].mxu0 %v3940
        %v4024 = vpop.f32.mrb[0].mxu0
        %v4025 = vadd.f32 0.0, %v4024
        %v4026 = vpop.f32.mrb[0].mxu0
        %4027 = vdwg.mxu0
        %4028 = vst.msk [vmem:[%s350] sm:$0xff] %vm385, %v4025
        %s4029 = sand.u32 %s212, 1
        %s4030 = scalar_lea.sflag [#allocation4], %s4029
        %s4031 = sand.u32 %s212, 1
        %s4032 = smul.addr %s4031, 8
        %s4033 = scalar_lea.vmem [#allocation3], %s4032
        %s4034 = sand.u32 %s240, 1
        %s4035 = scalar_lea.sflag [#allocation6], %s4034
        %s4036 = sand.u32 %s240, 1
        %s4037 = smul.addr %s4036, 8
        %s4038 = scalar_lea.vmem [#allocation5], %s4037
        // Predicated region
        $region49: #{tpu_custom_call.1} parent=47 // pred_check
          %p4039 = pneg %p222
        $region50: #{tpu_custom_call.1} parent=47 // pred_check_branch
          %4041 = sbr.rel (%p4039) target = $region52
        $region51: #{tpu_custom_call.1} parent=47 // pred_region
          %s4043 = ssub.s32 128, 128
          %4044 = vsyncadd %s4030, %s4043
          %s4045 = sadd.s32 %s31, %s30
          %s4046 = smul.addr %s4045, 128
          %s4047 = scalar_lea.hbm %s7, %s4046
          %s4049 = sshll.u32 %s4033, 4
          %s4050 = int_to_ptr.vmem [resolvable:$true] %s4049
          %4052 = dma.vmem_to_hbm [thread:$0]  %s4050, 128, %s4047, %s4030
        $region52: #{tpu_custom_call.1} parent=47 // pred_fallthru
          _
        // Predicated region
        $region53: #{tpu_custom_call.1} parent=47 // pred_check
          %p4053 = pneg %p250
        $region54: #{tpu_custom_call.1} parent=47 // pred_check_branch
          %4055 = sbr.rel (%p4053) target = $region56
        $region55: #{tpu_custom_call.1} parent=47 // pred_region
          %s4057 = ssub.s32 128, 128
          %4058 = vsyncadd %s4035, %s4057
          %s4059 = sadd.s32 %s31, %s30
          %s4060 = smul.addr %s4059, 128
          %s4061 = scalar_lea.hbm %s8, %s4060
          %s4063 = sshll.u32 %s4038, 4
          %s4064 = int_to_ptr.vmem [resolvable:$true] %s4063
          %4066 = dma.vmem_to_hbm [thread:$0]  %s4064, 128, %s4061, %s4035
        $region56: #{tpu_custom_call.1} parent=47 // pred_fallthru
          _
      $region48: #{tpu_custom_call.1} parent=5 // pred_fallthru
        _
      %p4067 = scmp.le.s32.totalorder 2, %s21
      // Predicated region
      $region57: #{tpu_custom_call.1} parent=5 // pred_check
        %p4068 = pneg %p4067
      $region58: #{tpu_custom_call.1} parent=5 // pred_check_branch
        %4070 = sbr.rel (%p4068) target = $region60
      $region59: #{tpu_custom_call.1} parent=5 // pred_region
        %s4071 = ssub.s32 %s21, 2
        // Predicated region
        $region61: #{tpu_custom_call.1} parent=59 // pred_check
          %p4072 = pneg %p228
        $region62: #{tpu_custom_call.1} parent=59 // pred_check_branch
          %4074 = sbr.rel (%p4072) target = $region64
        $region63: #{tpu_custom_call.1} parent=59 // pred_region
          %s4075 = sand.u32 %s213, 1
          %s4076 = scalar_lea.sflag [#allocation4], %s4075
          %s4077 = sand.u32 %s213, 1
          %s4078 = smul.addr %s4077, 8
          %s4079 = scalar_lea.vmem [#allocation3], %s4078
          %4080 = dma.done %s4076, 128
        $region64: #{tpu_custom_call.1} parent=59 // pred_fallthru
          _
        // Predicated region
        $region65: #{tpu_custom_call.1} parent=59 // pred_check
          %p4081 = pneg %p256
        $region66: #{tpu_custom_call.1} parent=59 // pred_check_branch
          %4083 = sbr.rel (%p4081) target = $region68
        $region67: #{tpu_custom_call.1} parent=59 // pred_region
          %s4084 = sand.u32 %s241, 1
          %s4085 = scalar_lea.sflag [#allocation6], %s4084
          %s4086 = sand.u32 %s241, 1
          %s4087 = smul.addr %s4086, 8
          %s4088 = scalar_lea.vmem [#allocation5], %s4087
          %4089 = dma.done %s4085, 128
        $region68: #{tpu_custom_call.1} parent=59 // pred_fallthru
          _
      $region60: #{tpu_custom_call.1} parent=5 // pred_fallthru
        _
    $region6: #{tpu_custom_call.1} parent=1 // loop_footer
      %s25 = sadd.s32 1, %s21
    $region7: #{tpu_custom_call.1} parent=1 // loop_footer_branch
      %20 = sbr.rel target = $region3
    $region8: #{tpu_custom_call.1} parent=1 // loop_exit
      _
    %4090 = vsyncpa [#allocation4], 1
    %s4091 = scalar_lea.sflag [#allocation4], 1
    %4092 = vsyncpa %s4091, 1
    %4093 = vsyncpa [#allocation6], 1
    %s4094 = scalar_lea.sflag [#allocation6], 1
    %4095 = vsyncpa %s4094, 1

</llo_original>
